<compile_context>
chip_gen: v5e
topology: v5e:2x2
jax: 0.10.0
libtpu: 0.0.40
codegen_flags: <defaults>
</compile_context>

<pallas_src>
import math
import functools

import jax
import jax.numpy as jnp
from jax.experimental import pallas as pl
from jax.experimental.pallas import tpu as pltpu

LN_EPS = 1e-5       # PyTorch nn.LayerNorm default
NEG_INF = -1e30     # additive causal mask (f32 scores)


# --------------------------------------------------------------------------------------
# In-kernel helpers
# --------------------------------------------------------------------------------------
def _ln_rows(x, g, b):
    """Row-wise LayerNorm. x: [R, D] f32; g/b: [1, D] f32."""
    mean = jnp.mean(x, axis=-1, keepdims=True)
    var = jnp.mean(jnp.square(x - mean), axis=-1, keepdims=True)
    return (x - mean) * jax.lax.rsqrt(var + LN_EPS) * g + b


def _attention(h_q, h_kv, wq, bq, wk, bk, wv, bv, wo, bo, heads_scr,
               *, num_heads, head_dim, scale, causal):
    """Multi-head attention sublayer body.

    h_q: [T, D] f32 (already LayerNormed), h_kv: [S, D] f32.
    Weights are bf16 Refs [D, D]; biases f32 Refs [1, D].
    heads_scr: [T, D] f32 VMEM scratch used to merge per-head outputs so the
    output projection is a single full-width matmul.
    Returns the sublayer output [T, D] f32 (residual NOT added here).
    """
    hq_b = h_q.astype(jnp.bfloat16)
    hkv_b = h_kv.astype(jnp.bfloat16)

    # Full-width projections (one [.,D]@[D,D] each), f32 accumulation.
    q_all = jnp.dot(hq_b, wq[...], preferred_element_type=jnp.float32) + bq[...]
    k_all = jnp.dot(hkv_b, wk[...], preferred_element_type=jnp.float32) + bk[...]
    v_all = jnp.dot(hkv_b, wv[...], preferred_element_type=jnp.float32) + bv[...]

    T = h_q.shape[0]
    S = h_kv.shape[0]
    if causal:
        row = jax.lax.broadcasted_iota(jnp.int32, (T, S), 0)
        col = jax.lax.broadcasted_iota(jnp.int32, (T, S), 1)
        bias = jnp.where(col <= row, 0.0, NEG_INF).astype(jnp.float32)
    else:
        bias = None

    for hd in range(num_heads):                 # static unroll over heads
        lo = hd * head_dim
        hi = lo + head_dim
        qh = (q_all[:, lo:hi] * scale).astype(jnp.bfloat16)   # scale folded into q
        kh = k_all[:, lo:hi].astype(jnp.bfloat16)
        vh = v_all[:, lo:hi].astype(jnp.bfloat16)
        s = jnp.einsum('td,sd->ts', qh, kh,
                       preferred_element_type=jnp.float32)    # [T, S] f32
        if bias is not None:
            s = s + bias
        m = jnp.max(s, axis=-1, keepdims=True)
        p = jnp.exp(s - m)
        l = jnp.sum(p, axis=-1, keepdims=True)
        oh = jnp.dot(p.astype(jnp.bfloat16), vh,
                     preferred_element_type=jnp.float32)      # [T, dh] f32
        heads_scr[:, lo:hi] = oh * pl.reciprocal(l, approx=False)

    # Single full-width output projection over the merged heads.
    out = jnp.dot(heads_scr[...].astype(jnp.bfloat16), wo[...],
                  preferred_element_type=jnp.float32) + bo[...]
    return out


# --------------------------------------------------------------------------------------
# Fused decoder-block kernel (one grid step == one batch element)
# --------------------------------------------------------------------------------------
def _decoder_block_kernel(
        x_ref, cond_ref,
        sa_g, sa_b, sa_wq, sa_bq, sa_wk, sa_bk, sa_wv, sa_bv, sa_wo, sa_bo,
        ca_g, ca_b, ca_wq, ca_bq, ca_wk, ca_bk, ca_wv, ca_bv, ca_wo, ca_bo,
        ff_g, ff_b, ff_w1, ff_b1, ff_w2, ff_b2,
        fin_g, fin_b,
        o_ref, heads_scr,
        *, num_heads, head_dim, scale, apply_final_ln):
    x = x_ref[0].astype(jnp.float32)            # [T, D] residual stream
    cond = cond_ref[0].astype(jnp.float32)      # [S, D]

    # ---- sublayer 1: causal self-attention (kv = LN(x), computed in-kernel) ----
    h = _ln_rows(x, sa_g[...], sa_b[...])
    x = x + _attention(h, h, sa_wq, sa_bq, sa_wk, sa_bk, sa_wv, sa_bv,
                       sa_wo, sa_bo, heads_scr,
                       num_heads=num_heads, head_dim=head_dim, scale=scale,
                       causal=True)

    # ---- sublayer 2: cross-attention (kv = raw cond, NOT layer-normed) ----
    h = _ln_rows(x, ca_g[...], ca_b[...])
    x = x + _attention(h, cond, ca_wq, ca_bq, ca_wk, ca_bk, ca_wv, ca_bv,
                       ca_wo, ca_bo, heads_scr,
                       num_heads=num_heads, head_dim=head_dim, scale=scale,
                       causal=False)

    # ---- sublayer 3: LN -> W1 -> GELU -> W2 -> +residual ----
    h = _ln_rows(x, ff_g[...], ff_b[...])
    h = jnp.dot(h.astype(jnp.bfloat16), ff_w1[...],
                preferred_element_type=jnp.float32) + ff_b1[...]
    h = jax.nn.gelu(h, approximate=True)        # TODO(synk): exact erf GELU / ReLU?
    h = jnp.dot(h.astype(jnp.bfloat16), ff_w2[...],
                preferred_element_type=jnp.float32) + ff_b2[...]
    x = x + h

    if apply_final_ln:                           # final Decoder LayerNorm, fused
        x = _ln_rows(x, fin_g[...], fin_b[...])

    o_ref[0] = x.astype(o_ref.dtype)


def decoder_block(x, cond, blk, final_g, final_b, num_heads, *, apply_final_ln):
    """x: [B, T, D] f32, cond: [B, S, D] f32. Returns [B, T, D] f32."""
    B, T, D = x.shape
    S = cond.shape[1]
    H = num_heads
    dh = D // H
    scale = 1.0 / math.sqrt(dh)
    F = blk["ff_w1"].shape[1]

    sa = blk["self_attn"]
    ca = blk["cross_attn"]
    params = [
        blk["ln_sa_g"].reshape(1, D), blk["ln_sa_b"].reshape(1, D),
        sa["wq"], sa["bq"].reshape(1, D), sa["wk"], sa["bk"].reshape(1, D),
        sa["wv"], sa["bv"].reshape(1, D), sa["wo"], sa["bo"].reshape(1, D),
        blk["ln_ca_g"].reshape(1, D), blk["ln_ca_b"].reshape(1, D),
        ca["wq"], ca["bq"].reshape(1, D), ca["wk"], ca["bk"].reshape(1, D),
        ca["wv"], ca["bv"].reshape(1, D), ca["wo"], ca["bo"].reshape(1, D),
        blk["ln_ff_g"].reshape(1, D), blk["ln_ff_b"].reshape(1, D),
        blk["ff_w1"], blk["ff_b1"].reshape(1, F),
        blk["ff_w2"], blk["ff_b2"].reshape(1, D),
        final_g.reshape(1, D), final_b.reshape(1, D),
    ]
    rep = lambda b: (0, 0)   # parameters: same block every grid step (stay resident)
    param_specs = [pl.BlockSpec(p.shape, rep) for p in params]

    kernel = functools.partial(
        _decoder_block_kernel, num_heads=H, head_dim=dh, scale=scale,
        apply_final_ln=apply_final_ln)

    return pl.pallas_call(
        kernel,
        out_shape=jax.ShapeDtypeStruct((B, T, D), x.dtype),
        grid=(B,),
        in_specs=[pl.BlockSpec((1, T, D), lambda b: (b, 0, 0)),     # x
                  pl.BlockSpec((1, S, D), lambda b: (b, 0, 0))]     # cond
                 + param_specs,
        out_specs=pl.BlockSpec((1, T, D), lambda b: (b, 0, 0)),
        scratch_shapes=[pltpu.VMEM((T, D), jnp.float32)],           # head-merge buffer
        compiler_params=pltpu.CompilerParams(dimension_semantics=("parallel",)),
    )(x, cond, *params)


# --------------------------------------------------------------------------------------
# Standalone LayerNorm (only used in the degenerate num_blocks == 0 case)
# --------------------------------------------------------------------------------------
def _layernorm_kernel(x_ref, g_ref, b_ref, o_ref):
    o_ref[0] = _ln_rows(x_ref[0].astype(jnp.float32),
                        g_ref[...], b_ref[...]).astype(o_ref.dtype)


def layernorm(x, gamma, beta):
    B, T, D = x.shape
    rep = lambda b: (0, 0)
    return pl.pallas_call(
        _layernorm_kernel,
        out_shape=jax.ShapeDtypeStruct((B, T, D), x.dtype),
        grid=(B,),
        in_specs=[pl.BlockSpec((1, T, D), lambda b: (b, 0, 0)),
                  pl.BlockSpec((1, D), rep),
                  pl.BlockSpec((1, D), rep)],
        out_specs=pl.BlockSpec((1, T, D), lambda b: (b, 0, 0)),
        compiler_params=pltpu.CompilerParams(dimension_semantics=("parallel",)),
    )(x, gamma.reshape(1, D), beta.reshape(1, D))


# --------------------------------------------------------------------------------------
# Model glue
# --------------------------------------------------------------------------------------
def decoder_forward(x, cond, params, num_heads):
    blocks = params["blocks"]
    if not blocks:
        return layernorm(x, params["ln_g"], params["ln_b"])
    n = len(blocks)
    for i, blk in enumerate(blocks):
        x = decoder_block(x, cond, blk, params["ln_g"], params["ln_b"], num_heads,
                          apply_final_ln=(i == n - 1))
    return x


# --------------------------------------------------------------------------------------
# Deterministic parameter construction (weights stored bf16 to feed the MXU directly)
# --------------------------------------------------------------------------------------
def _init_linear(key, d_in, d_out):
    kw, kb = jax.random.split(key)
    scale = 1.0 / math.sqrt(d_in)
    w = (jax.random.normal(kw, (d_in, d_out), jnp.float32) * scale).astype(jnp.bfloat16)
    b = jax.random.normal(kb, (d_out,), jnp.float32) * 0.01
    return w, b


def _init_mha(key, dim_embed):
    ks = jax.random.split(key, 4)
    wq, bq = _init_linear(ks[0], dim_embed, dim_embed)
    wk, bk = _init_linear(ks[1], dim_embed, dim_embed)
    wv, bv = _init_linear(ks[2], dim_embed, dim_embed)
    wo, bo = _init_linear(ks[3], dim_embed, dim_embed)
    return dict(wq=wq, bq=bq, wk=wk, bk=bk, wv=wv, bv=bv, wo=wo, bo=bo)


def init_decoder_params(key, num_blocks, dim_embed, dim_ff):
    blocks = []
    for _ in range(num_blocks):
        key, k_sa, k_ca, k_f1, k_f2 = jax.random.split(key, 5)
        ff_w1, ff_b1 = _init_linear(k_f1, dim_embed, dim_ff)
        ff_w2, ff_b2 = _init_linear(k_f2, dim_ff, dim_embed)
        blocks.append(dict(
            ln_sa_g=jnp.ones((dim_embed,), jnp.float32),
            ln_sa_b=jnp.zeros((dim_embed,), jnp.float32),
            self_attn=_init_mha(k_sa, dim_embed),
            ln_ca_g=jnp.ones((dim_embed,), jnp.float32),
            ln_ca_b=jnp.zeros((dim_embed,), jnp.float32),
            cross_attn=_init_mha(k_ca, dim_embed),
            ln_ff_g=jnp.ones((dim_embed,), jnp.float32),
            ln_ff_b=jnp.zeros((dim_embed,), jnp.float32),
            ff_w1=ff_w1, ff_b1=ff_b1, ff_w2=ff_w2, ff_b2=ff_b2,
        ))
    return dict(
        blocks=blocks,
        ln_g=jnp.ones((dim_embed,), jnp.float32),
        ln_b=jnp.zeros((dim_embed,), jnp.float32),
    )


# --------------------------------------------------------------------------------------
if __name__ == "__main__":
    num_blocks = 2
    num_heads = 4
    dim_embed = 32
    block_size = 8     # max causal sequence length (T <= block_size)
    dim_ff = 64
    p_dropout = 0.1    # inference: dropout is identity

    B, T, T_cond = 2, 8, 8

    key = jax.random.PRNGKey(0)
    kx, kc, kp = jax.random.split(key, 3)
    x = jax.random.normal(kx, (B, T, dim_embed), jnp.float32)
    cond = jax.random.normal(kc, (B, T_cond, dim_embed), jnp.float32)

    params = init_decoder_params(kp, num_blocks, dim_embed, dim_ff)

    out = decoder_forward(x, cond, params, num_heads)
    out = jax.block_until_ready(out)
    assert out.shape == (B, T, dim_embed)
    assert bool(jnp.all(jnp.isfinite(out)))
    print("KERNEL_OK")
</pallas_src>

<mosaic_0001>
module attributes {stable_mosaic.version = 11 : i64} {
  func.func @_decoder_block_kernel(%arg0: i32, %arg1: memref<1x8x32xf32, #tpu.memory_space<vmem>>, %arg2: memref<1x8x32xf32, #tpu.memory_space<vmem>>, %arg3: memref<1x32xf32, #tpu.memory_space<vmem>>, %arg4: memref<1x32xf32, #tpu.memory_space<vmem>>, %arg5: memref<32x32xbf16, #tpu.memory_space<vmem>>, %arg6: memref<1x32xf32, #tpu.memory_space<vmem>>, %arg7: memref<32x32xbf16, #tpu.memory_space<vmem>>, %arg8: memref<1x32xf32, #tpu.memory_space<vmem>>, %arg9: memref<32x32xbf16, #tpu.memory_space<vmem>>, %arg10: memref<1x32xf32, #tpu.memory_space<vmem>>, %arg11: memref<32x32xbf16, #tpu.memory_space<vmem>>, %arg12: memref<1x32xf32, #tpu.memory_space<vmem>>, %arg13: memref<1x32xf32, #tpu.memory_space<vmem>>, %arg14: memref<1x32xf32, #tpu.memory_space<vmem>>, %arg15: memref<32x32xbf16, #tpu.memory_space<vmem>>, %arg16: memref<1x32xf32, #tpu.memory_space<vmem>>, %arg17: memref<32x32xbf16, #tpu.memory_space<vmem>>, %arg18: memref<1x32xf32, #tpu.memory_space<vmem>>, %arg19: memref<32x32xbf16, #tpu.memory_space<vmem>>, %arg20: memref<1x32xf32, #tpu.memory_space<vmem>>, %arg21: memref<32x32xbf16, #tpu.memory_space<vmem>>, %arg22: memref<1x32xf32, #tpu.memory_space<vmem>>, %arg23: memref<1x32xf32, #tpu.memory_space<vmem>>, %arg24: memref<1x32xf32, #tpu.memory_space<vmem>>, %arg25: memref<32x64xbf16, #tpu.memory_space<vmem>>, %arg26: memref<1x64xf32, #tpu.memory_space<vmem>>, %arg27: memref<64x32xbf16, #tpu.memory_space<vmem>>, %arg28: memref<1x32xf32, #tpu.memory_space<vmem>>, %arg29: memref<1x32xf32, #tpu.memory_space<vmem>>, %arg30: memref<1x32xf32, #tpu.memory_space<vmem>>, %arg31: memref<1x8x32xf32, #tpu.memory_space<vmem>>, %arg32: memref<8x32xf32, #tpu.memory_space<vmem>>) attributes {dimension_semantics = [#tpu.dimension_semantics<parallel>], iteration_bounds = array<i64: 2>, scalar_prefetch = 0 : i64, scratch_operands = 1 : i64, tpu.core_type = #tpu.core_type<tc>, window_params = [{transform_indices = @transform_0, window_bounds = array<i64: 1, 8, 32>}, {transform_indices = @transform_1, window_bounds = array<i64: 1, 8, 32>}, {pipeline_mode = #tpu.pipeline_mode<synchronous>, transform_indices = @transform_2, window_bounds = array<i64: 1, 32>}, {pipeline_mode = #tpu.pipeline_mode<synchronous>, transform_indices = @transform_3, window_bounds = array<i64: 1, 32>}, {pipeline_mode = #tpu.pipeline_mode<synchronous>, transform_indices = @transform_4, window_bounds = array<i64: 32, 32>}, {pipeline_mode = #tpu.pipeline_mode<synchronous>, transform_indices = @transform_5, window_bounds = array<i64: 1, 32>}, {pipeline_mode = #tpu.pipeline_mode<synchronous>, transform_indices = @transform_6, window_bounds = array<i64: 32, 32>}, {pipeline_mode = #tpu.pipeline_mode<synchronous>, transform_indices = @transform_7, window_bounds = array<i64: 1, 32>}, {pipeline_mode = #tpu.pipeline_mode<synchronous>, transform_indices = @transform_8, window_bounds = array<i64: 32, 32>}, {pipeline_mode = #tpu.pipeline_mode<synchronous>, transform_indices = @transform_9, window_bounds = array<i64: 1, 32>}, {pipeline_mode = #tpu.pipeline_mode<synchronous>, transform_indices = @transform_10, window_bounds = array<i64: 32, 32>}, {pipeline_mode = #tpu.pipeline_mode<synchronous>, transform_indices = @transform_11, window_bounds = array<i64: 1, 32>}, {pipeline_mode = #tpu.pipeline_mode<synchronous>, transform_indices = @transform_12, window_bounds = array<i64: 1, 32>}, {pipeline_mode = #tpu.pipeline_mode<synchronous>, transform_indices = @transform_13, window_bounds = array<i64: 1, 32>}, {pipeline_mode = #tpu.pipeline_mode<synchronous>, transform_indices = @transform_14, window_bounds = array<i64: 32, 32>}, {pipeline_mode = #tpu.pipeline_mode<synchronous>, transform_indices = @transform_15, window_bounds = array<i64: 1, 32>}, {pipeline_mode = #tpu.pipeline_mode<synchronous>, transform_indices = @transform_16, window_bounds = array<i64: 32, 32>}, {pipeline_mode = #tpu.pipeline_mode<synchronous>, transform_indices = @transform_17, window_bounds = array<i64: 1, 32>}, {pipeline_mode = #tpu.pipeline_mode<synchronous>, transform_indices = @transform_18, window_bounds = array<i64: 32, 32>}, {pipeline_mode = #tpu.pipeline_mode<synchronous>, transform_indices = @transform_19, window_bounds = array<i64: 1, 32>}, {pipeline_mode = #tpu.pipeline_mode<synchronous>, transform_indices = @transform_20, window_bounds = array<i64: 32, 32>}, {pipeline_mode = #tpu.pipeline_mode<synchronous>, transform_indices = @transform_21, window_bounds = array<i64: 1, 32>}, {pipeline_mode = #tpu.pipeline_mode<synchronous>, transform_indices = @transform_22, window_bounds = array<i64: 1, 32>}, {pipeline_mode = #tpu.pipeline_mode<synchronous>, transform_indices = @transform_23, window_bounds = array<i64: 1, 32>}, {pipeline_mode = #tpu.pipeline_mode<synchronous>, transform_indices = @transform_24, window_bounds = array<i64: 32, 64>}, {pipeline_mode = #tpu.pipeline_mode<synchronous>, transform_indices = @transform_25, window_bounds = array<i64: 1, 64>}, {pipeline_mode = #tpu.pipeline_mode<synchronous>, transform_indices = @transform_26, window_bounds = array<i64: 64, 32>}, {pipeline_mode = #tpu.pipeline_mode<synchronous>, transform_indices = @transform_27, window_bounds = array<i64: 1, 32>}, {pipeline_mode = #tpu.pipeline_mode<synchronous>, transform_indices = @transform_28, window_bounds = array<i64: 1, 32>}, {pipeline_mode = #tpu.pipeline_mode<synchronous>, transform_indices = @transform_29, window_bounds = array<i64: 1, 32>}, {transform_indices = @transform_30, window_bounds = array<i64: 1, 8, 32>}]} {
    %c0 = arith.constant 0 : index
    %c0_0 = arith.constant 0 : index
    %c0_1 = arith.constant 0 : index
    %0 = vector.load %arg1[%c0, %c0_0, %c0_1] : memref<1x8x32xf32, #tpu.memory_space<vmem>>, vector<1x8x32xf32>
    %1 = vector.shape_cast %0 : vector<1x8x32xf32> to vector<8x32xf32>
    %c0_2 = arith.constant 0 : index
    %c0_3 = arith.constant 0 : index
    %c0_4 = arith.constant 0 : index
    %2 = vector.load %arg2[%c0_2, %c0_3, %c0_4] : memref<1x8x32xf32, #tpu.memory_space<vmem>>, vector<1x8x32xf32>
    %3 = vector.shape_cast %2 : vector<1x8x32xf32> to vector<8x32xf32>
    %c0_5 = arith.constant 0 : index
    %c0_6 = arith.constant 0 : index
    %4 = vector.load %arg3[%c0_5, %c0_6] : memref<1x32xf32, #tpu.memory_space<vmem>>, vector<1x32xf32>
    %c0_7 = arith.constant 0 : index
    %c0_8 = arith.constant 0 : index
    %5 = vector.load %arg4[%c0_7, %c0_8] : memref<1x32xf32, #tpu.memory_space<vmem>>, vector<1x32xf32>
    %cst = arith.constant dense<0.000000e+00> : vector<8xf32>
    %6 = vector.multi_reduction <add>, %1, %cst [1] : vector<8x32xf32> to vector<8xf32>
    %7 = vector.shape_cast %6 : vector<8xf32> to vector<8x1xf32>
    %cst_9 = arith.constant 3.200000e+01 : f32
    %8 = vector.broadcast %cst_9 : f32 to vector<8x1xf32>
    %9 = arith.divf %7, %8 : vector<8x1xf32>
    %10 = vector.broadcast %9 : vector<8x1xf32> to vector<8x32xf32>
    %11 = arith.subf %1, %10 : vector<8x32xf32>
    %12 = arith.mulf %11, %11 : vector<8x32xf32>
    %cst_10 = arith.constant dense<0.000000e+00> : vector<8xf32>
    %13 = vector.multi_reduction <add>, %12, %cst_10 [1] : vector<8x32xf32> to vector<8xf32>
    %14 = vector.shape_cast %13 : vector<8xf32> to vector<8x1xf32>
    %cst_11 = arith.constant 3.200000e+01 : f32
    %15 = vector.broadcast %cst_11 : f32 to vector<8x1xf32>
    %16 = arith.divf %14, %15 : vector<8x1xf32>
    %17 = vector.broadcast %9 : vector<8x1xf32> to vector<8x32xf32>
    %18 = arith.subf %1, %17 : vector<8x32xf32>
    %cst_12 = arith.constant 9.99999974E-6 : f32
    %19 = vector.broadcast %cst_12 : f32 to vector<8x1xf32>
    %20 = arith.addf %16, %19 : vector<8x1xf32>
    %21 = math.rsqrt %20 : vector<8x1xf32>
    %22 = vector.broadcast %21 : vector<8x1xf32> to vector<8x32xf32>
    %23 = arith.mulf %18, %22 : vector<8x32xf32>
    %24 = vector.broadcast %4 : vector<1x32xf32> to vector<8x32xf32>
    %25 = arith.mulf %23, %24 : vector<8x32xf32>
    %26 = vector.broadcast %5 : vector<1x32xf32> to vector<8x32xf32>
    %27 = arith.addf %25, %26 : vector<8x32xf32>
    %28 = arith.truncf %27 : vector<8x32xf32> to vector<8x32xbf16>
    %29 = arith.truncf %27 : vector<8x32xf32> to vector<8x32xbf16>
    %c0_13 = arith.constant 0 : index
    %c0_14 = arith.constant 0 : index
    %30 = vector.load %arg5[%c0_13, %c0_14] : memref<32x32xbf16, #tpu.memory_space<vmem>>, vector<32x32xbf16>
    %cst_15 = arith.constant dense<0.000000e+00> : vector<8x32xf32>
    %31 = tpu.matmul %28, %30, %cst_15 {dimension_numbers = #tpu.dot_dimension_numbers<[1], [0], [0], [1], [0, 0, 1, 1], [], []>} : vector<8x32xbf16>, vector<32x32xbf16>, vector<8x32xf32> -> vector<8x32xf32>
    %c0_16 = arith.constant 0 : index
    %c0_17 = arith.constant 0 : index
    %32 = vector.load %arg6[%c0_16, %c0_17] : memref<1x32xf32, #tpu.memory_space<vmem>>, vector<1x32xf32>
    %33 = vector.broadcast %32 : vector<1x32xf32> to vector<8x32xf32>
    %34 = arith.addf %31, %33 : vector<8x32xf32>
    %c0_18 = arith.constant 0 : index
    %c0_19 = arith.constant 0 : index
    %35 = vector.load %arg7[%c0_18, %c0_19] : memref<32x32xbf16, #tpu.memory_space<vmem>>, vector<32x32xbf16>
    %cst_20 = arith.constant dense<0.000000e+00> : vector<8x32xf32>
    %36 = tpu.matmul %29, %35, %cst_20 {dimension_numbers = #tpu.dot_dimension_numbers<[1], [0], [0], [1], [0, 0, 1, 1], [], []>} : vector<8x32xbf16>, vector<32x32xbf16>, vector<8x32xf32> -> vector<8x32xf32>
    %c0_21 = arith.constant 0 : index
    %c0_22 = arith.constant 0 : index
    %37 = vector.load %arg8[%c0_21, %c0_22] : memref<1x32xf32, #tpu.memory_space<vmem>>, vector<1x32xf32>
    %38 = vector.broadcast %37 : vector<1x32xf32> to vector<8x32xf32>
    %39 = arith.addf %36, %38 : vector<8x32xf32>
    %c0_23 = arith.constant 0 : index
    %c0_24 = arith.constant 0 : index
    %40 = vector.load %arg9[%c0_23, %c0_24] : memref<32x32xbf16, #tpu.memory_space<vmem>>, vector<32x32xbf16>
    %cst_25 = arith.constant dense<0.000000e+00> : vector<8x32xf32>
    %41 = tpu.matmul %29, %40, %cst_25 {dimension_numbers = #tpu.dot_dimension_numbers<[1], [0], [0], [1], [0, 0, 1, 1], [], []>} : vector<8x32xbf16>, vector<32x32xbf16>, vector<8x32xf32> -> vector<8x32xf32>
    %c0_26 = arith.constant 0 : index
    %c0_27 = arith.constant 0 : index
    %42 = vector.load %arg10[%c0_26, %c0_27] : memref<1x32xf32, #tpu.memory_space<vmem>>, vector<1x32xf32>
    %43 = vector.broadcast %42 : vector<1x32xf32> to vector<8x32xf32>
    %44 = arith.addf %41, %43 : vector<8x32xf32>
    %45 = tpu.iota {dimensions = array<i32: 0>} : vector<8x8xi32>
    %46 = tpu.iota {dimensions = array<i32: 1>} : vector<8x8xi32>
    %47 = arith.cmpi sle, %46, %45 : vector<8x8xi32>
    %cst_28 = arith.constant 0.000000e+00 : f32
    %cst_29 = arith.constant -1.000000e+30 : f32
    %48 = vector.broadcast %cst_28 : f32 to vector<8x8xf32>
    %49 = vector.broadcast %cst_29 : f32 to vector<8x8xf32>
    %50 = arith.select %47, %48, %49 : vector<8x8xi1>, vector<8x8xf32>
    %51 = vector.extract_strided_slice %34 {offsets = [0, 0], sizes = [8, 8], strides = [1, 1]} : vector<8x32xf32> to vector<8x8xf32>
    %cst_30 = arith.constant 0.353553385 : f32
    %52 = vector.broadcast %cst_30 : f32 to vector<8x8xf32>
    %53 = arith.mulf %51, %52 : vector<8x8xf32>
    %54 = arith.truncf %53 : vector<8x8xf32> to vector<8x8xbf16>
    %55 = vector.extract_strided_slice %39 {offsets = [0, 0], sizes = [8, 8], strides = [1, 1]} : vector<8x32xf32> to vector<8x8xf32>
    %56 = arith.truncf %55 : vector<8x8xf32> to vector<8x8xbf16>
    %57 = vector.extract_strided_slice %44 {offsets = [0, 0], sizes = [8, 8], strides = [1, 1]} : vector<8x32xf32> to vector<8x8xf32>
    %58 = arith.truncf %57 : vector<8x8xf32> to vector<8x8xbf16>
    "tpu.trace_start"() <{level = 10 : i32, message = "td,sd->ts"}> : () -> ()
    %cst_31 = arith.constant dense<0.000000e+00> : vector<8x8xf32>
    %59 = tpu.matmul %54, %56, %cst_31 {dimension_numbers = #tpu.dot_dimension_numbers<[1], [1], [0], [0], [0, 0, 1, 0], [], []>} : vector<8x8xbf16>, vector<8x8xbf16>, vector<8x8xf32> -> vector<8x8xf32>
    "tpu.trace_stop"() : () -> ()
    %60 = arith.addf %59, %50 : vector<8x8xf32>
    %cst_32 = arith.constant dense<0xFF800000> : vector<8xf32>
    %61 = vector.multi_reduction <maximumf>, %60, %cst_32 [1] : vector<8x8xf32> to vector<8xf32>
    %62 = vector.shape_cast %61 : vector<8xf32> to vector<8x1xf32>
    %63 = vector.broadcast %62 : vector<8x1xf32> to vector<8x8xf32>
    %64 = arith.subf %60, %63 : vector<8x8xf32>
    %65 = math.exp %64 : vector<8x8xf32>
    %cst_33 = arith.constant dense<0.000000e+00> : vector<8xf32>
    %66 = vector.multi_reduction <add>, %65, %cst_33 [1] : vector<8x8xf32> to vector<8xf32>
    %67 = vector.shape_cast %66 : vector<8xf32> to vector<8x1xf32>
    %68 = arith.truncf %65 : vector<8x8xf32> to vector<8x8xbf16>
    %cst_34 = arith.constant dense<0.000000e+00> : vector<8x8xf32>
    %69 = tpu.matmul %68, %58, %cst_34 {dimension_numbers = #tpu.dot_dimension_numbers<[1], [0], [0], [1], [0, 0, 1, 1], [], []>} : vector<8x8xbf16>, vector<8x8xbf16>, vector<8x8xf32> -> vector<8x8xf32>
    %70 = tpu.reciprocal %67 : vector<8x1xf32> -> vector<8x1xf32>
    %71 = vector.broadcast %70 : vector<8x1xf32> to vector<8x8xf32>
    %72 = arith.mulf %69, %71 : vector<8x8xf32>
    %c0_35 = arith.constant 0 : index
    %c0_36 = arith.constant 0 : index
    %73 = vector.load %arg32[%c0_35, %c0_36] : memref<8x32xf32, #tpu.memory_space<vmem>>, vector<8x8xf32>
    tpu.vector_store %arg32[%c0_35, %c0_36], %72 {strides = array<i32>} : memref<8x32xf32, #tpu.memory_space<vmem>>, vector<8x8xf32>,
    %74 = vector.extract_strided_slice %34 {offsets = [0, 8], sizes = [8, 8], strides = [1, 1]} : vector<8x32xf32> to vector<8x8xf32>
    %cst_37 = arith.constant 0.353553385 : f32
    %75 = vector.broadcast %cst_37 : f32 to vector<8x8xf32>
    %76 = arith.mulf %74, %75 : vector<8x8xf32>
    %77 = arith.truncf %76 : vector<8x8xf32> to vector<8x8xbf16>
    %78 = vector.extract_strided_slice %39 {offsets = [0, 8], sizes = [8, 8], strides = [1, 1]} : vector<8x32xf32> to vector<8x8xf32>
    %79 = arith.truncf %78 : vector<8x8xf32> to vector<8x8xbf16>
    %80 = vector.extract_strided_slice %44 {offsets = [0, 8], sizes = [8, 8], strides = [1, 1]} : vector<8x32xf32> to vector<8x8xf32>
    %81 = arith.truncf %80 : vector<8x8xf32> to vector<8x8xbf16>
    "tpu.trace_start"() <{level = 10 : i32, message = "td,sd->ts"}> : () -> ()
    %cst_38 = arith.constant dense<0.000000e+00> : vector<8x8xf32>
    %82 = tpu.matmul %77, %79, %cst_38 {dimension_numbers = #tpu.dot_dimension_numbers<[1], [1], [0], [0], [0, 0, 1, 0], [], []>} : vector<8x8xbf16>, vector<8x8xbf16>, vector<8x8xf32> -> vector<8x8xf32>
    "tpu.trace_stop"() : () -> ()
    %83 = arith.addf %82, %50 : vector<8x8xf32>
    %cst_39 = arith.constant dense<0xFF800000> : vector<8xf32>
    %84 = vector.multi_reduction <maximumf>, %83, %cst_39 [1] : vector<8x8xf32> to vector<8xf32>
    %85 = vector.shape_cast %84 : vector<8xf32> to vector<8x1xf32>
    %86 = vector.broadcast %85 : vector<8x1xf32> to vector<8x8xf32>
    %87 = arith.subf %83, %86 : vector<8x8xf32>
    %88 = math.exp %87 : vector<8x8xf32>
    %cst_40 = arith.constant dense<0.000000e+00> : vector<8xf32>
    %89 = vector.multi_reduction <add>, %88, %cst_40 [1] : vector<8x8xf32> to vector<8xf32>
    %90 = vector.shape_cast %89 : vector<8xf32> to vector<8x1xf32>
    %91 = arith.truncf %88 : vector<8x8xf32> to vector<8x8xbf16>
    %cst_41 = arith.constant dense<0.000000e+00> : vector<8x8xf32>
    %92 = tpu.matmul %91, %81, %cst_41 {dimension_numbers = #tpu.dot_dimension_numbers<[1], [0], [0], [1], [0, 0, 1, 1], [], []>} : vector<8x8xbf16>, vector<8x8xbf16>, vector<8x8xf32> -> vector<8x8xf32>
    %93 = tpu.reciprocal %90 : vector<8x1xf32> -> vector<8x1xf32>
    %94 = vector.broadcast %93 : vector<8x1xf32> to vector<8x8xf32>
    %95 = arith.mulf %92, %94 : vector<8x8xf32>
    %c0_42 = arith.constant 0 : index
    %c8 = arith.constant 8 : index
    %96 = vector.load %arg32[%c0_42, %c8] : memref<8x32xf32, #tpu.memory_space<vmem>>, vector<8x8xf32>
    tpu.vector_store %arg32[%c0_42, %c8], %95 {strides = array<i32>} : memref<8x32xf32, #tpu.memory_space<vmem>>, vector<8x8xf32>,
    %97 = vector.extract_strided_slice %34 {offsets = [0, 16], sizes = [8, 8], strides = [1, 1]} : vector<8x32xf32> to vector<8x8xf32>
    %cst_43 = arith.constant 0.353553385 : f32
    %98 = vector.broadcast %cst_43 : f32 to vector<8x8xf32>
    %99 = arith.mulf %97, %98 : vector<8x8xf32>
    %100 = arith.truncf %99 : vector<8x8xf32> to vector<8x8xbf16>
    %101 = vector.extract_strided_slice %39 {offsets = [0, 16], sizes = [8, 8], strides = [1, 1]} : vector<8x32xf32> to vector<8x8xf32>
    %102 = arith.truncf %101 : vector<8x8xf32> to vector<8x8xbf16>
    %103 = vector.extract_strided_slice %44 {offsets = [0, 16], sizes = [8, 8], strides = [1, 1]} : vector<8x32xf32> to vector<8x8xf32>
    %104 = arith.truncf %103 : vector<8x8xf32> to vector<8x8xbf16>
    "tpu.trace_start"() <{level = 10 : i32, message = "td,sd->ts"}> : () -> ()
    %cst_44 = arith.constant dense<0.000000e+00> : vector<8x8xf32>
    %105 = tpu.matmul %100, %102, %cst_44 {dimension_numbers = #tpu.dot_dimension_numbers<[1], [1], [0], [0], [0, 0, 1, 0], [], []>} : vector<8x8xbf16>, vector<8x8xbf16>, vector<8x8xf32> -> vector<8x8xf32>
    "tpu.trace_stop"() : () -> ()
    %106 = arith.addf %105, %50 : vector<8x8xf32>
    %cst_45 = arith.constant dense<0xFF800000> : vector<8xf32>
    %107 = vector.multi_reduction <maximumf>, %106, %cst_45 [1] : vector<8x8xf32> to vector<8xf32>
    %108 = vector.shape_cast %107 : vector<8xf32> to vector<8x1xf32>
    %109 = vector.broadcast %108 : vector<8x1xf32> to vector<8x8xf32>
    %110 = arith.subf %106, %109 : vector<8x8xf32>
    %111 = math.exp %110 : vector<8x8xf32>
    %cst_46 = arith.constant dense<0.000000e+00> : vector<8xf32>
    %112 = vector.multi_reduction <add>, %111, %cst_46 [1] : vector<8x8xf32> to vector<8xf32>
    %113 = vector.shape_cast %112 : vector<8xf32> to vector<8x1xf32>
    %114 = arith.truncf %111 : vector<8x8xf32> to vector<8x8xbf16>
    %cst_47 = arith.constant dense<0.000000e+00> : vector<8x8xf32>
    %115 = tpu.matmul %114, %104, %cst_47 {dimension_numbers = #tpu.dot_dimension_numbers<[1], [0], [0], [1], [0, 0, 1, 1], [], []>} : vector<8x8xbf16>, vector<8x8xbf16>, vector<8x8xf32> -> vector<8x8xf32>
    %116 = tpu.reciprocal %113 : vector<8x1xf32> -> vector<8x1xf32>
    %117 = vector.broadcast %116 : vector<8x1xf32> to vector<8x8xf32>
    %118 = arith.mulf %115, %117 : vector<8x8xf32>
    %c0_48 = arith.constant 0 : index
    %c16 = arith.constant 16 : index
    %119 = vector.load %arg32[%c0_48, %c16] : memref<8x32xf32, #tpu.memory_space<vmem>>, vector<8x8xf32>
    tpu.vector_store %arg32[%c0_48, %c16], %118 {strides = array<i32>} : memref<8x32xf32, #tpu.memory_space<vmem>>, vector<8x8xf32>,
    %120 = vector.extract_strided_slice %34 {offsets = [0, 24], sizes = [8, 8], strides = [1, 1]} : vector<8x32xf32> to vector<8x8xf32>
    %cst_49 = arith.constant 0.353553385 : f32
    %121 = vector.broadcast %cst_49 : f32 to vector<8x8xf32>
    %122 = arith.mulf %120, %121 : vector<8x8xf32>
    %123 = arith.truncf %122 : vector<8x8xf32> to vector<8x8xbf16>
    %124 = vector.extract_strided_slice %39 {offsets = [0, 24], sizes = [8, 8], strides = [1, 1]} : vector<8x32xf32> to vector<8x8xf32>
    %125 = arith.truncf %124 : vector<8x8xf32> to vector<8x8xbf16>
    %126 = vector.extract_strided_slice %44 {offsets = [0, 24], sizes = [8, 8], strides = [1, 1]} : vector<8x32xf32> to vector<8x8xf32>
    %127 = arith.truncf %126 : vector<8x8xf32> to vector<8x8xbf16>
    "tpu.trace_start"() <{level = 10 : i32, message = "td,sd->ts"}> : () -> ()
    %cst_50 = arith.constant dense<0.000000e+00> : vector<8x8xf32>
    %128 = tpu.matmul %123, %125, %cst_50 {dimension_numbers = #tpu.dot_dimension_numbers<[1], [1], [0], [0], [0, 0, 1, 0], [], []>} : vector<8x8xbf16>, vector<8x8xbf16>, vector<8x8xf32> -> vector<8x8xf32>
    "tpu.trace_stop"() : () -> ()
    %129 = arith.addf %128, %50 : vector<8x8xf32>
    %cst_51 = arith.constant dense<0xFF800000> : vector<8xf32>
    %130 = vector.multi_reduction <maximumf>, %129, %cst_51 [1] : vector<8x8xf32> to vector<8xf32>
    %131 = vector.shape_cast %130 : vector<8xf32> to vector<8x1xf32>
    %132 = vector.broadcast %131 : vector<8x1xf32> to vector<8x8xf32>
    %133 = arith.subf %129, %132 : vector<8x8xf32>
    %134 = math.exp %133 : vector<8x8xf32>
    %cst_52 = arith.constant dense<0.000000e+00> : vector<8xf32>
    %135 = vector.multi_reduction <add>, %134, %cst_52 [1] : vector<8x8xf32> to vector<8xf32>
    %136 = vector.shape_cast %135 : vector<8xf32> to vector<8x1xf32>
    %137 = arith.truncf %134 : vector<8x8xf32> to vector<8x8xbf16>
    %cst_53 = arith.constant dense<0.000000e+00> : vector<8x8xf32>
    %138 = tpu.matmul %137, %127, %cst_53 {dimension_numbers = #tpu.dot_dimension_numbers<[1], [0], [0], [1], [0, 0, 1, 1], [], []>} : vector<8x8xbf16>, vector<8x8xbf16>, vector<8x8xf32> -> vector<8x8xf32>
    %139 = tpu.reciprocal %136 : vector<8x1xf32> -> vector<8x1xf32>
    %140 = vector.broadcast %139 : vector<8x1xf32> to vector<8x8xf32>
    %141 = arith.mulf %138, %140 : vector<8x8xf32>
    %c0_54 = arith.constant 0 : index
    %c24 = arith.constant 24 : index
    %142 = vector.load %arg32[%c0_54, %c24] : memref<8x32xf32, #tpu.memory_space<vmem>>, vector<8x8xf32>
    tpu.vector_store %arg32[%c0_54, %c24], %141 {strides = array<i32>} : memref<8x32xf32, #tpu.memory_space<vmem>>, vector<8x8xf32>,
    %c0_55 = arith.constant 0 : index
    %c0_56 = arith.constant 0 : index
    %143 = vector.load %arg32[%c0_55, %c0_56] : memref<8x32xf32, #tpu.memory_space<vmem>>, vector<8x32xf32>
    %144 = arith.truncf %143 : vector<8x32xf32> to vector<8x32xbf16>
    %c0_57 = arith.constant 0 : index
    %c0_58 = arith.constant 0 : index
    %145 = vector.load %arg11[%c0_57, %c0_58] : memref<32x32xbf16, #tpu.memory_space<vmem>>, vector<32x32xbf16>
    %cst_59 = arith.constant dense<0.000000e+00> : vector<8x32xf32>
    %146 = tpu.matmul %144, %145, %cst_59 {dimension_numbers = #tpu.dot_dimension_numbers<[1], [0], [0], [1], [0, 0, 1, 1], [], []>} : vector<8x32xbf16>, vector<32x32xbf16>, vector<8x32xf32> -> vector<8x32xf32>
    %c0_60 = arith.constant 0 : index
    %c0_61 = arith.constant 0 : index
    %147 = vector.load %arg12[%c0_60, %c0_61] : memref<1x32xf32, #tpu.memory_space<vmem>>, vector<1x32xf32>
    %148 = vector.broadcast %147 : vector<1x32xf32> to vector<8x32xf32>
    %149 = arith.addf %146, %148 : vector<8x32xf32>
    %150 = arith.addf %1, %149 : vector<8x32xf32>
    %c0_62 = arith.constant 0 : index
    %c0_63 = arith.constant 0 : index
    %151 = vector.load %arg13[%c0_62, %c0_63] : memref<1x32xf32, #tpu.memory_space<vmem>>, vector<1x32xf32>
    %c0_64 = arith.constant 0 : index
    %c0_65 = arith.constant 0 : index
    %152 = vector.load %arg14[%c0_64, %c0_65] : memref<1x32xf32, #tpu.memory_space<vmem>>, vector<1x32xf32>
    %cst_66 = arith.constant dense<0.000000e+00> : vector<8xf32>
    %153 = vector.multi_reduction <add>, %150, %cst_66 [1] : vector<8x32xf32> to vector<8xf32>
    %154 = vector.shape_cast %153 : vector<8xf32> to vector<8x1xf32>
    %cst_67 = arith.constant 3.200000e+01 : f32
    %155 = vector.broadcast %cst_67 : f32 to vector<8x1xf32>
    %156 = arith.divf %154, %155 : vector<8x1xf32>
    %157 = vector.broadcast %156 : vector<8x1xf32> to vector<8x32xf32>
    %158 = arith.subf %150, %157 : vector<8x32xf32>
    %159 = arith.mulf %158, %158 : vector<8x32xf32>
    %cst_68 = arith.constant dense<0.000000e+00> : vector<8xf32>
    %160 = vector.multi_reduction <add>, %159, %cst_68 [1] : vector<8x32xf32> to vector<8xf32>
    %161 = vector.shape_cast %160 : vector<8xf32> to vector<8x1xf32>
    %cst_69 = arith.constant 3.200000e+01 : f32
    %162 = vector.broadcast %cst_69 : f32 to vector<8x1xf32>
    %163 = arith.divf %161, %162 : vector<8x1xf32>
    %164 = vector.broadcast %156 : vector<8x1xf32> to vector<8x32xf32>
    %165 = arith.subf %150, %164 : vector<8x32xf32>
    %cst_70 = arith.constant 9.99999974E-6 : f32
    %166 = vector.broadcast %cst_70 : f32 to vector<8x1xf32>
    %167 = arith.addf %163, %166 : vector<8x1xf32>
    %168 = math.rsqrt %167 : vector<8x1xf32>
    %169 = vector.broadcast %168 : vector<8x1xf32> to vector<8x32xf32>
    %170 = arith.mulf %165, %169 : vector<8x32xf32>
    %171 = vector.broadcast %151 : vector<1x32xf32> to vector<8x32xf32>
    %172 = arith.mulf %170, %171 : vector<8x32xf32>
    %173 = vector.broadcast %152 : vector<1x32xf32> to vector<8x32xf32>
    %174 = arith.addf %172, %173 : vector<8x32xf32>
    %175 = arith.truncf %174 : vector<8x32xf32> to vector<8x32xbf16>
    %176 = arith.truncf %3 : vector<8x32xf32> to vector<8x32xbf16>
    %c0_71 = arith.constant 0 : index
    %c0_72 = arith.constant 0 : index
    %177 = vector.load %arg15[%c0_71, %c0_72] : memref<32x32xbf16, #tpu.memory_space<vmem>>, vector<32x32xbf16>
    %cst_73 = arith.constant dense<0.000000e+00> : vector<8x32xf32>
    %178 = tpu.matmul %175, %177, %cst_73 {dimension_numbers = #tpu.dot_dimension_numbers<[1], [0], [0], [1], [0, 0, 1, 1], [], []>} : vector<8x32xbf16>, vector<32x32xbf16>, vector<8x32xf32> -> vector<8x32xf32>
    %c0_74 = arith.constant 0 : index
    %c0_75 = arith.constant 0 : index
    %179 = vector.load %arg16[%c0_74, %c0_75] : memref<1x32xf32, #tpu.memory_space<vmem>>, vector<1x32xf32>
    %180 = vector.broadcast %179 : vector<1x32xf32> to vector<8x32xf32>
    %181 = arith.addf %178, %180 : vector<8x32xf32>
    %c0_76 = arith.constant 0 : index
    %c0_77 = arith.constant 0 : index
    %182 = vector.load %arg17[%c0_76, %c0_77] : memref<32x32xbf16, #tpu.memory_space<vmem>>, vector<32x32xbf16>
    %cst_78 = arith.constant dense<0.000000e+00> : vector<8x32xf32>
    %183 = tpu.matmul %176, %182, %cst_78 {dimension_numbers = #tpu.dot_dimension_numbers<[1], [0], [0], [1], [0, 0, 1, 1], [], []>} : vector<8x32xbf16>, vector<32x32xbf16>, vector<8x32xf32> -> vector<8x32xf32>
    %c0_79 = arith.constant 0 : index
    %c0_80 = arith.constant 0 : index
    %184 = vector.load %arg18[%c0_79, %c0_80] : memref<1x32xf32, #tpu.memory_space<vmem>>, vector<1x32xf32>
    %185 = vector.broadcast %184 : vector<1x32xf32> to vector<8x32xf32>
    %186 = arith.addf %183, %185 : vector<8x32xf32>
    %c0_81 = arith.constant 0 : index
    %c0_82 = arith.constant 0 : index
    %187 = vector.load %arg19[%c0_81, %c0_82] : memref<32x32xbf16, #tpu.memory_space<vmem>>, vector<32x32xbf16>
    %cst_83 = arith.constant dense<0.000000e+00> : vector<8x32xf32>
    %188 = tpu.matmul %176, %187, %cst_83 {dimension_numbers = #tpu.dot_dimension_numbers<[1], [0], [0], [1], [0, 0, 1, 1], [], []>} : vector<8x32xbf16>, vector<32x32xbf16>, vector<8x32xf32> -> vector<8x32xf32>
    %c0_84 = arith.constant 0 : index
    %c0_85 = arith.constant 0 : index
    %189 = vector.load %arg20[%c0_84, %c0_85] : memref<1x32xf32, #tpu.memory_space<vmem>>, vector<1x32xf32>
    %190 = vector.broadcast %189 : vector<1x32xf32> to vector<8x32xf32>
    %191 = arith.addf %188, %190 : vector<8x32xf32>
    %192 = vector.extract_strided_slice %181 {offsets = [0, 0], sizes = [8, 8], strides = [1, 1]} : vector<8x32xf32> to vector<8x8xf32>
    %cst_86 = arith.constant 0.353553385 : f32
    %193 = vector.broadcast %cst_86 : f32 to vector<8x8xf32>
    %194 = arith.mulf %192, %193 : vector<8x8xf32>
    %195 = arith.truncf %194 : vector<8x8xf32> to vector<8x8xbf16>
    %196 = vector.extract_strided_slice %186 {offsets = [0, 0], sizes = [8, 8], strides = [1, 1]} : vector<8x32xf32> to vector<8x8xf32>
    %197 = arith.truncf %196 : vector<8x8xf32> to vector<8x8xbf16>
    %198 = vector.extract_strided_slice %191 {offsets = [0, 0], sizes = [8, 8], strides = [1, 1]} : vector<8x32xf32> to vector<8x8xf32>
    %199 = arith.truncf %198 : vector<8x8xf32> to vector<8x8xbf16>
    "tpu.trace_start"() <{level = 10 : i32, message = "td,sd->ts"}> : () -> ()
    %cst_87 = arith.constant dense<0.000000e+00> : vector<8x8xf32>
    %200 = tpu.matmul %195, %197, %cst_87 {dimension_numbers = #tpu.dot_dimension_numbers<[1], [1], [0], [0], [0, 0, 1, 0], [], []>} : vector<8x8xbf16>, vector<8x8xbf16>, vector<8x8xf32> -> vector<8x8xf32>
    "tpu.trace_stop"() : () -> ()
    %cst_88 = arith.constant dense<0xFF800000> : vector<8xf32>
    %201 = vector.multi_reduction <maximumf>, %200, %cst_88 [1] : vector<8x8xf32> to vector<8xf32>
    %202 = vector.shape_cast %201 : vector<8xf32> to vector<8x1xf32>
    %203 = vector.broadcast %202 : vector<8x1xf32> to vector<8x8xf32>
    %204 = arith.subf %200, %203 : vector<8x8xf32>
    %205 = math.exp %204 : vector<8x8xf32>
    %cst_89 = arith.constant dense<0.000000e+00> : vector<8xf32>
    %206 = vector.multi_reduction <add>, %205, %cst_89 [1] : vector<8x8xf32> to vector<8xf32>
    %207 = vector.shape_cast %206 : vector<8xf32> to vector<8x1xf32>
    %208 = arith.truncf %205 : vector<8x8xf32> to vector<8x8xbf16>
    %cst_90 = arith.constant dense<0.000000e+00> : vector<8x8xf32>
    %209 = tpu.matmul %208, %199, %cst_90 {dimension_numbers = #tpu.dot_dimension_numbers<[1], [0], [0], [1], [0, 0, 1, 1], [], []>} : vector<8x8xbf16>, vector<8x8xbf16>, vector<8x8xf32> -> vector<8x8xf32>
    %210 = tpu.reciprocal %207 : vector<8x1xf32> -> vector<8x1xf32>
    %211 = vector.broadcast %210 : vector<8x1xf32> to vector<8x8xf32>
    %212 = arith.mulf %209, %211 : vector<8x8xf32>
    %c0_91 = arith.constant 0 : index
    %c0_92 = arith.constant 0 : index
    %213 = vector.load %arg32[%c0_91, %c0_92] : memref<8x32xf32, #tpu.memory_space<vmem>>, vector<8x8xf32>
    tpu.vector_store %arg32[%c0_91, %c0_92], %212 {strides = array<i32>} : memref<8x32xf32, #tpu.memory_space<vmem>>, vector<8x8xf32>,
    %214 = vector.extract_strided_slice %181 {offsets = [0, 8], sizes = [8, 8], strides = [1, 1]} : vector<8x32xf32> to vector<8x8xf32>
    %cst_93 = arith.constant 0.353553385 : f32
    %215 = vector.broadcast %cst_93 : f32 to vector<8x8xf32>
    %216 = arith.mulf %214, %215 : vector<8x8xf32>
    %217 = arith.truncf %216 : vector<8x8xf32> to vector<8x8xbf16>
    %218 = vector.extract_strided_slice %186 {offsets = [0, 8], sizes = [8, 8], strides = [1, 1]} : vector<8x32xf32> to vector<8x8xf32>
    %219 = arith.truncf %218 : vector<8x8xf32> to vector<8x8xbf16>
    %220 = vector.extract_strided_slice %191 {offsets = [0, 8], sizes = [8, 8], strides = [1, 1]} : vector<8x32xf32> to vector<8x8xf32>
    %221 = arith.truncf %220 : vector<8x8xf32> to vector<8x8xbf16>
    "tpu.trace_start"() <{level = 10 : i32, message = "td,sd->ts"}> : () -> ()
    %cst_94 = arith.constant dense<0.000000e+00> : vector<8x8xf32>
    %222 = tpu.matmul %217, %219, %cst_94 {dimension_numbers = #tpu.dot_dimension_numbers<[1], [1], [0], [0], [0, 0, 1, 0], [], []>} : vector<8x8xbf16>, vector<8x8xbf16>, vector<8x8xf32> -> vector<8x8xf32>
    "tpu.trace_stop"() : () -> ()
    %cst_95 = arith.constant dense<0xFF800000> : vector<8xf32>
    %223 = vector.multi_reduction <maximumf>, %222, %cst_95 [1] : vector<8x8xf32> to vector<8xf32>
    %224 = vector.shape_cast %223 : vector<8xf32> to vector<8x1xf32>
    %225 = vector.broadcast %224 : vector<8x1xf32> to vector<8x8xf32>
    %226 = arith.subf %222, %225 : vector<8x8xf32>
    %227 = math.exp %226 : vector<8x8xf32>
    %cst_96 = arith.constant dense<0.000000e+00> : vector<8xf32>
    %228 = vector.multi_reduction <add>, %227, %cst_96 [1] : vector<8x8xf32> to vector<8xf32>
    %229 = vector.shape_cast %228 : vector<8xf32> to vector<8x1xf32>
    %230 = arith.truncf %227 : vector<8x8xf32> to vector<8x8xbf16>
    %cst_97 = arith.constant dense<0.000000e+00> : vector<8x8xf32>
    %231 = tpu.matmul %230, %221, %cst_97 {dimension_numbers = #tpu.dot_dimension_numbers<[1], [0], [0], [1], [0, 0, 1, 1], [], []>} : vector<8x8xbf16>, vector<8x8xbf16>, vector<8x8xf32> -> vector<8x8xf32>
    %232 = tpu.reciprocal %229 : vector<8x1xf32> -> vector<8x1xf32>
    %233 = vector.broadcast %232 : vector<8x1xf32> to vector<8x8xf32>
    %234 = arith.mulf %231, %233 : vector<8x8xf32>
    %c0_98 = arith.constant 0 : index
    %c8_99 = arith.constant 8 : index
    %235 = vector.load %arg32[%c0_98, %c8_99] : memref<8x32xf32, #tpu.memory_space<vmem>>, vector<8x8xf32>
    tpu.vector_store %arg32[%c0_98, %c8_99], %234 {strides = array<i32>} : memref<8x32xf32, #tpu.memory_space<vmem>>, vector<8x8xf32>,
    %236 = vector.extract_strided_slice %181 {offsets = [0, 16], sizes = [8, 8], strides = [1, 1]} : vector<8x32xf32> to vector<8x8xf32>
    %cst_100 = arith.constant 0.353553385 : f32
    %237 = vector.broadcast %cst_100 : f32 to vector<8x8xf32>
    %238 = arith.mulf %236, %237 : vector<8x8xf32>
    %239 = arith.truncf %238 : vector<8x8xf32> to vector<8x8xbf16>
    %240 = vector.extract_strided_slice %186 {offsets = [0, 16], sizes = [8, 8], strides = [1, 1]} : vector<8x32xf32> to vector<8x8xf32>
    %241 = arith.truncf %240 : vector<8x8xf32> to vector<8x8xbf16>
    %242 = vector.extract_strided_slice %191 {offsets = [0, 16], sizes = [8, 8], strides = [1, 1]} : vector<8x32xf32> to vector<8x8xf32>
    %243 = arith.truncf %242 : vector<8x8xf32> to vector<8x8xbf16>
    "tpu.trace_start"() <{level = 10 : i32, message = "td,sd->ts"}> : () -> ()
    %cst_101 = arith.constant dense<0.000000e+00> : vector<8x8xf32>
    %244 = tpu.matmul %239, %241, %cst_101 {dimension_numbers = #tpu.dot_dimension_numbers<[1], [1], [0], [0], [0, 0, 1, 0], [], []>} : vector<8x8xbf16>, vector<8x8xbf16>, vector<8x8xf32> -> vector<8x8xf32>
    "tpu.trace_stop"() : () -> ()
    %cst_102 = arith.constant dense<0xFF800000> : vector<8xf32>
    %245 = vector.multi_reduction <maximumf>, %244, %cst_102 [1] : vector<8x8xf32> to vector<8xf32>
    %246 = vector.shape_cast %245 : vector<8xf32> to vector<8x1xf32>
    %247 = vector.broadcast %246 : vector<8x1xf32> to vector<8x8xf32>
    %248 = arith.subf %244, %247 : vector<8x8xf32>
    %249 = math.exp %248 : vector<8x8xf32>
    %cst_103 = arith.constant dense<0.000000e+00> : vector<8xf32>
    %250 = vector.multi_reduction <add>, %249, %cst_103 [1] : vector<8x8xf32> to vector<8xf32>
    %251 = vector.shape_cast %250 : vector<8xf32> to vector<8x1xf32>
    %252 = arith.truncf %249 : vector<8x8xf32> to vector<8x8xbf16>
    %cst_104 = arith.constant dense<0.000000e+00> : vector<8x8xf32>
    %253 = tpu.matmul %252, %243, %cst_104 {dimension_numbers = #tpu.dot_dimension_numbers<[1], [0], [0], [1], [0, 0, 1, 1], [], []>} : vector<8x8xbf16>, vector<8x8xbf16>, vector<8x8xf32> -> vector<8x8xf32>
    %254 = tpu.reciprocal %251 : vector<8x1xf32> -> vector<8x1xf32>
    %255 = vector.broadcast %254 : vector<8x1xf32> to vector<8x8xf32>
    %256 = arith.mulf %253, %255 : vector<8x8xf32>
    %c0_105 = arith.constant 0 : index
    %c16_106 = arith.constant 16 : index
    %257 = vector.load %arg32[%c0_105, %c16_106] : memref<8x32xf32, #tpu.memory_space<vmem>>, vector<8x8xf32>
    tpu.vector_store %arg32[%c0_105, %c16_106], %256 {strides = array<i32>} : memref<8x32xf32, #tpu.memory_space<vmem>>, vector<8x8xf32>,
    %258 = vector.extract_strided_slice %181 {offsets = [0, 24], sizes = [8, 8], strides = [1, 1]} : vector<8x32xf32> to vector<8x8xf32>
    %cst_107 = arith.constant 0.353553385 : f32
    %259 = vector.broadcast %cst_107 : f32 to vector<8x8xf32>
    %260 = arith.mulf %258, %259 : vector<8x8xf32>
    %261 = arith.truncf %260 : vector<8x8xf32> to vector<8x8xbf16>
    %262 = vector.extract_strided_slice %186 {offsets = [0, 24], sizes = [8, 8], strides = [1, 1]} : vector<8x32xf32> to vector<8x8xf32>
    %263 = arith.truncf %262 : vector<8x8xf32> to vector<8x8xbf16>
    %264 = vector.extract_strided_slice %191 {offsets = [0, 24], sizes = [8, 8], strides = [1, 1]} : vector<8x32xf32> to vector<8x8xf32>
    %265 = arith.truncf %264 : vector<8x8xf32> to vector<8x8xbf16>
    "tpu.trace_start"() <{level = 10 : i32, message = "td,sd->ts"}> : () -> ()
    %cst_108 = arith.constant dense<0.000000e+00> : vector<8x8xf32>
    %266 = tpu.matmul %261, %263, %cst_108 {dimension_numbers = #tpu.dot_dimension_numbers<[1], [1], [0], [0], [0, 0, 1, 0], [], []>} : vector<8x8xbf16>, vector<8x8xbf16>, vector<8x8xf32> -> vector<8x8xf32>
    "tpu.trace_stop"() : () -> ()
    %cst_109 = arith.constant dense<0xFF800000> : vector<8xf32>
    %267 = vector.multi_reduction <maximumf>, %266, %cst_109 [1] : vector<8x8xf32> to vector<8xf32>
    %268 = vector.shape_cast %267 : vector<8xf32> to vector<8x1xf32>
    %269 = vector.broadcast %268 : vector<8x1xf32> to vector<8x8xf32>
    %270 = arith.subf %266, %269 : vector<8x8xf32>
    %271 = math.exp %270 : vector<8x8xf32>
    %cst_110 = arith.constant dense<0.000000e+00> : vector<8xf32>
    %272 = vector.multi_reduction <add>, %271, %cst_110 [1] : vector<8x8xf32> to vector<8xf32>
    %273 = vector.shape_cast %272 : vector<8xf32> to vector<8x1xf32>
    %274 = arith.truncf %271 : vector<8x8xf32> to vector<8x8xbf16>
    %cst_111 = arith.constant dense<0.000000e+00> : vector<8x8xf32>
    %275 = tpu.matmul %274, %265, %cst_111 {dimension_numbers = #tpu.dot_dimension_numbers<[1], [0], [0], [1], [0, 0, 1, 1], [], []>} : vector<8x8xbf16>, vector<8x8xbf16>, vector<8x8xf32> -> vector<8x8xf32>
    %276 = tpu.reciprocal %273 : vector<8x1xf32> -> vector<8x1xf32>
    %277 = vector.broadcast %276 : vector<8x1xf32> to vector<8x8xf32>
    %278 = arith.mulf %275, %277 : vector<8x8xf32>
    %c0_112 = arith.constant 0 : index
    %c24_113 = arith.constant 24 : index
    %279 = vector.load %arg32[%c0_112, %c24_113] : memref<8x32xf32, #tpu.memory_space<vmem>>, vector<8x8xf32>
    tpu.vector_store %arg32[%c0_112, %c24_113], %278 {strides = array<i32>} : memref<8x32xf32, #tpu.memory_space<vmem>>, vector<8x8xf32>,
    %c0_114 = arith.constant 0 : index
    %c0_115 = arith.constant 0 : index
    %280 = vector.load %arg32[%c0_114, %c0_115] : memref<8x32xf32, #tpu.memory_space<vmem>>, vector<8x32xf32>
    %281 = arith.truncf %280 : vector<8x32xf32> to vector<8x32xbf16>
    %c0_116 = arith.constant 0 : index
    %c0_117 = arith.constant 0 : index
    %282 = vector.load %arg21[%c0_116, %c0_117] : memref<32x32xbf16, #tpu.memory_space<vmem>>, vector<32x32xbf16>
    %cst_118 = arith.constant dense<0.000000e+00> : vector<8x32xf32>
    %283 = tpu.matmul %281, %282, %cst_118 {dimension_numbers = #tpu.dot_dimension_numbers<[1], [0], [0], [1], [0, 0, 1, 1], [], []>} : vector<8x32xbf16>, vector<32x32xbf16>, vector<8x32xf32> -> vector<8x32xf32>
    %c0_119 = arith.constant 0 : index
    %c0_120 = arith.constant 0 : index
    %284 = vector.load %arg22[%c0_119, %c0_120] : memref<1x32xf32, #tpu.memory_space<vmem>>, vector<1x32xf32>
    %285 = vector.broadcast %284 : vector<1x32xf32> to vector<8x32xf32>
    %286 = arith.addf %283, %285 : vector<8x32xf32>
    %287 = arith.addf %150, %286 : vector<8x32xf32>
    %c0_121 = arith.constant 0 : index
    %c0_122 = arith.constant 0 : index
    %288 = vector.load %arg23[%c0_121, %c0_122] : memref<1x32xf32, #tpu.memory_space<vmem>>, vector<1x32xf32>
    %c0_123 = arith.constant 0 : index
    %c0_124 = arith.constant 0 : index
    %289 = vector.load %arg24[%c0_123, %c0_124] : memref<1x32xf32, #tpu.memory_space<vmem>>, vector<1x32xf32>
    %cst_125 = arith.constant dense<0.000000e+00> : vector<8xf32>
    %290 = vector.multi_reduction <add>, %287, %cst_125 [1] : vector<8x32xf32> to vector<8xf32>
    %291 = vector.shape_cast %290 : vector<8xf32> to vector<8x1xf32>
    %cst_126 = arith.constant 3.200000e+01 : f32
    %292 = vector.broadcast %cst_126 : f32 to vector<8x1xf32>
    %293 = arith.divf %291, %292 : vector<8x1xf32>
    %294 = vector.broadcast %293 : vector<8x1xf32> to vector<8x32xf32>
    %295 = arith.subf %287, %294 : vector<8x32xf32>
    %296 = arith.mulf %295, %295 : vector<8x32xf32>
    %cst_127 = arith.constant dense<0.000000e+00> : vector<8xf32>
    %297 = vector.multi_reduction <add>, %296, %cst_127 [1] : vector<8x32xf32> to vector<8xf32>
    %298 = vector.shape_cast %297 : vector<8xf32> to vector<8x1xf32>
    %cst_128 = arith.constant 3.200000e+01 : f32
    %299 = vector.broadcast %cst_128 : f32 to vector<8x1xf32>
    %300 = arith.divf %298, %299 : vector<8x1xf32>
    %301 = vector.broadcast %293 : vector<8x1xf32> to vector<8x32xf32>
    %302 = arith.subf %287, %301 : vector<8x32xf32>
    %cst_129 = arith.constant 9.99999974E-6 : f32
    %303 = vector.broadcast %cst_129 : f32 to vector<8x1xf32>
    %304 = arith.addf %300, %303 : vector<8x1xf32>
    %305 = math.rsqrt %304 : vector<8x1xf32>
    %306 = vector.broadcast %305 : vector<8x1xf32> to vector<8x32xf32>
    %307 = arith.mulf %302, %306 : vector<8x32xf32>
    %308 = vector.broadcast %288 : vector<1x32xf32> to vector<8x32xf32>
    %309 = arith.mulf %307, %308 : vector<8x32xf32>
    %310 = vector.broadcast %289 : vector<1x32xf32> to vector<8x32xf32>
    %311 = arith.addf %309, %310 : vector<8x32xf32>
    %312 = arith.truncf %311 : vector<8x32xf32> to vector<8x32xbf16>
    %c0_130 = arith.constant 0 : index
    %c0_131 = arith.constant 0 : index
    %313 = vector.load %arg25[%c0_130, %c0_131] : memref<32x64xbf16, #tpu.memory_space<vmem>>, vector<32x64xbf16>
    %cst_132 = arith.constant dense<0.000000e+00> : vector<8x64xf32>
    %314 = tpu.matmul %312, %313, %cst_132 {dimension_numbers = #tpu.dot_dimension_numbers<[1], [0], [0], [1], [0, 0, 1, 1], [], []>} : vector<8x32xbf16>, vector<32x64xbf16>, vector<8x64xf32> -> vector<8x64xf32>
    %c0_133 = arith.constant 0 : index
    %c0_134 = arith.constant 0 : index
    %315 = vector.load %arg26[%c0_133, %c0_134] : memref<1x64xf32, #tpu.memory_space<vmem>>, vector<1x64xf32>
    %316 = vector.broadcast %315 : vector<1x64xf32> to vector<8x64xf32>
    %317 = arith.addf %314, %316 : vector<8x64xf32>
    %318 = arith.mulf %317, %317 : vector<8x64xf32>
    %319 = arith.mulf %317, %318 : vector<8x64xf32>
    %cst_135 = arith.constant 4.471500e-02 : f32
    %320 = vector.broadcast %cst_135 : f32 to vector<8x64xf32>
    %321 = arith.mulf %320, %319 : vector<8x64xf32>
    %322 = arith.addf %317, %321 : vector<8x64xf32>
    %cst_136 = arith.constant 0.797884583 : f32
    %323 = vector.broadcast %cst_136 : f32 to vector<8x64xf32>
    %324 = arith.mulf %323, %322 : vector<8x64xf32>
    %325 = math.tanh %324 : vector<8x64xf32>
    %cst_137 = arith.constant 1.000000e+00 : f32
    %326 = vector.broadcast %cst_137 : f32 to vector<8x64xf32>
    %327 = arith.addf %326, %325 : vector<8x64xf32>
    %cst_138 = arith.constant 5.000000e-01 : f32
    %328 = vector.broadcast %cst_138 : f32 to vector<8x64xf32>
    %329 = arith.mulf %328, %327 : vector<8x64xf32>
    %330 = arith.mulf %317, %329 : vector<8x64xf32>
    %331 = arith.truncf %330 : vector<8x64xf32> to vector<8x64xbf16>
    %c0_139 = arith.constant 0 : index
    %c0_140 = arith.constant 0 : index
    %332 = vector.load %arg27[%c0_139, %c0_140] : memref<64x32xbf16, #tpu.memory_space<vmem>>, vector<64x32xbf16>
    %cst_141 = arith.constant dense<0.000000e+00> : vector<8x32xf32>
    %333 = tpu.matmul %331, %332, %cst_141 {dimension_numbers = #tpu.dot_dimension_numbers<[1], [0], [0], [1], [0, 0, 1, 1], [], []>} : vector<8x64xbf16>, vector<64x32xbf16>, vector<8x32xf32> -> vector<8x32xf32>
    %c0_142 = arith.constant 0 : index
    %c0_143 = arith.constant 0 : index
    %334 = vector.load %arg28[%c0_142, %c0_143] : memref<1x32xf32, #tpu.memory_space<vmem>>, vector<1x32xf32>
    %335 = vector.broadcast %334 : vector<1x32xf32> to vector<8x32xf32>
    %336 = arith.addf %333, %335 : vector<8x32xf32>
    %337 = arith.addf %287, %336 : vector<8x32xf32>
    %c0_144 = arith.constant 0 : index
    %c0_145 = arith.constant 0 : index
    %c0_146 = arith.constant 0 : index
    %338 = vector.load %arg31[%c0_144, %c0_145, %c0_146] : memref<1x8x32xf32, #tpu.memory_space<vmem>>, vector<1x8x32xf32>
    %339 = vector.shape_cast %338 : vector<1x8x32xf32> to vector<8x32xf32>
    %340 = vector.shape_cast %337 : vector<8x32xf32> to vector<1x8x32xf32>
    tpu.vector_store %arg31[%c0_144, %c0_145, %c0_146], %340 {strides = array<i32>} : memref<1x8x32xf32, #tpu.memory_space<vmem>>, vector<1x8x32xf32>,
    return
  }
  func.func @transform_0(%arg0: i32) -> (i32, i32, i32) {
    %c0_i32 = arith.constant 0 : i32
    %c0_i32_0 = arith.constant 0 : i32
    %c0_i32_1 = arith.constant 0 : i32
    return %arg0, %c0_i32, %c0_i32_0 : i32, i32, i32
  }
  func.func @transform_1(%arg0: i32) -> (i32, i32, i32) {
    %c0_i32 = arith.constant 0 : i32
    %c0_i32_0 = arith.constant 0 : i32
    %c0_i32_1 = arith.constant 0 : i32
    return %arg0, %c0_i32, %c0_i32_0 : i32, i32, i32
  }
  func.func @transform_2(%arg0: i32) -> (i32, i32) {
    %c0_i32 = arith.constant 0 : i32
    %c0_i32_0 = arith.constant 0 : i32
    %c0_i32_1 = arith.constant 0 : i32
    return %c0_i32, %c0_i32_0 : i32, i32
  }
  func.func @transform_3(%arg0: i32) -> (i32, i32) {
    %c0_i32 = arith.constant 0 : i32
    %c0_i32_0 = arith.constant 0 : i32
    %c0_i32_1 = arith.constant 0 : i32
    return %c0_i32, %c0_i32_0 : i32, i32
  }
  func.func @transform_4(%arg0: i32) -> (i32, i32) {
    %c0_i32 = arith.constant 0 : i32
    %c0_i32_0 = arith.constant 0 : i32
    %c0_i32_1 = arith.constant 0 : i32
    return %c0_i32, %c0_i32_0 : i32, i32
  }
  func.func @transform_5(%arg0: i32) -> (i32, i32) {
    %c0_i32 = arith.constant 0 : i32
    %c0_i32_0 = arith.constant 0 : i32
    %c0_i32_1 = arith.constant 0 : i32
    return %c0_i32, %c0_i32_0 : i32, i32
  }
  func.func @transform_6(%arg0: i32) -> (i32, i32) {
    %c0_i32 = arith.constant 0 : i32
    %c0_i32_0 = arith.constant 0 : i32
    %c0_i32_1 = arith.constant 0 : i32
    return %c0_i32, %c0_i32_0 : i32, i32
  }
  func.func @transform_7(%arg0: i32) -> (i32, i32) {
    %c0_i32 = arith.constant 0 : i32
    %c0_i32_0 = arith.constant 0 : i32
    %c0_i32_1 = arith.constant 0 : i32
    return %c0_i32, %c0_i32_0 : i32, i32
  }
  func.func @transform_8(%arg0: i32) -> (i32, i32) {
    %c0_i32 = arith.constant 0 : i32
    %c0_i32_0 = arith.constant 0 : i32
    %c0_i32_1 = arith.constant 0 : i32
    return %c0_i32, %c0_i32_0 : i32, i32
  }
  func.func @transform_9(%arg0: i32) -> (i32, i32) {
    %c0_i32 = arith.constant 0 : i32
    %c0_i32_0 = arith.constant 0 : i32
    %c0_i32_1 = arith.constant 0 : i32
    return %c0_i32, %c0_i32_0 : i32, i32
  }
  func.func @transform_10(%arg0: i32) -> (i32, i32) {
    %c0_i32 = arith.constant 0 : i32
    %c0_i32_0 = arith.constant 0 : i32
    %c0_i32_1 = arith.constant 0 : i32
    return %c0_i32, %c0_i32_0 : i32, i32
  }
  func.func @transform_11(%arg0: i32) -> (i32, i32) {
    %c0_i32 = arith.constant 0 : i32
    %c0_i32_0 = arith.constant 0 : i32
    %c0_i32_1 = arith.constant 0 : i32
    return %c0_i32, %c0_i32_0 : i32, i32
  }
  func.func @transform_12(%arg0: i32) -> (i32, i32) {
    %c0_i32 = arith.constant 0 : i32
    %c0_i32_0 = arith.constant 0 : i32
    %c0_i32_1 = arith.constant 0 : i32
    return %c0_i32, %c0_i32_0 : i32, i32
  }
  func.func @transform_13(%arg0: i32) -> (i32, i32) {
    %c0_i32 = arith.constant 0 : i32
    %c0_i32_0 = arith.constant 0 : i32
    %c0_i32_1 = arith.constant 0 : i32
    return %c0_i32, %c0_i32_0 : i32, i32
  }
  func.func @transform_14(%arg0: i32) -> (i32, i32) {
    %c0_i32 = arith.constant 0 : i32
    %c0_i32_0 = arith.constant 0 : i32
    %c0_i32_1 = arith.constant 0 : i32
    return %c0_i32, %c0_i32_0 : i32, i32
  }
  func.func @transform_15(%arg0: i32) -> (i32, i32) {
    %c0_i32 = arith.constant 0 : i32
    %c0_i32_0 = arith.constant 0 : i32
    %c0_i32_1 = arith.constant 0 : i32
    return %c0_i32, %c0_i32_0 : i32, i32
  }
  func.func @transform_16(%arg0: i32) -> (i32, i32) {
    %c0_i32 = arith.constant 0 : i32
    %c0_i32_0 = arith.constant 0 : i32
    %c0_i32_1 = arith.constant 0 : i32
    return %c0_i32, %c0_i32_0 : i32, i32
  }
  func.func @transform_17(%arg0: i32) -> (i32, i32) {
    %c0_i32 = arith.constant 0 : i32
    %c0_i32_0 = arith.constant 0 : i32
    %c0_i32_1 = arith.constant 0 : i32
    return %c0_i32, %c0_i32_0 : i32, i32
  }
  func.func @transform_18(%arg0: i32) -> (i32, i32) {
    %c0_i32 = arith.constant 0 : i32
    %c0_i32_0 = arith.constant 0 : i32
    %c0_i32_1 = arith.constant 0 : i32
    return %c0_i32, %c0_i32_0 : i32, i32
  }
  func.func @transform_19(%arg0: i32) -> (i32, i32) {
    %c0_i32 = arith.constant 0 : i32
    %c0_i32_0 = arith.constant 0 : i32
    %c0_i32_1 = arith.constant 0 : i32
    return %c0_i32, %c0_i32_0 : i32, i32
  }
  func.func @transform_20(%arg0: i32) -> (i32, i32) {
    %c0_i32 = arith.constant 0 : i32
    %c0_i32_0 = arith.constant 0 : i32
    %c0_i32_1 = arith.constant 0 : i32
    return %c0_i32, %c0_i32_0 : i32, i32
  }
  func.func @transform_21(%arg0: i32) -> (i32, i32) {
    %c0_i32 = arith.constant 0 : i32
    %c0_i32_0 = arith.constant 0 : i32
    %c0_i32_1 = arith.constant 0 : i32
    return %c0_i32, %c0_i32_0 : i32, i32
  }
  func.func @transform_22(%arg0: i32) -> (i32, i32) {
    %c0_i32 = arith.constant 0 : i32
    %c0_i32_0 = arith.constant 0 : i32
    %c0_i32_1 = arith.constant 0 : i32
    return %c0_i32, %c0_i32_0 : i32, i32
  }
  func.func @transform_23(%arg0: i32) -> (i32, i32) {
    %c0_i32 = arith.constant 0 : i32
    %c0_i32_0 = arith.constant 0 : i32
    %c0_i32_1 = arith.constant 0 : i32
    return %c0_i32, %c0_i32_0 : i32, i32
  }
  func.func @transform_24(%arg0: i32) -> (i32, i32) {
    %c0_i32 = arith.constant 0 : i32
    %c0_i32_0 = arith.constant 0 : i32
    %c0_i32_1 = arith.constant 0 : i32
    return %c0_i32, %c0_i32_0 : i32, i32
  }
  func.func @transform_25(%arg0: i32) -> (i32, i32) {
    %c0_i32 = arith.constant 0 : i32
    %c0_i32_0 = arith.constant 0 : i32
    %c0_i32_1 = arith.constant 0 : i32
    return %c0_i32, %c0_i32_0 : i32, i32
  }
  func.func @transform_26(%arg0: i32) -> (i32, i32) {
    %c0_i32 = arith.constant 0 : i32
    %c0_i32_0 = arith.constant 0 : i32
    %c0_i32_1 = arith.constant 0 : i32
    return %c0_i32, %c0_i32_0 : i32, i32
  }
  func.func @transform_27(%arg0: i32) -> (i32, i32) {
    %c0_i32 = arith.constant 0 : i32
    %c0_i32_0 = arith.constant 0 : i32
    %c0_i32_1 = arith.constant 0 : i32
    return %c0_i32, %c0_i32_0 : i32, i32
  }
  func.func @transform_28(%arg0: i32) -> (i32, i32) {
    %c0_i32 = arith.constant 0 : i32
    %c0_i32_0 = arith.constant 0 : i32
    %c0_i32_1 = arith.constant 0 : i32
    return %c0_i32, %c0_i32_0 : i32, i32
  }
  func.func @transform_29(%arg0: i32) -> (i32, i32) {
    %c0_i32 = arith.constant 0 : i32
    %c0_i32_0 = arith.constant 0 : i32
    %c0_i32_1 = arith.constant 0 : i32
    return %c0_i32, %c0_i32_0 : i32, i32
  }
  func.func @transform_30(%arg0: i32) -> (i32, i32, i32) {
    %c0_i32 = arith.constant 0 : i32
    %c0_i32_0 = arith.constant 0 : i32
    %c0_i32_1 = arith.constant 0 : i32
    return %arg0, %c0_i32, %c0_i32_0 : i32, i32, i32
  }
}

</mosaic_0001>

<llo_original>
// kernel: tpu_custom_call.1
$region0: #{tpu_custom_call.1}
  #allocation0 [shape = 'u32[]', space=smem, size = 0x4, offset = 0x4, fixed_abs, tag = 'smem constant byte address 0x4 - core index']
  #allocation1 [shape = 'u32[72,128]{1,0:T(1,128)}', space=vmem, size = 0x9000, scoped, tag = 'internal scratch']
  #allocation2 [shape = 'f32[8,32]{1,0:T(8,128)}', space=vmem, size = 0x1000, scoped, tag = 'scratch operand']
  %s0 = inlined_call_operand.smem [shape: u32[31], index: -1, kind: input, shape index: {}]
  %s1 = sld [smem:[%s0]]
  %s2 = scalar_lea.smem %s0, 1
  %s3 = sld [smem:[%s2]]
  %s4 = scalar_lea.smem %s0, 2
  %s5 = sld [smem:[%s4]]
  %s6 = scalar_lea.smem %s0, 3
  %s7 = sld [smem:[%s6]]
  %s8 = scalar_lea.smem %s0, 4
  %s9 = sld [smem:[%s8]]
  %s10 = scalar_lea.smem %s0, 5
  %s11 = sld [smem:[%s10]]
  %s12 = scalar_lea.smem %s0, 6
  %s13 = sld [smem:[%s12]]
  %s14 = scalar_lea.smem %s0, 7
  %s15 = sld [smem:[%s14]]
  %s16 = scalar_lea.smem %s0, 8
  %s17 = sld [smem:[%s16]]
  %s18 = scalar_lea.smem %s0, 9
  %s19 = sld [smem:[%s18]]
  %s20 = scalar_lea.smem %s0, 10
  %s21 = sld [smem:[%s20]]
  %s22 = scalar_lea.smem %s0, 11
  %s23 = sld [smem:[%s22]]
  %s24 = scalar_lea.smem %s0, 12
  %s25 = sld [smem:[%s24]]
  %s26 = scalar_lea.smem %s0, 13
  %s27 = sld [smem:[%s26]]
  %s28 = scalar_lea.smem %s0, 14
  %s29 = sld [smem:[%s28]]
  %s30 = scalar_lea.smem %s0, 15
  %s31 = sld [smem:[%s30]]
  %s32 = scalar_lea.smem %s0, 16
  %s33 = sld [smem:[%s32]]
  %s34 = scalar_lea.smem %s0, 17
  %s35 = sld [smem:[%s34]]
  %s36 = scalar_lea.smem %s0, 18
  %s37 = sld [smem:[%s36]]
  %s38 = scalar_lea.smem %s0, 19
  %s39 = sld [smem:[%s38]]
  %s40 = scalar_lea.smem %s0, 20
  %s41 = sld [smem:[%s40]]
  %s42 = scalar_lea.smem %s0, 21
  %s43 = sld [smem:[%s42]]
  %s44 = scalar_lea.smem %s0, 22
  %s45 = sld [smem:[%s44]]
  %s46 = scalar_lea.smem %s0, 23
  %s47 = sld [smem:[%s46]]
  %s48 = scalar_lea.smem %s0, 24
  %s49 = sld [smem:[%s48]]
  %s50 = scalar_lea.smem %s0, 25
  %s51 = sld [smem:[%s50]]
  %s52 = scalar_lea.smem %s0, 26
  %s53 = sld [smem:[%s52]]
  %s54 = scalar_lea.smem %s0, 27
  %s55 = sld [smem:[%s54]]
  %s56 = scalar_lea.smem %s0, 28
  %s57 = sld [smem:[%s56]]
  %s58 = scalar_lea.smem %s0, 29
  %s59 = sld [smem:[%s58]]
  %s60 = scalar_lea.smem %s0, 30
  %s61 = sld [smem:[%s60]]
  %s62 = sld [smem:[#allocation0]]
  $region213: #{tpu_custom_call.1} parent=0
    _
  %s64 = ssub.s32 1, %s62
  %s65 = scalar_select 0, %s64, %s62
  $region1: #{tpu_custom_call.1} parent=0
    #allocation3 [shape = 'u8[8192]{0}', space=vmem, size = 0x2000, scoped, tag = 'input window, operand 6, single buffered']
    #allocation4 [shape = 's32[2]{0}', space=sflag, size = 0x8, scoped, tag = 'scoped memory for tpu_custom_call.1']
    #allocation5 [shape = 's32[2]{0}', space=sflag, size = 0x8, scoped, tag = 'scoped memory for tpu_custom_call.1']
    #allocation6 [shape = 'u8[8192]{0}', space=vmem, size = 0x2000, scoped, tag = 'input window, operand 8, single buffered']
    #allocation7 [shape = 's32[1]{0}', space=sflag, size = 0x4, scoped, tag = 'scoped memory for tpu_custom_call.1']
    #allocation8 [shape = 'u8[8192]{0}', space=vmem, size = 0x2000, scoped, tag = 'input window, operand 10, single buffered']
    #allocation9 [shape = 'u8[8192]{0}', space=vmem, size = 0x2000, scoped, tag = 'input window, operand 14, single buffered']
    #allocation10 [shape = 's32[1]{0}', space=sflag, size = 0x4, scoped, tag = 'scoped memory for tpu_custom_call.1']
    #allocation11 [shape = 'u8[512]{0}', space=vmem, size = 0x400, scoped, tag = 'input window, operand 15, single buffered']
    #allocation12 [shape = 'u8[8192]{0}', space=vmem, size = 0x2000, scoped, tag = 'input window, operand 16, single buffered']
    #allocation13 [shape = 's32[1]{0}', space=sflag, size = 0x4, scoped, tag = 'scoped memory for tpu_custom_call.1']
    #allocation14 [shape = 'u8[512]{0}', space=vmem, size = 0x400, scoped, tag = 'input window, operand 17, single buffered']
    #allocation15 [shape = 'u8[8192]{0}', space=vmem, size = 0x2000, scoped, tag = 'input window, operand 18, single buffered']
    #allocation16 [shape = 's32[1]{0}', space=sflag, size = 0x4, scoped, tag = 'scoped memory for tpu_custom_call.1']
    #allocation17 [shape = 'u8[512]{0}', space=vmem, size = 0x400, scoped, tag = 'input window, operand 19, single buffered']
    #allocation18 [shape = 'u8[8192]{0}', space=vmem, size = 0x2000, scoped, tag = 'input window, operand 20, single buffered']
    #allocation19 [shape = 's32[1]{0}', space=sflag, size = 0x4, scoped, tag = 'scoped memory for tpu_custom_call.1']
    #allocation20 [shape = 'u8[512]{0}', space=vmem, size = 0x400, scoped, tag = 'input window, operand 21, single buffered']
    #allocation21 [shape = 'u8[512]{0}', space=vmem, size = 0x400, scoped, tag = 'input window, operand 22, single buffered']
    #allocation22 [shape = 's32[1]{0}', space=sflag, size = 0x4, scoped, tag = 'scoped memory for tpu_custom_call.1']
    #allocation23 [shape = 'u8[512]{0}', space=vmem, size = 0x400, scoped, tag = 'input window, operand 23, single buffered']
    #allocation24 [shape = 'u8[8192]{0}', space=vmem, size = 0x2000, scoped, tag = 'input window, operand 24, single buffered']
    #allocation25 [shape = 's32[1]{0}', space=sflag, size = 0x4, scoped, tag = 'scoped memory for tpu_custom_call.1']
    #allocation26 [shape = 'u8[512]{0}', space=vmem, size = 0x400, scoped, tag = 'input window, operand 25, single buffered']
    #allocation27 [shape = 'u8[8192]{0}', space=vmem, size = 0x2000, scoped, tag = 'output window, operand 0']
    %66 = vsyncpa [#allocation4], 0
    %67 = vsyncpa [#allocation7], 0
    %68 = vsyncpa [#allocation10], 0
    %69 = vsyncpa [#allocation13], 0
    %70 = vsyncpa [#allocation16], 0
    %71 = vsyncpa [#allocation19], 0
    %72 = vsyncpa [#allocation22], 0
    %73 = vsyncpa [#allocation25], 0
    %74 = vsyncpa [#allocation5], 0
    %s75 = scalar_lea.sflag [#allocation5], 1
    %76 = vsyncpa %s75, 0
    loop: start=0, step=1, limit=4
    $region2: #{tpu_custom_call.1} parent=1 // loop_pre_header
      _
    $region3: #{tpu_custom_call.1} parent=1 // loop_header
      %s78 = sphi 0, %s82
      %p79 = scmp.ge.s32.totalorder %s78, 4
      %s88 = sphi 0, %s90
      %s91 = sphi 0, %s88
      %s92 = sphi 0, %s91
      %s108 = sphi 0, %s92
      %s114 = sphi 0, %s116
      %s117 = sphi 0, %s114
      %s118 = sphi 0, %s117
      %s134 = sphi 0, %s118
      %s138 = sphi 0, %s138
      %s140 = sphi 0, %s138
      %s141 = sphi 0, %s140
      %s155 = sphi 0, %s141
      %s159 = sphi 0, %s159
      %s161 = sphi 0, %s159
      %s162 = sphi 0, %s161
      %s176 = sphi 0, %s162
      %s180 = sphi 0, %s180
      %s182 = sphi 0, %s180
      %s183 = sphi 0, %s182
      %s197 = sphi 0, %s183
      %s201 = sphi 0, %s201
      %s203 = sphi 0, %s201
      %s204 = sphi 0, %s203
      %s218 = sphi 0, %s204
      %s222 = sphi 0, %s222
      %s224 = sphi 0, %s222
      %s225 = sphi 0, %s224
      %s239 = sphi 0, %s225
      %s243 = sphi 0, %s243
      %s245 = sphi 0, %s243
      %s246 = sphi 0, %s245
      %s260 = sphi 0, %s246
      %s264 = sphi 0, %s264
      %s266 = sphi 0, %s264
      %s267 = sphi 0, %s266
      %s281 = sphi 0, %s267
      %s285 = sphi 0, %s285
      %s287 = sphi 0, %s285
      %s288 = sphi 0, %s287
      %s302 = sphi 0, %s288
      %s306 = sphi 0, %s306
      %s308 = sphi 0, %s306
      %s309 = sphi 0, %s308
      %s323 = sphi 0, %s309
      %s327 = sphi 0, %s327
      %s329 = sphi 0, %s327
      %s330 = sphi 0, %s329
      %s344 = sphi 0, %s330
      %s348 = sphi 0, %s348
      %s350 = sphi 0, %s348
      %s351 = sphi 0, %s350
      %s365 = sphi 0, %s351
      %s369 = sphi 0, %s369
      %s371 = sphi 0, %s369
      %s372 = sphi 0, %s371
      %s386 = sphi 0, %s372
      %s390 = sphi 0, %s390
      %s392 = sphi 0, %s390
      %s393 = sphi 0, %s392
      %s407 = sphi 0, %s393
      %s411 = sphi 0, %s411
      %s413 = sphi 0, %s411
      %s414 = sphi 0, %s413
      %s428 = sphi 0, %s414
      %s432 = sphi 0, %s432
      %s434 = sphi 0, %s432
      %s435 = sphi 0, %s434
      %s449 = sphi 0, %s435
      %s453 = sphi 0, %s453
      %s455 = sphi 0, %s453
      %s456 = sphi 0, %s455
      %s470 = sphi 0, %s456
      %s474 = sphi 0, %s474
      %s476 = sphi 0, %s474
      %s477 = sphi 0, %s476
      %s491 = sphi 0, %s477
      %s495 = sphi 0, %s495
      %s497 = sphi 0, %s495
      %s498 = sphi 0, %s497
      %s512 = sphi 0, %s498
      %s516 = sphi 0, %s516
      %s518 = sphi 0, %s516
      %s519 = sphi 0, %s518
      %s533 = sphi 0, %s519
      %s537 = sphi 0, %s537
      %s539 = sphi 0, %s537
      %s540 = sphi 0, %s539
      %s554 = sphi 0, %s540
      %s558 = sphi 0, %s558
      %s560 = sphi 0, %s558
      %s561 = sphi 0, %s560
      %s575 = sphi 0, %s561
      %s579 = sphi 0, %s579
      %s581 = sphi 0, %s579
      %s582 = sphi 0, %s581
      %s596 = sphi 0, %s582
      %s600 = sphi 0, %s600
      %s602 = sphi 0, %s600
      %s603 = sphi 0, %s602
      %s617 = sphi 0, %s603
      %s621 = sphi 0, %s621
      %s623 = sphi 0, %s621
      %s624 = sphi 0, %s623
      %s638 = sphi 0, %s624
      %s642 = sphi 0, %s642
      %s644 = sphi 0, %s642
      %s645 = sphi 0, %s644
      %s659 = sphi 0, %s645
      %s663 = sphi 0, %s663
      %s665 = sphi 0, %s663
      %s666 = sphi 0, %s665
      %s680 = sphi 0, %s666
      %s684 = sphi 0, %s684
      %s686 = sphi 0, %s684
      %s687 = sphi 0, %s686
      %s701 = sphi 0, %s687
      %s705 = sphi 0, %s705
      %s707 = sphi 0, %s705
      %s708 = sphi 0, %s707
      %s722 = sphi 0, %s708
      %s728 = sphi 0, %s730
      %s731 = sphi 0, %s728
      %s732 = sphi 0, %s731
      %s748 = sphi 0, %s732
    $region4: #{tpu_custom_call.1} parent=1 // loop_header_branch
      %81 = sbr.rel (%p79) target = $region8
    $region5: #{tpu_custom_call.1} parent=1 // loop_body
      %s83 = ssub.s32 %s78, 1
      %s84 = ssub.s32 %s78, 2
      %s85 = sadd.s32 %s78, 1
      %s86 = ssub.s32 %s78, %s85
      %p87 = scmp.eq.s32.totalorder %s86, 0
      %s89 = sadd.s32 %s88, 1
      %s90 = scalar_select %p87, %s88, %s89
      %p93 = pneg %p87
      %p94 = scmp.eq.s32.totalorder %s78, 1
      %p95 = por %p93, %p94
      %p96 = scmp.ne.s32.totalorder %s88, %s91
      %p97 = scmp.eq.s32.totalorder %s78, 0
      %p98 = por %p96, %p97
      %p99 = scmp.ne.s32.totalorder %s88, %s91
      %p100 = scmp.eq.s32.totalorder %s83, 1
      %p101 = por %p99, %p100
      %p102 = scmp.ne.s32.totalorder %s91, %s92
      %p103 = scmp.eq.s32.totalorder %s83, 0
      %p104 = por %p102, %p103
      %p105 = scmp.ne.s32.totalorder %s91, %s92
      %p106 = scmp.eq.s32.totalorder %s84, 1
      %p107 = por %p105, %p106
      %p109 = scmp.ne.s32.totalorder %s92, %s108
      %p110 = scmp.eq.s32.totalorder %s84, 0
      %p111 = por %p109, %p110
      %s112 = ssub.s32 %s78, %s85
      %p113 = scmp.eq.s32.totalorder %s112, 0
      %s115 = sadd.s32 %s114, 1
      %s116 = scalar_select %p113, %s114, %s115
      %p119 = pneg %p113
      %p120 = scmp.eq.s32.totalorder %s78, 1
      %p121 = por %p119, %p120
      %p122 = scmp.ne.s32.totalorder %s114, %s117
      %p123 = scmp.eq.s32.totalorder %s78, 0
      %p124 = por %p122, %p123
      %p125 = scmp.ne.s32.totalorder %s114, %s117
      %p126 = scmp.eq.s32.totalorder %s83, 1
      %p127 = por %p125, %p126
      %p128 = scmp.ne.s32.totalorder %s117, %s118
      %p129 = scmp.eq.s32.totalorder %s83, 0
      %p130 = por %p128, %p129
      %p131 = scmp.ne.s32.totalorder %s117, %s118
      %p132 = scmp.eq.s32.totalorder %s84, 1
      %p133 = por %p131, %p132
      %p135 = scmp.ne.s32.totalorder %s118, %s134
      %p136 = scmp.eq.s32.totalorder %s84, 0
      %p137 = por %p135, %p136
      %s139 = sadd.s32 %s138, 1
      %p142 = scmp.eq.s32.totalorder %s78, 1
      %p143 = scmp.ne.s32.totalorder %s138, %s140
      %p144 = scmp.eq.s32.totalorder %s78, 0
      %p145 = por %p143, %p144
      %p146 = scmp.ne.s32.totalorder %s138, %s140
      %p147 = scmp.eq.s32.totalorder %s83, 1
      %p148 = por %p146, %p147
      %p149 = scmp.ne.s32.totalorder %s140, %s141
      %p150 = scmp.eq.s32.totalorder %s83, 0
      %p151 = por %p149, %p150
      %p152 = scmp.ne.s32.totalorder %s140, %s141
      %p153 = scmp.eq.s32.totalorder %s84, 1
      %p154 = por %p152, %p153
      %p156 = scmp.ne.s32.totalorder %s141, %s155
      %p157 = scmp.eq.s32.totalorder %s84, 0
      %p158 = por %p156, %p157
      %s160 = sadd.s32 %s159, 1
      %p163 = scmp.eq.s32.totalorder %s78, 1
      %p164 = scmp.ne.s32.totalorder %s159, %s161
      %p165 = scmp.eq.s32.totalorder %s78, 0
      %p166 = por %p164, %p165
      %p167 = scmp.ne.s32.totalorder %s159, %s161
      %p168 = scmp.eq.s32.totalorder %s83, 1
      %p169 = por %p167, %p168
      %p170 = scmp.ne.s32.totalorder %s161, %s162
      %p171 = scmp.eq.s32.totalorder %s83, 0
      %p172 = por %p170, %p171
      %p173 = scmp.ne.s32.totalorder %s161, %s162
      %p174 = scmp.eq.s32.totalorder %s84, 1
      %p175 = por %p173, %p174
      %p177 = scmp.ne.s32.totalorder %s162, %s176
      %p178 = scmp.eq.s32.totalorder %s84, 0
      %p179 = por %p177, %p178
      %s181 = sadd.s32 %s180, 1
      %p184 = scmp.eq.s32.totalorder %s78, 1
      %p185 = scmp.ne.s32.totalorder %s180, %s182
      %p186 = scmp.eq.s32.totalorder %s78, 0
      %p187 = por %p185, %p186
      %p188 = scmp.ne.s32.totalorder %s180, %s182
      %p189 = scmp.eq.s32.totalorder %s83, 1
      %p190 = por %p188, %p189
      %p191 = scmp.ne.s32.totalorder %s182, %s183
      %p192 = scmp.eq.s32.totalorder %s83, 0
      %p193 = por %p191, %p192
      %p194 = scmp.ne.s32.totalorder %s182, %s183
      %p195 = scmp.eq.s32.totalorder %s84, 1
      %p196 = por %p194, %p195
      %p198 = scmp.ne.s32.totalorder %s183, %s197
      %p199 = scmp.eq.s32.totalorder %s84, 0
      %p200 = por %p198, %p199
      %s202 = sadd.s32 %s201, 1
      %p205 = scmp.eq.s32.totalorder %s78, 1
      %p206 = scmp.ne.s32.totalorder %s201, %s203
      %p207 = scmp.eq.s32.totalorder %s78, 0
      %p208 = por %p206, %p207
      %p209 = scmp.ne.s32.totalorder %s201, %s203
      %p210 = scmp.eq.s32.totalorder %s83, 1
      %p211 = por %p209, %p210
      %p212 = scmp.ne.s32.totalorder %s203, %s204
      %p213 = scmp.eq.s32.totalorder %s83, 0
      %p214 = por %p212, %p213
      %p215 = scmp.ne.s32.totalorder %s203, %s204
      %p216 = scmp.eq.s32.totalorder %s84, 1
      %p217 = por %p215, %p216
      %p219 = scmp.ne.s32.totalorder %s204, %s218
      %p220 = scmp.eq.s32.totalorder %s84, 0
      %p221 = por %p219, %p220
      %s223 = sadd.s32 %s222, 1
      %p226 = scmp.eq.s32.totalorder %s78, 1
      %p227 = scmp.ne.s32.totalorder %s222, %s224
      %p228 = scmp.eq.s32.totalorder %s78, 0
      %p229 = por %p227, %p228
      %p230 = scmp.ne.s32.totalorder %s222, %s224
      %p231 = scmp.eq.s32.totalorder %s83, 1
      %p232 = por %p230, %p231
      %p233 = scmp.ne.s32.totalorder %s224, %s225
      %p234 = scmp.eq.s32.totalorder %s83, 0
      %p235 = por %p233, %p234
      %p236 = scmp.ne.s32.totalorder %s224, %s225
      %p237 = scmp.eq.s32.totalorder %s84, 1
      %p238 = por %p236, %p237
      %p240 = scmp.ne.s32.totalorder %s225, %s239
      %p241 = scmp.eq.s32.totalorder %s84, 0
      %p242 = por %p240, %p241
      %s244 = sadd.s32 %s243, 1
      %p247 = scmp.eq.s32.totalorder %s78, 1
      %p248 = scmp.ne.s32.totalorder %s243, %s245
      %p249 = scmp.eq.s32.totalorder %s78, 0
      %p250 = por %p248, %p249
      %p251 = scmp.ne.s32.totalorder %s243, %s245
      %p252 = scmp.eq.s32.totalorder %s83, 1
      %p253 = por %p251, %p252
      %p254 = scmp.ne.s32.totalorder %s245, %s246
      %p255 = scmp.eq.s32.totalorder %s83, 0
      %p256 = por %p254, %p255
      %p257 = scmp.ne.s32.totalorder %s245, %s246
      %p258 = scmp.eq.s32.totalorder %s84, 1
      %p259 = por %p257, %p258
      %p261 = scmp.ne.s32.totalorder %s246, %s260
      %p262 = scmp.eq.s32.totalorder %s84, 0
      %p263 = por %p261, %p262
      %s265 = sadd.s32 %s264, 1
      %p268 = scmp.eq.s32.totalorder %s78, 1
      %p269 = scmp.ne.s32.totalorder %s264, %s266
      %p270 = scmp.eq.s32.totalorder %s78, 0
      %p271 = por %p269, %p270
      %p272 = scmp.ne.s32.totalorder %s264, %s266
      %p273 = scmp.eq.s32.totalorder %s83, 1
      %p274 = por %p272, %p273
      %p275 = scmp.ne.s32.totalorder %s266, %s267
      %p276 = scmp.eq.s32.totalorder %s83, 0
      %p277 = por %p275, %p276
      %p278 = scmp.ne.s32.totalorder %s266, %s267
      %p279 = scmp.eq.s32.totalorder %s84, 1
      %p280 = por %p278, %p279
      %p282 = scmp.ne.s32.totalorder %s267, %s281
      %p283 = scmp.eq.s32.totalorder %s84, 0
      %p284 = por %p282, %p283
      %s286 = sadd.s32 %s285, 1
      %p289 = scmp.eq.s32.totalorder %s78, 1
      %p290 = scmp.ne.s32.totalorder %s285, %s287
      %p291 = scmp.eq.s32.totalorder %s78, 0
      %p292 = por %p290, %p291
      %p293 = scmp.ne.s32.totalorder %s285, %s287
      %p294 = scmp.eq.s32.totalorder %s83, 1
      %p295 = por %p293, %p294
      %p296 = scmp.ne.s32.totalorder %s287, %s288
      %p297 = scmp.eq.s32.totalorder %s83, 0
      %p298 = por %p296, %p297
      %p299 = scmp.ne.s32.totalorder %s287, %s288
      %p300 = scmp.eq.s32.totalorder %s84, 1
      %p301 = por %p299, %p300
      %p303 = scmp.ne.s32.totalorder %s288, %s302
      %p304 = scmp.eq.s32.totalorder %s84, 0
      %p305 = por %p303, %p304
      %s307 = sadd.s32 %s306, 1
      %p310 = scmp.eq.s32.totalorder %s78, 1
      %p311 = scmp.ne.s32.totalorder %s306, %s308
      %p312 = scmp.eq.s32.totalorder %s78, 0
      %p313 = por %p311, %p312
      %p314 = scmp.ne.s32.totalorder %s306, %s308
      %p315 = scmp.eq.s32.totalorder %s83, 1
      %p316 = por %p314, %p315
      %p317 = scmp.ne.s32.totalorder %s308, %s309
      %p318 = scmp.eq.s32.totalorder %s83, 0
      %p319 = por %p317, %p318
      %p320 = scmp.ne.s32.totalorder %s308, %s309
      %p321 = scmp.eq.s32.totalorder %s84, 1
      %p322 = por %p320, %p321
      %p324 = scmp.ne.s32.totalorder %s309, %s323
      %p325 = scmp.eq.s32.totalorder %s84, 0
      %p326 = por %p324, %p325
      %s328 = sadd.s32 %s327, 1
      %p331 = scmp.eq.s32.totalorder %s78, 1
      %p332 = scmp.ne.s32.totalorder %s327, %s329
      %p333 = scmp.eq.s32.totalorder %s78, 0
      %p334 = por %p332, %p333
      %p335 = scmp.ne.s32.totalorder %s327, %s329
      %p336 = scmp.eq.s32.totalorder %s83, 1
      %p337 = por %p335, %p336
      %p338 = scmp.ne.s32.totalorder %s329, %s330
      %p339 = scmp.eq.s32.totalorder %s83, 0
      %p340 = por %p338, %p339
      %p341 = scmp.ne.s32.totalorder %s329, %s330
      %p342 = scmp.eq.s32.totalorder %s84, 1
      %p343 = por %p341, %p342
      %p345 = scmp.ne.s32.totalorder %s330, %s344
      %p346 = scmp.eq.s32.totalorder %s84, 0
      %p347 = por %p345, %p346
      %s349 = sadd.s32 %s348, 1
      %p352 = scmp.eq.s32.totalorder %s78, 1
      %p353 = scmp.ne.s32.totalorder %s348, %s350
      %p354 = scmp.eq.s32.totalorder %s78, 0
      %p355 = por %p353, %p354
      %p356 = scmp.ne.s32.totalorder %s348, %s350
      %p357 = scmp.eq.s32.totalorder %s83, 1
      %p358 = por %p356, %p357
      %p359 = scmp.ne.s32.totalorder %s350, %s351
      %p360 = scmp.eq.s32.totalorder %s83, 0
      %p361 = por %p359, %p360
      %p362 = scmp.ne.s32.totalorder %s350, %s351
      %p363 = scmp.eq.s32.totalorder %s84, 1
      %p364 = por %p362, %p363
      %p366 = scmp.ne.s32.totalorder %s351, %s365
      %p367 = scmp.eq.s32.totalorder %s84, 0
      %p368 = por %p366, %p367
      %s370 = sadd.s32 %s369, 1
      %p373 = scmp.eq.s32.totalorder %s78, 1
      %p374 = scmp.ne.s32.totalorder %s369, %s371
      %p375 = scmp.eq.s32.totalorder %s78, 0
      %p376 = por %p374, %p375
      %p377 = scmp.ne.s32.totalorder %s369, %s371
      %p378 = scmp.eq.s32.totalorder %s83, 1
      %p379 = por %p377, %p378
      %p380 = scmp.ne.s32.totalorder %s371, %s372
      %p381 = scmp.eq.s32.totalorder %s83, 0
      %p382 = por %p380, %p381
      %p383 = scmp.ne.s32.totalorder %s371, %s372
      %p384 = scmp.eq.s32.totalorder %s84, 1
      %p385 = por %p383, %p384
      %p387 = scmp.ne.s32.totalorder %s372, %s386
      %p388 = scmp.eq.s32.totalorder %s84, 0
      %p389 = por %p387, %p388
      %s391 = sadd.s32 %s390, 1
      %p394 = scmp.eq.s32.totalorder %s78, 1
      %p395 = scmp.ne.s32.totalorder %s390, %s392
      %p396 = scmp.eq.s32.totalorder %s78, 0
      %p397 = por %p395, %p396
      %p398 = scmp.ne.s32.totalorder %s390, %s392
      %p399 = scmp.eq.s32.totalorder %s83, 1
      %p400 = por %p398, %p399
      %p401 = scmp.ne.s32.totalorder %s392, %s393
      %p402 = scmp.eq.s32.totalorder %s83, 0
      %p403 = por %p401, %p402
      %p404 = scmp.ne.s32.totalorder %s392, %s393
      %p405 = scmp.eq.s32.totalorder %s84, 1
      %p406 = por %p404, %p405
      %p408 = scmp.ne.s32.totalorder %s393, %s407
      %p409 = scmp.eq.s32.totalorder %s84, 0
      %p410 = por %p408, %p409
      %s412 = sadd.s32 %s411, 1
      %p415 = scmp.eq.s32.totalorder %s78, 1
      %p416 = scmp.ne.s32.totalorder %s411, %s413
      %p417 = scmp.eq.s32.totalorder %s78, 0
      %p418 = por %p416, %p417
      %p419 = scmp.ne.s32.totalorder %s411, %s413
      %p420 = scmp.eq.s32.totalorder %s83, 1
      %p421 = por %p419, %p420
      %p422 = scmp.ne.s32.totalorder %s413, %s414
      %p423 = scmp.eq.s32.totalorder %s83, 0
      %p424 = por %p422, %p423
      %p425 = scmp.ne.s32.totalorder %s413, %s414
      %p426 = scmp.eq.s32.totalorder %s84, 1
      %p427 = por %p425, %p426
      %p429 = scmp.ne.s32.totalorder %s414, %s428
      %p430 = scmp.eq.s32.totalorder %s84, 0
      %p431 = por %p429, %p430
      %s433 = sadd.s32 %s432, 1
      %p436 = scmp.eq.s32.totalorder %s78, 1
      %p437 = scmp.ne.s32.totalorder %s432, %s434
      %p438 = scmp.eq.s32.totalorder %s78, 0
      %p439 = por %p437, %p438
      %p440 = scmp.ne.s32.totalorder %s432, %s434
      %p441 = scmp.eq.s32.totalorder %s83, 1
      %p442 = por %p440, %p441
      %p443 = scmp.ne.s32.totalorder %s434, %s435
      %p444 = scmp.eq.s32.totalorder %s83, 0
      %p445 = por %p443, %p444
      %p446 = scmp.ne.s32.totalorder %s434, %s435
      %p447 = scmp.eq.s32.totalorder %s84, 1
      %p448 = por %p446, %p447
      %p450 = scmp.ne.s32.totalorder %s435, %s449
      %p451 = scmp.eq.s32.totalorder %s84, 0
      %p452 = por %p450, %p451
      %s454 = sadd.s32 %s453, 1
      %p457 = scmp.eq.s32.totalorder %s78, 1
      %p458 = scmp.ne.s32.totalorder %s453, %s455
      %p459 = scmp.eq.s32.totalorder %s78, 0
      %p460 = por %p458, %p459
      %p461 = scmp.ne.s32.totalorder %s453, %s455
      %p462 = scmp.eq.s32.totalorder %s83, 1
      %p463 = por %p461, %p462
      %p464 = scmp.ne.s32.totalorder %s455, %s456
      %p465 = scmp.eq.s32.totalorder %s83, 0
      %p466 = por %p464, %p465
      %p467 = scmp.ne.s32.totalorder %s455, %s456
      %p468 = scmp.eq.s32.totalorder %s84, 1
      %p469 = por %p467, %p468
      %p471 = scmp.ne.s32.totalorder %s456, %s470
      %p472 = scmp.eq.s32.totalorder %s84, 0
      %p473 = por %p471, %p472
      %s475 = sadd.s32 %s474, 1
      %p478 = scmp.eq.s32.totalorder %s78, 1
      %p479 = scmp.ne.s32.totalorder %s474, %s476
      %p480 = scmp.eq.s32.totalorder %s78, 0
      %p481 = por %p479, %p480
      %p482 = scmp.ne.s32.totalorder %s474, %s476
      %p483 = scmp.eq.s32.totalorder %s83, 1
      %p484 = por %p482, %p483
      %p485 = scmp.ne.s32.totalorder %s476, %s477
      %p486 = scmp.eq.s32.totalorder %s83, 0
      %p487 = por %p485, %p486
      %p488 = scmp.ne.s32.totalorder %s476, %s477
      %p489 = scmp.eq.s32.totalorder %s84, 1
      %p490 = por %p488, %p489
      %p492 = scmp.ne.s32.totalorder %s477, %s491
      %p493 = scmp.eq.s32.totalorder %s84, 0
      %p494 = por %p492, %p493
      %s496 = sadd.s32 %s495, 1
      %p499 = scmp.eq.s32.totalorder %s78, 1
      %p500 = scmp.ne.s32.totalorder %s495, %s497
      %p501 = scmp.eq.s32.totalorder %s78, 0
      %p502 = por %p500, %p501
      %p503 = scmp.ne.s32.totalorder %s495, %s497
      %p504 = scmp.eq.s32.totalorder %s83, 1
      %p505 = por %p503, %p504
      %p506 = scmp.ne.s32.totalorder %s497, %s498
      %p507 = scmp.eq.s32.totalorder %s83, 0
      %p508 = por %p506, %p507
      %p509 = scmp.ne.s32.totalorder %s497, %s498
      %p510 = scmp.eq.s32.totalorder %s84, 1
      %p511 = por %p509, %p510
      %p513 = scmp.ne.s32.totalorder %s498, %s512
      %p514 = scmp.eq.s32.totalorder %s84, 0
      %p515 = por %p513, %p514
      %s517 = sadd.s32 %s516, 1
      %p520 = scmp.eq.s32.totalorder %s78, 1
      %p521 = scmp.ne.s32.totalorder %s516, %s518
      %p522 = scmp.eq.s32.totalorder %s78, 0
      %p523 = por %p521, %p522
      %p524 = scmp.ne.s32.totalorder %s516, %s518
      %p525 = scmp.eq.s32.totalorder %s83, 1
      %p526 = por %p524, %p525
      %p527 = scmp.ne.s32.totalorder %s518, %s519
      %p528 = scmp.eq.s32.totalorder %s83, 0
      %p529 = por %p527, %p528
      %p530 = scmp.ne.s32.totalorder %s518, %s519
      %p531 = scmp.eq.s32.totalorder %s84, 1
      %p532 = por %p530, %p531
      %p534 = scmp.ne.s32.totalorder %s519, %s533
      %p535 = scmp.eq.s32.totalorder %s84, 0
      %p536 = por %p534, %p535
      %s538 = sadd.s32 %s537, 1
      %p541 = scmp.eq.s32.totalorder %s78, 1
      %p542 = scmp.ne.s32.totalorder %s537, %s539
      %p543 = scmp.eq.s32.totalorder %s78, 0
      %p544 = por %p542, %p543
      %p545 = scmp.ne.s32.totalorder %s537, %s539
      %p546 = scmp.eq.s32.totalorder %s83, 1
      %p547 = por %p545, %p546
      %p548 = scmp.ne.s32.totalorder %s539, %s540
      %p549 = scmp.eq.s32.totalorder %s83, 0
      %p550 = por %p548, %p549
      %p551 = scmp.ne.s32.totalorder %s539, %s540
      %p552 = scmp.eq.s32.totalorder %s84, 1
      %p553 = por %p551, %p552
      %p555 = scmp.ne.s32.totalorder %s540, %s554
      %p556 = scmp.eq.s32.totalorder %s84, 0
      %p557 = por %p555, %p556
      %s559 = sadd.s32 %s558, 1
      %p562 = scmp.eq.s32.totalorder %s78, 1
      %p563 = scmp.ne.s32.totalorder %s558, %s560
      %p564 = scmp.eq.s32.totalorder %s78, 0
      %p565 = por %p563, %p564
      %p566 = scmp.ne.s32.totalorder %s558, %s560
      %p567 = scmp.eq.s32.totalorder %s83, 1
      %p568 = por %p566, %p567
      %p569 = scmp.ne.s32.totalorder %s560, %s561
      %p570 = scmp.eq.s32.totalorder %s83, 0
      %p571 = por %p569, %p570
      %p572 = scmp.ne.s32.totalorder %s560, %s561
      %p573 = scmp.eq.s32.totalorder %s84, 1
      %p574 = por %p572, %p573
      %p576 = scmp.ne.s32.totalorder %s561, %s575
      %p577 = scmp.eq.s32.totalorder %s84, 0
      %p578 = por %p576, %p577
      %s580 = sadd.s32 %s579, 1
      %p583 = scmp.eq.s32.totalorder %s78, 1
      %p584 = scmp.ne.s32.totalorder %s579, %s581
      %p585 = scmp.eq.s32.totalorder %s78, 0
      %p586 = por %p584, %p585
      %p587 = scmp.ne.s32.totalorder %s579, %s581
      %p588 = scmp.eq.s32.totalorder %s83, 1
      %p589 = por %p587, %p588
      %p590 = scmp.ne.s32.totalorder %s581, %s582
      %p591 = scmp.eq.s32.totalorder %s83, 0
      %p592 = por %p590, %p591
      %p593 = scmp.ne.s32.totalorder %s581, %s582
      %p594 = scmp.eq.s32.totalorder %s84, 1
      %p595 = por %p593, %p594
      %p597 = scmp.ne.s32.totalorder %s582, %s596
      %p598 = scmp.eq.s32.totalorder %s84, 0
      %p599 = por %p597, %p598
      %s601 = sadd.s32 %s600, 1
      %p604 = scmp.eq.s32.totalorder %s78, 1
      %p605 = scmp.ne.s32.totalorder %s600, %s602
      %p606 = scmp.eq.s32.totalorder %s78, 0
      %p607 = por %p605, %p606
      %p608 = scmp.ne.s32.totalorder %s600, %s602
      %p609 = scmp.eq.s32.totalorder %s83, 1
      %p610 = por %p608, %p609
      %p611 = scmp.ne.s32.totalorder %s602, %s603
      %p612 = scmp.eq.s32.totalorder %s83, 0
      %p613 = por %p611, %p612
      %p614 = scmp.ne.s32.totalorder %s602, %s603
      %p615 = scmp.eq.s32.totalorder %s84, 1
      %p616 = por %p614, %p615
      %p618 = scmp.ne.s32.totalorder %s603, %s617
      %p619 = scmp.eq.s32.totalorder %s84, 0
      %p620 = por %p618, %p619
      %s622 = sadd.s32 %s621, 1
      %p625 = scmp.eq.s32.totalorder %s78, 1
      %p626 = scmp.ne.s32.totalorder %s621, %s623
      %p627 = scmp.eq.s32.totalorder %s78, 0
      %p628 = por %p626, %p627
      %p629 = scmp.ne.s32.totalorder %s621, %s623
      %p630 = scmp.eq.s32.totalorder %s83, 1
      %p631 = por %p629, %p630
      %p632 = scmp.ne.s32.totalorder %s623, %s624
      %p633 = scmp.eq.s32.totalorder %s83, 0
      %p634 = por %p632, %p633
      %p635 = scmp.ne.s32.totalorder %s623, %s624
      %p636 = scmp.eq.s32.totalorder %s84, 1
      %p637 = por %p635, %p636
      %p639 = scmp.ne.s32.totalorder %s624, %s638
      %p640 = scmp.eq.s32.totalorder %s84, 0
      %p641 = por %p639, %p640
      %s643 = sadd.s32 %s642, 1
      %p646 = scmp.eq.s32.totalorder %s78, 1
      %p647 = scmp.ne.s32.totalorder %s642, %s644
      %p648 = scmp.eq.s32.totalorder %s78, 0
      %p649 = por %p647, %p648
      %p650 = scmp.ne.s32.totalorder %s642, %s644
      %p651 = scmp.eq.s32.totalorder %s83, 1
      %p652 = por %p650, %p651
      %p653 = scmp.ne.s32.totalorder %s644, %s645
      %p654 = scmp.eq.s32.totalorder %s83, 0
      %p655 = por %p653, %p654
      %p656 = scmp.ne.s32.totalorder %s644, %s645
      %p657 = scmp.eq.s32.totalorder %s84, 1
      %p658 = por %p656, %p657
      %p660 = scmp.ne.s32.totalorder %s645, %s659
      %p661 = scmp.eq.s32.totalorder %s84, 0
      %p662 = por %p660, %p661
      %s664 = sadd.s32 %s663, 1
      %p667 = scmp.eq.s32.totalorder %s78, 1
      %p668 = scmp.ne.s32.totalorder %s663, %s665
      %p669 = scmp.eq.s32.totalorder %s78, 0
      %p670 = por %p668, %p669
      %p671 = scmp.ne.s32.totalorder %s663, %s665
      %p672 = scmp.eq.s32.totalorder %s83, 1
      %p673 = por %p671, %p672
      %p674 = scmp.ne.s32.totalorder %s665, %s666
      %p675 = scmp.eq.s32.totalorder %s83, 0
      %p676 = por %p674, %p675
      %p677 = scmp.ne.s32.totalorder %s665, %s666
      %p678 = scmp.eq.s32.totalorder %s84, 1
      %p679 = por %p677, %p678
      %p681 = scmp.ne.s32.totalorder %s666, %s680
      %p682 = scmp.eq.s32.totalorder %s84, 0
      %p683 = por %p681, %p682
      %s685 = sadd.s32 %s684, 1
      %p688 = scmp.eq.s32.totalorder %s78, 1
      %p689 = scmp.ne.s32.totalorder %s684, %s686
      %p690 = scmp.eq.s32.totalorder %s78, 0
      %p691 = por %p689, %p690
      %p692 = scmp.ne.s32.totalorder %s684, %s686
      %p693 = scmp.eq.s32.totalorder %s83, 1
      %p694 = por %p692, %p693
      %p695 = scmp.ne.s32.totalorder %s686, %s687
      %p696 = scmp.eq.s32.totalorder %s83, 0
      %p697 = por %p695, %p696
      %p698 = scmp.ne.s32.totalorder %s686, %s687
      %p699 = scmp.eq.s32.totalorder %s84, 1
      %p700 = por %p698, %p699
      %p702 = scmp.ne.s32.totalorder %s687, %s701
      %p703 = scmp.eq.s32.totalorder %s84, 0
      %p704 = por %p702, %p703
      %s706 = sadd.s32 %s705, 1
      %p709 = scmp.eq.s32.totalorder %s78, 1
      %p710 = scmp.ne.s32.totalorder %s705, %s707
      %p711 = scmp.eq.s32.totalorder %s78, 0
      %p712 = por %p710, %p711
      %p713 = scmp.ne.s32.totalorder %s705, %s707
      %p714 = scmp.eq.s32.totalorder %s83, 1
      %p715 = por %p713, %p714
      %p716 = scmp.ne.s32.totalorder %s707, %s708
      %p717 = scmp.eq.s32.totalorder %s83, 0
      %p718 = por %p716, %p717
      %p719 = scmp.ne.s32.totalorder %s707, %s708
      %p720 = scmp.eq.s32.totalorder %s84, 1
      %p721 = por %p719, %p720
      %p723 = scmp.ne.s32.totalorder %s708, %s722
      %p724 = scmp.eq.s32.totalorder %s84, 0
      %p725 = por %p723, %p724
      %s726 = ssub.s32 %s78, %s85
      %p727 = scmp.eq.s32.totalorder %s726, 0
      %s729 = sadd.s32 %s728, 1
      %s730 = scalar_select %p727, %s728, %s729
      %p733 = pneg %p727
      %p734 = scmp.eq.s32.totalorder %s78, 1
      %p735 = por %p733, %p734
      %p736 = scmp.ne.s32.totalorder %s728, %s731
      %p737 = scmp.eq.s32.totalorder %s78, 0
      %p738 = por %p736, %p737
      %p739 = scmp.ne.s32.totalorder %s728, %s731
      %p740 = scmp.eq.s32.totalorder %s83, 1
      %p741 = por %p739, %p740
      %p742 = scmp.ne.s32.totalorder %s731, %s732
      %p743 = scmp.eq.s32.totalorder %s83, 0
      %p744 = por %p742, %p743
      %p745 = scmp.ne.s32.totalorder %s731, %s732
      %p746 = scmp.eq.s32.totalorder %s84, 1
      %p747 = por %p745, %p746
      %p749 = scmp.ne.s32.totalorder %s732, %s748
      %p750 = scmp.eq.s32.totalorder %s84, 0
      %p751 = por %p749, %p750
      %p752 = scmp.le.s32.totalorder 1, %s78
      %p753 = scmp.lt.s32.totalorder %s78, 3
      %p754 = pnand %p752, %p753
      %p755 = pneg %p754
      // Predicated region
      $region9: #{tpu_custom_call.1} parent=5 // pred_check
        _
      $region10: #{tpu_custom_call.1} parent=5 // pred_check_branch
        %757 = sbr.rel (%p754) target = $region12
      $region11: #{tpu_custom_call.1} parent=5 // pred_region
        %s758 = ssub.s32 %s78, 1
        // Predicated region
        $region13: #{tpu_custom_call.1} parent=11 // pred_check
          %p759 = pneg %p151
        $region14: #{tpu_custom_call.1} parent=11 // pred_check_branch
          %761 = sbr.rel (%p759) target = $region16
        $region15: #{tpu_custom_call.1} parent=11 // pred_region
          _
        $region16: #{tpu_custom_call.1} parent=11 // pred_fallthru
          _
        // Predicated region
        $region17: #{tpu_custom_call.1} parent=11 // pred_check
          %p762 = pneg %p172
        $region18: #{tpu_custom_call.1} parent=11 // pred_check_branch
          %764 = sbr.rel (%p762) target = $region20
        $region19: #{tpu_custom_call.1} parent=11 // pred_region
          _
        $region20: #{tpu_custom_call.1} parent=11 // pred_fallthru
          _
        // Predicated region
        $region21: #{tpu_custom_call.1} parent=11 // pred_check
          %p765 = pneg %p193
        $region22: #{tpu_custom_call.1} parent=11 // pred_check_branch
          %767 = sbr.rel (%p765) target = $region24
        $region23: #{tpu_custom_call.1} parent=11 // pred_region
          _
        $region24: #{tpu_custom_call.1} parent=11 // pred_fallthru
          _
        // Predicated region
        $region25: #{tpu_custom_call.1} parent=11 // pred_check
          %p768 = pneg %p214
        $region26: #{tpu_custom_call.1} parent=11 // pred_check_branch
          %770 = sbr.rel (%p768) target = $region28
        $region27: #{tpu_custom_call.1} parent=11 // pred_region
          _
        $region28: #{tpu_custom_call.1} parent=11 // pred_fallthru
          _
        // Predicated region
        $region29: #{tpu_custom_call.1} parent=11 // pred_check
          %p771 = pneg %p235
        $region30: #{tpu_custom_call.1} parent=11 // pred_check_branch
          %773 = sbr.rel (%p771) target = $region32
        $region31: #{tpu_custom_call.1} parent=11 // pred_region
          %775 = vsyncadd [#allocation4], 0
          %s776 = sshll.u32 %s13, 4
          %s777 = int_to_ptr.hbm [resolvable:$true] %s776
          %s778 = sshll.u32 [#allocation3], 4
          %s779 = int_to_ptr.vmem [resolvable:$true] %s778
          %784 = dma.hbm_to_vmem [thread:$0]  %s777, 256, %s779, [#allocation4], 64, 64, 4
        $region32: #{tpu_custom_call.1} parent=11 // pred_fallthru
          _
        // Predicated region
        $region33: #{tpu_custom_call.1} parent=11 // pred_check
          %p785 = pneg %p256
        $region34: #{tpu_custom_call.1} parent=11 // pred_check_branch
          %787 = sbr.rel (%p785) target = $region36
        $region35: #{tpu_custom_call.1} parent=11 // pred_region
          _
        $region36: #{tpu_custom_call.1} parent=11 // pred_fallthru
          _
        // Predicated region
        $region37: #{tpu_custom_call.1} parent=11 // pred_check
          %p788 = pneg %p277
        $region38: #{tpu_custom_call.1} parent=11 // pred_check_branch
          %790 = sbr.rel (%p788) target = $region40
        $region39: #{tpu_custom_call.1} parent=11 // pred_region
          %792 = vsyncadd [#allocation7], 0
          %s793 = sshll.u32 %s17, 4
          %s794 = int_to_ptr.hbm [resolvable:$true] %s793
          %s795 = sshll.u32 [#allocation6], 4
          %s796 = int_to_ptr.vmem [resolvable:$true] %s795
          %801 = dma.hbm_to_vmem [thread:$0]  %s794, 256, %s796, [#allocation7], 64, 64, 4
        $region40: #{tpu_custom_call.1} parent=11 // pred_fallthru
          _
        // Predicated region
        $region41: #{tpu_custom_call.1} parent=11 // pred_check
          %p802 = pneg %p298
        $region42: #{tpu_custom_call.1} parent=11 // pred_check_branch
          %804 = sbr.rel (%p802) target = $region44
        $region43: #{tpu_custom_call.1} parent=11 // pred_region
          _
        $region44: #{tpu_custom_call.1} parent=11 // pred_fallthru
          _
        // Predicated region
        $region45: #{tpu_custom_call.1} parent=11 // pred_check
          %p805 = pneg %p319
        $region46: #{tpu_custom_call.1} parent=11 // pred_check_branch
          %807 = sbr.rel (%p805) target = $region48
        $region47: #{tpu_custom_call.1} parent=11 // pred_region
          %809 = vsyncadd [#allocation7], 0
          %s810 = sshll.u32 %s21, 4
          %s811 = int_to_ptr.hbm [resolvable:$true] %s810
          %s812 = sshll.u32 [#allocation8], 4
          %s813 = int_to_ptr.vmem [resolvable:$true] %s812
          %818 = dma.hbm_to_vmem [thread:$0]  %s811, 256, %s813, [#allocation7], 64, 64, 4
        $region48: #{tpu_custom_call.1} parent=11 // pred_fallthru
          _
        // Predicated region
        $region49: #{tpu_custom_call.1} parent=11 // pred_check
          %p819 = pneg %p340
        $region50: #{tpu_custom_call.1} parent=11 // pred_check_branch
          %821 = sbr.rel (%p819) target = $region52
        $region51: #{tpu_custom_call.1} parent=11 // pred_region
          _
        $region52: #{tpu_custom_call.1} parent=11 // pred_fallthru
          _
        // Predicated region
        $region53: #{tpu_custom_call.1} parent=11 // pred_check
          %p822 = pneg %p361
        $region54: #{tpu_custom_call.1} parent=11 // pred_check_branch
          %824 = sbr.rel (%p822) target = $region56
        $region55: #{tpu_custom_call.1} parent=11 // pred_region
          _
        $region56: #{tpu_custom_call.1} parent=11 // pred_fallthru
          _
        // Predicated region
        $region57: #{tpu_custom_call.1} parent=11 // pred_check
          %p825 = pneg %p382
        $region58: #{tpu_custom_call.1} parent=11 // pred_check_branch
          %827 = sbr.rel (%p825) target = $region60
        $region59: #{tpu_custom_call.1} parent=11 // pred_region
          _
        $region60: #{tpu_custom_call.1} parent=11 // pred_fallthru
          _
        // Predicated region
        $region61: #{tpu_custom_call.1} parent=11 // pred_check
          %p828 = pneg %p403
        $region62: #{tpu_custom_call.1} parent=11 // pred_check_branch
          %830 = sbr.rel (%p828) target = $region64
        $region63: #{tpu_custom_call.1} parent=11 // pred_region
          %832 = vsyncadd [#allocation10], 0
          %s833 = sshll.u32 %s29, 4
          %s834 = int_to_ptr.hbm [resolvable:$true] %s833
          %s835 = sshll.u32 [#allocation9], 4
          %s836 = int_to_ptr.vmem [resolvable:$true] %s835
          %841 = dma.hbm_to_vmem [thread:$0]  %s834, 256, %s836, [#allocation10], 64, 64, 4
        $region64: #{tpu_custom_call.1} parent=11 // pred_fallthru
          _
        // Predicated region
        $region65: #{tpu_custom_call.1} parent=11 // pred_check
          %p842 = pneg %p424
        $region66: #{tpu_custom_call.1} parent=11 // pred_check_branch
          %844 = sbr.rel (%p842) target = $region68
        $region67: #{tpu_custom_call.1} parent=11 // pred_region
          %846 = vsyncadd [#allocation10], 0
          %s848 = sshll.u32 %s31, 4
          %s849 = int_to_ptr.hbm [resolvable:$true] %s848
          %s850 = sshll.u32 [#allocation11], 4
          %s851 = int_to_ptr.vmem [resolvable:$true] %s850
          %853 = dma.hbm_to_vmem [thread:$0]  %s849, 16, %s851, [#allocation10]
        $region68: #{tpu_custom_call.1} parent=11 // pred_fallthru
          _
        // Predicated region
        $region69: #{tpu_custom_call.1} parent=11 // pred_check
          %p854 = pneg %p445
        $region70: #{tpu_custom_call.1} parent=11 // pred_check_branch
          %856 = sbr.rel (%p854) target = $region72
        $region71: #{tpu_custom_call.1} parent=11 // pred_region
          %858 = vsyncadd [#allocation13], 0
          %s859 = sshll.u32 %s33, 4
          %s860 = int_to_ptr.hbm [resolvable:$true] %s859
          %s861 = sshll.u32 [#allocation12], 4
          %s862 = int_to_ptr.vmem [resolvable:$true] %s861
          %867 = dma.hbm_to_vmem [thread:$0]  %s860, 256, %s862, [#allocation13], 64, 64, 4
        $region72: #{tpu_custom_call.1} parent=11 // pred_fallthru
          _
        // Predicated region
        $region73: #{tpu_custom_call.1} parent=11 // pred_check
          %p868 = pneg %p466
        $region74: #{tpu_custom_call.1} parent=11 // pred_check_branch
          %870 = sbr.rel (%p868) target = $region76
        $region75: #{tpu_custom_call.1} parent=11 // pred_region
          %872 = vsyncadd [#allocation13], 0
          %s874 = sshll.u32 %s35, 4
          %s875 = int_to_ptr.hbm [resolvable:$true] %s874
          %s876 = sshll.u32 [#allocation14], 4
          %s877 = int_to_ptr.vmem [resolvable:$true] %s876
          %879 = dma.hbm_to_vmem [thread:$0]  %s875, 16, %s877, [#allocation13]
        $region76: #{tpu_custom_call.1} parent=11 // pred_fallthru
          _
        // Predicated region
        $region77: #{tpu_custom_call.1} parent=11 // pred_check
          %p880 = pneg %p487
        $region78: #{tpu_custom_call.1} parent=11 // pred_check_branch
          %882 = sbr.rel (%p880) target = $region80
        $region79: #{tpu_custom_call.1} parent=11 // pred_region
          %884 = vsyncadd [#allocation16], 0
          %s885 = sshll.u32 %s37, 4
          %s886 = int_to_ptr.hbm [resolvable:$true] %s885
          %s887 = sshll.u32 [#allocation15], 4
          %s888 = int_to_ptr.vmem [resolvable:$true] %s887
          %893 = dma.hbm_to_vmem [thread:$0]  %s886, 256, %s888, [#allocation16], 64, 64, 4
        $region80: #{tpu_custom_call.1} parent=11 // pred_fallthru
          _
        // Predicated region
        $region81: #{tpu_custom_call.1} parent=11 // pred_check
          %p894 = pneg %p508
        $region82: #{tpu_custom_call.1} parent=11 // pred_check_branch
          %896 = sbr.rel (%p894) target = $region84
        $region83: #{tpu_custom_call.1} parent=11 // pred_region
          %898 = vsyncadd [#allocation16], 0
          %s900 = sshll.u32 %s39, 4
          %s901 = int_to_ptr.hbm [resolvable:$true] %s900
          %s902 = sshll.u32 [#allocation17], 4
          %s903 = int_to_ptr.vmem [resolvable:$true] %s902
          %905 = dma.hbm_to_vmem [thread:$0]  %s901, 16, %s903, [#allocation16]
        $region84: #{tpu_custom_call.1} parent=11 // pred_fallthru
          _
        // Predicated region
        $region85: #{tpu_custom_call.1} parent=11 // pred_check
          %p906 = pneg %p529
        $region86: #{tpu_custom_call.1} parent=11 // pred_check_branch
          %908 = sbr.rel (%p906) target = $region88
        $region87: #{tpu_custom_call.1} parent=11 // pred_region
          %910 = vsyncadd [#allocation19], 0
          %s911 = sshll.u32 %s41, 4
          %s912 = int_to_ptr.hbm [resolvable:$true] %s911
          %s913 = sshll.u32 [#allocation18], 4
          %s914 = int_to_ptr.vmem [resolvable:$true] %s913
          %919 = dma.hbm_to_vmem [thread:$0]  %s912, 256, %s914, [#allocation19], 64, 64, 4
        $region88: #{tpu_custom_call.1} parent=11 // pred_fallthru
          _
        // Predicated region
        $region89: #{tpu_custom_call.1} parent=11 // pred_check
          %p920 = pneg %p550
        $region90: #{tpu_custom_call.1} parent=11 // pred_check_branch
          %922 = sbr.rel (%p920) target = $region92
        $region91: #{tpu_custom_call.1} parent=11 // pred_region
          %924 = vsyncadd [#allocation19], 0
          %s926 = sshll.u32 %s43, 4
          %s927 = int_to_ptr.hbm [resolvable:$true] %s926
          %s928 = sshll.u32 [#allocation20], 4
          %s929 = int_to_ptr.vmem [resolvable:$true] %s928
          %931 = dma.hbm_to_vmem [thread:$0]  %s927, 16, %s929, [#allocation19]
        $region92: #{tpu_custom_call.1} parent=11 // pred_fallthru
          _
        // Predicated region
        $region93: #{tpu_custom_call.1} parent=11 // pred_check
          %p932 = pneg %p571
        $region94: #{tpu_custom_call.1} parent=11 // pred_check_branch
          %934 = sbr.rel (%p932) target = $region96
        $region95: #{tpu_custom_call.1} parent=11 // pred_region
          %936 = vsyncadd [#allocation22], 0
          %s938 = sshll.u32 %s45, 4
          %s939 = int_to_ptr.hbm [resolvable:$true] %s938
          %s940 = sshll.u32 [#allocation21], 4
          %s941 = int_to_ptr.vmem [resolvable:$true] %s940
          %943 = dma.hbm_to_vmem [thread:$0]  %s939, 16, %s941, [#allocation22]
        $region96: #{tpu_custom_call.1} parent=11 // pred_fallthru
          _
        // Predicated region
        $region97: #{tpu_custom_call.1} parent=11 // pred_check
          %p944 = pneg %p592
        $region98: #{tpu_custom_call.1} parent=11 // pred_check_branch
          %946 = sbr.rel (%p944) target = $region100
        $region99: #{tpu_custom_call.1} parent=11 // pred_region
          %948 = vsyncadd [#allocation22], 0
          %s950 = sshll.u32 %s47, 4
          %s951 = int_to_ptr.hbm [resolvable:$true] %s950
          %s952 = sshll.u32 [#allocation23], 4
          %s953 = int_to_ptr.vmem [resolvable:$true] %s952
          %955 = dma.hbm_to_vmem [thread:$0]  %s951, 16, %s953, [#allocation22]
        $region100: #{tpu_custom_call.1} parent=11 // pred_fallthru
          _
        // Predicated region
        $region101: #{tpu_custom_call.1} parent=11 // pred_check
          %p956 = pneg %p613
        $region102: #{tpu_custom_call.1} parent=11 // pred_check_branch
          %958 = sbr.rel (%p956) target = $region104
        $region103: #{tpu_custom_call.1} parent=11 // pred_region
          %960 = vsyncadd [#allocation25], 0
          %s961 = sshll.u32 %s49, 4
          %s962 = int_to_ptr.hbm [resolvable:$true] %s961
          %s963 = sshll.u32 [#allocation24], 4
          %s964 = int_to_ptr.vmem [resolvable:$true] %s963
          %969 = dma.hbm_to_vmem [thread:$0]  %s962, 256, %s964, [#allocation25], 64, 64, 4
        $region104: #{tpu_custom_call.1} parent=11 // pred_fallthru
          _
        // Predicated region
        $region105: #{tpu_custom_call.1} parent=11 // pred_check
          %p970 = pneg %p634
        $region106: #{tpu_custom_call.1} parent=11 // pred_check_branch
          %972 = sbr.rel (%p970) target = $region108
        $region107: #{tpu_custom_call.1} parent=11 // pred_region
          %974 = vsyncadd [#allocation25], 0
          %s976 = sshll.u32 %s51, 4
          %s977 = int_to_ptr.hbm [resolvable:$true] %s976
          %s978 = sshll.u32 [#allocation26], 4
          %s979 = int_to_ptr.vmem [resolvable:$true] %s978
          %981 = dma.hbm_to_vmem [thread:$0]  %s977, 16, %s979, [#allocation25]
        $region108: #{tpu_custom_call.1} parent=11 // pred_fallthru
          _
        // Predicated region
        $region109: #{tpu_custom_call.1} parent=11 // pred_check
          %p982 = pneg %p655
        $region110: #{tpu_custom_call.1} parent=11 // pred_check_branch
          %984 = sbr.rel (%p982) target = $region112
        $region111: #{tpu_custom_call.1} parent=11 // pred_region
          _
        $region112: #{tpu_custom_call.1} parent=11 // pred_fallthru
          _
        // Predicated region
        $region113: #{tpu_custom_call.1} parent=11 // pred_check
          %p985 = pneg %p676
        $region114: #{tpu_custom_call.1} parent=11 // pred_check_branch
          %987 = sbr.rel (%p985) target = $region116
        $region115: #{tpu_custom_call.1} parent=11 // pred_region
          _
        $region116: #{tpu_custom_call.1} parent=11 // pred_fallthru
          _
        // Predicated region
        $region117: #{tpu_custom_call.1} parent=11 // pred_check
          %p988 = pneg %p697
        $region118: #{tpu_custom_call.1} parent=11 // pred_check_branch
          %990 = sbr.rel (%p988) target = $region120
        $region119: #{tpu_custom_call.1} parent=11 // pred_region
          _
        $region120: #{tpu_custom_call.1} parent=11 // pred_fallthru
          _
        // Predicated region
        $region121: #{tpu_custom_call.1} parent=11 // pred_check
          %p991 = pneg %p718
        $region122: #{tpu_custom_call.1} parent=11 // pred_check_branch
          %993 = sbr.rel (%p991) target = $region124
        $region123: #{tpu_custom_call.1} parent=11 // pred_region
          _
        $region124: #{tpu_custom_call.1} parent=11 // pred_fallthru
          _
      $region12: #{tpu_custom_call.1} parent=5 // pred_fallthru
        _
      %p994 = scmp.lt.s32.totalorder %s78, 2
      // Predicated region
      $region125: #{tpu_custom_call.1} parent=5 // pred_check
        %p995 = pneg %p994
      $region126: #{tpu_custom_call.1} parent=5 // pred_check_branch
        %997 = sbr.rel (%p995) target = $region128
      $region127: #{tpu_custom_call.1} parent=5 // pred_region
        // Predicated region
        $region129: #{tpu_custom_call.1} parent=127 // pred_check
          %p998 = pneg %p98
        $region130: #{tpu_custom_call.1} parent=127 // pred_check_branch
          %1000 = sbr.rel (%p998) target = $region132
        $region131: #{tpu_custom_call.1} parent=127 // pred_region
          %p1001 = scmp.lt.s32.totalorder %s78, 1
          %s1002 = scalar_select %p1001, %s78, 1
          %s1003 = smul.addr %s1002, 8
          %s1004 = scalar_lea.vmem %s1, %s1003
        $region132: #{tpu_custom_call.1} parent=127 // pred_fallthru
          _
        // Predicated region
        $region133: #{tpu_custom_call.1} parent=127 // pred_check
          %p1005 = pneg %p124
        $region134: #{tpu_custom_call.1} parent=127 // pred_check_branch
          %1007 = sbr.rel (%p1005) target = $region136
        $region135: #{tpu_custom_call.1} parent=127 // pred_region
          %p1008 = scmp.lt.s32.totalorder %s78, 1
          %s1009 = scalar_select %p1008, %s78, 1
          %s1010 = smul.addr %s1009, 8
          %s1011 = scalar_lea.vmem %s3, %s1010
        $region136: #{tpu_custom_call.1} parent=127 // pred_fallthru
          _
      $region128: #{tpu_custom_call.1} parent=5 // pred_fallthru
        _
      %p1012 = scmp.le.s32.totalorder 1, %s78
      %p1013 = scmp.lt.s32.totalorder %s78, 3
      %p1014 = pnand %p1012, %p1013
      %p1015 = pneg %p1014
      // Predicated region
      $region137: #{tpu_custom_call.1} parent=5 // pred_check
        _
      $region138: #{tpu_custom_call.1} parent=5 // pred_check_branch
        %1017 = sbr.rel (%p1014) target = $region140
      $region139: #{tpu_custom_call.1} parent=5 // pred_region
        %s1018 = ssub.s32 %s78, 1
        // Predicated region
        $region141: #{tpu_custom_call.1} parent=139 // pred_check
          %p1019 = pneg %p235
        $region142: #{tpu_custom_call.1} parent=139 // pred_check_branch
          %1021 = sbr.rel (%p1019) target = $region144
        $region143: #{tpu_custom_call.1} parent=139 // pred_region
          %1023 = dma.done [#allocation4], 256
        $region144: #{tpu_custom_call.1} parent=139 // pred_fallthru
          _
        // Predicated region
        $region145: #{tpu_custom_call.1} parent=139 // pred_check
          %p1024 = pneg %p277
        $region146: #{tpu_custom_call.1} parent=139 // pred_check_branch
          %1026 = sbr.rel (%p1024) target = $region148
        $region147: #{tpu_custom_call.1} parent=139 // pred_region
          %1028 = dma.done [#allocation7], 256
        $region148: #{tpu_custom_call.1} parent=139 // pred_fallthru
          _
        // Predicated region
        $region149: #{tpu_custom_call.1} parent=139 // pred_check
          %p1029 = pneg %p319
        $region150: #{tpu_custom_call.1} parent=139 // pred_check_branch
          %1031 = sbr.rel (%p1029) target = $region152
        $region151: #{tpu_custom_call.1} parent=139 // pred_region
          %1033 = dma.done [#allocation7], 256
        $region152: #{tpu_custom_call.1} parent=139 // pred_fallthru
          _
        // Predicated region
        $region153: #{tpu_custom_call.1} parent=139 // pred_check
          %p1034 = pneg %p403
        $region154: #{tpu_custom_call.1} parent=139 // pred_check_branch
          %1036 = sbr.rel (%p1034) target = $region156
        $region155: #{tpu_custom_call.1} parent=139 // pred_region
          %1038 = dma.done [#allocation10], 256
        $region156: #{tpu_custom_call.1} parent=139 // pred_fallthru
          _
        // Predicated region
        $region157: #{tpu_custom_call.1} parent=139 // pred_check
          %p1039 = pneg %p424
        $region158: #{tpu_custom_call.1} parent=139 // pred_check_branch
          %1041 = sbr.rel (%p1039) target = $region160
        $region159: #{tpu_custom_call.1} parent=139 // pred_region
          %1043 = dma.done [#allocation10], 16
        $region160: #{tpu_custom_call.1} parent=139 // pred_fallthru
          _
        // Predicated region
        $region161: #{tpu_custom_call.1} parent=139 // pred_check
          %p1044 = pneg %p445
        $region162: #{tpu_custom_call.1} parent=139 // pred_check_branch
          %1046 = sbr.rel (%p1044) target = $region164
        $region163: #{tpu_custom_call.1} parent=139 // pred_region
          %1048 = dma.done [#allocation13], 256
        $region164: #{tpu_custom_call.1} parent=139 // pred_fallthru
          _
        // Predicated region
        $region165: #{tpu_custom_call.1} parent=139 // pred_check
          %p1049 = pneg %p466
        $region166: #{tpu_custom_call.1} parent=139 // pred_check_branch
          %1051 = sbr.rel (%p1049) target = $region168
        $region167: #{tpu_custom_call.1} parent=139 // pred_region
          %1053 = dma.done [#allocation13], 16
        $region168: #{tpu_custom_call.1} parent=139 // pred_fallthru
          _
        // Predicated region
        $region169: #{tpu_custom_call.1} parent=139 // pred_check
          %p1054 = pneg %p487
        $region170: #{tpu_custom_call.1} parent=139 // pred_check_branch
          %1056 = sbr.rel (%p1054) target = $region172
        $region171: #{tpu_custom_call.1} parent=139 // pred_region
          %1058 = dma.done [#allocation16], 256
        $region172: #{tpu_custom_call.1} parent=139 // pred_fallthru
          _
        // Predicated region
        $region173: #{tpu_custom_call.1} parent=139 // pred_check
          %p1059 = pneg %p508
        $region174: #{tpu_custom_call.1} parent=139 // pred_check_branch
          %1061 = sbr.rel (%p1059) target = $region176
        $region175: #{tpu_custom_call.1} parent=139 // pred_region
          %1063 = dma.done [#allocation16], 16
        $region176: #{tpu_custom_call.1} parent=139 // pred_fallthru
          _
        // Predicated region
        $region177: #{tpu_custom_call.1} parent=139 // pred_check
          %p1064 = pneg %p529
        $region178: #{tpu_custom_call.1} parent=139 // pred_check_branch
          %1066 = sbr.rel (%p1064) target = $region180
        $region179: #{tpu_custom_call.1} parent=139 // pred_region
          %1068 = dma.done [#allocation19], 256
        $region180: #{tpu_custom_call.1} parent=139 // pred_fallthru
          _
        // Predicated region
        $region181: #{tpu_custom_call.1} parent=139 // pred_check
          %p1069 = pneg %p550
        $region182: #{tpu_custom_call.1} parent=139 // pred_check_branch
          %1071 = sbr.rel (%p1069) target = $region184
        $region183: #{tpu_custom_call.1} parent=139 // pred_region
          %1073 = dma.done [#allocation19], 16
        $region184: #{tpu_custom_call.1} parent=139 // pred_fallthru
          _
        // Predicated region
        $region185: #{tpu_custom_call.1} parent=139 // pred_check
          %p1074 = pneg %p571
        $region186: #{tpu_custom_call.1} parent=139 // pred_check_branch
          %1076 = sbr.rel (%p1074) target = $region188
        $region187: #{tpu_custom_call.1} parent=139 // pred_region
          %1078 = dma.done [#allocation22], 16
        $region188: #{tpu_custom_call.1} parent=139 // pred_fallthru
          _
        // Predicated region
        $region189: #{tpu_custom_call.1} parent=139 // pred_check
          %p1079 = pneg %p592
        $region190: #{tpu_custom_call.1} parent=139 // pred_check_branch
          %1081 = sbr.rel (%p1079) target = $region192
        $region191: #{tpu_custom_call.1} parent=139 // pred_region
          %1083 = dma.done [#allocation22], 16
        $region192: #{tpu_custom_call.1} parent=139 // pred_fallthru
          _
        // Predicated region
        $region193: #{tpu_custom_call.1} parent=139 // pred_check
          %p1084 = pneg %p613
        $region194: #{tpu_custom_call.1} parent=139 // pred_check_branch
          %1086 = sbr.rel (%p1084) target = $region196
        $region195: #{tpu_custom_call.1} parent=139 // pred_region
          %1088 = dma.done [#allocation25], 256
        $region196: #{tpu_custom_call.1} parent=139 // pred_fallthru
          _
        // Predicated region
        $region197: #{tpu_custom_call.1} parent=139 // pred_check
          %p1089 = pneg %p634
        $region198: #{tpu_custom_call.1} parent=139 // pred_check_branch
          %1091 = sbr.rel (%p1089) target = $region200
        $region199: #{tpu_custom_call.1} parent=139 // pred_region
          %1093 = dma.done [#allocation25], 16
        $region200: #{tpu_custom_call.1} parent=139 // pred_fallthru
          _
        %p1094 = scmp.lt.s32.totalorder %s83, 1
        %s1095 = scalar_select %p1094, %s83, 1
        %s1096 = smul.addr %s1095, 8
        %s1097 = scalar_lea.vmem %s1, %s1096
        %p1098 = pneg %p104
        %p1099 = pneg %p101
        %p1100 = scmp.lt.s32.totalorder %s83, 1
        %s1101 = scalar_select %p1100, %s83, 1
        %s1102 = smul.addr %s1101, 8
        %s1103 = scalar_lea.vmem %s3, %s1102
        %p1104 = pneg %p130
        %p1105 = pneg %p127
        %p1106 = pneg %p151
        %p1107 = pneg %p148
        %p1108 = pneg %p172
        %p1109 = pneg %p169
        %p1110 = pneg %p193
        %p1111 = pneg %p190
        %p1112 = pneg %p214
        %p1113 = pneg %p211
        %p1114 = pneg %p235
        %p1115 = pneg %p232
        %p1116 = pneg %p256
        %p1117 = pneg %p253
        %p1118 = pneg %p277
        %p1119 = pneg %p274
        %p1120 = pneg %p298
        %p1121 = pneg %p295
        %p1122 = pneg %p319
        %p1123 = pneg %p316
        %p1124 = pneg %p340
        %p1125 = pneg %p337
        %p1126 = pneg %p361
        %p1127 = pneg %p358
        %p1128 = pneg %p382
        %p1129 = pneg %p379
        %p1130 = pneg %p403
        %p1131 = pneg %p400
        %p1132 = pneg %p424
        %p1133 = pneg %p421
        %p1134 = pneg %p445
        %p1135 = pneg %p442
        %p1136 = pneg %p466
        %p1137 = pneg %p463
        %p1138 = pneg %p487
        %p1139 = pneg %p484
        %p1140 = pneg %p508
        %p1141 = pneg %p505
        %p1142 = pneg %p529
        %p1143 = pneg %p526
        %p1144 = pneg %p550
        %p1145 = pneg %p547
        %p1146 = pneg %p571
        %p1147 = pneg %p568
        %p1148 = pneg %p592
        %p1149 = pneg %p589
        %p1150 = pneg %p613
        %p1151 = pneg %p610
        %p1152 = pneg %p634
        %p1153 = pneg %p631
        %p1154 = pneg %p655
        %p1155 = pneg %p652
        %p1156 = pneg %p676
        %p1157 = pneg %p673
        %p1158 = pneg %p697
        %p1159 = pneg %p694
        %p1160 = pneg %p718
        %p1161 = pneg %p715
        %p1162 = pneg %p744
        %p1163 = pneg %p741
        %s1164 = sand.u32 %s731, 1
        %s1165 = scalar_lea.sflag [#allocation5], %s1164
        %s1166 = sand.u32 %s731, 1
        %s1167 = smul.addr %s1166, 8
        %s1168 = scalar_lea.vmem [#allocation27], %s1167
        %p1169 = scmp.lt.s32.totalorder %s83, 1
        %s1170 = scalar_select %p1169, %s83, 1
        %s1171 = smul.addr %s1170, 8
        %s1172 = scalar_lea.vmem %s1, %s1171
        %p1173 = scmp.lt.s32.totalorder %s83, 1
        %s1174 = scalar_select %p1173, %s83, 1
        %s1175 = smul.addr %s1174, 8
        %s1176 = scalar_lea.vmem %s3, %s1175
        %v1178 = vld [vmem:[%s1172] sm:$0xff]
        %v1179 = vld [vmem:[%s1176] sm:$0xff]
        %v1180 = vld [vmem:[%s5] sm:$0x1]
        %v1181 = vld [vmem:[%s7] sm:$0x1]
        %vm1182 = vcmask 261120
        %v1183 = vsel %vm1182, %v1178, 0.0
        %1184 = vadd.xlane.f32.xlu0 %v1183
        %v1185 = vpop.xlane.xlu0 %1184
        %v1186 = vrcp.pop 32.0
        %v1187 = vmul.f32 32.0, %v1186
        %v1188 = vsub.f32 1.0, %v1187
        %v1189 = vmul.f32 %v1186, %v1188
        %v1190 = vadd.f32 %v1186, %v1189
        %vm1191 = vweird.f32 %v1186
        %v1192 = vsel %vm1191, %v1186, %v1190
        %v1193 = vmul.f32 %v1185, %v1192
        %v1194 = vsub.f32 %v1178, %v1193
        %v1195 = vmul.f32 %v1194, %v1194
        %v1196 = vsel %vm1182, %v1195, 0.0
        %1197 = vadd.xlane.f32.xlu0 %v1196
        %v1198 = vpop.xlane.xlu0 %1197
        %v1199 = vmul.f32 %v1198, %v1192
        %v1200 = vadd.f32 %v1199, 1e-05
        %v1201 = vrsqrt.pop %v1200
        %v1202 = vmul.f32 %v1201, %v1200
        %v1203 = vmul.f32 %v1202, %v1201
        %v1204 = vmul.f32 0.5, %v1203
        %v1205 = vsub.f32 1.5, %v1204
        %v1206 = vmul.f32 %v1201, %v1205
        %vm1207 = vweird.f32 %v1200
        %vm1208 = vweird.f32 %v1201
        %vm1209 = vmor %vm1207, %vm1208
        %v1210 = vsel %vm1209, %v1201, %v1206
        %v1211 = vmul.f32 %v1194, %v1210
        %v1213 = vperm.slane %v1180, 0
        %v1215 = vmul.f32 %v1211, %v1213
        %v1217 = vperm.slane %v1181, 0
        %v1219 = vadd.f32 %v1215, %v1217
        %v1220 = vpack.c.bf16 %v1219, %v1219
        %v1221 = vld [vmem:[%s9] sm:$0xf]
        %v1222 = vld [vmem:[%s9 + $0x4] sm:$0xf]
        %v1223 = vld [vmem:[%s9 + $0x8] sm:$0xf]
        %v1224 = vld [vmem:[%s9 + $0xc] sm:$0xf]
        %v1225 = vld [vmem:[%s11] sm:$0x1]
        %v1227 = vperm.slane %v1225, 0
        %v1233 = vunpack.c.l.b16 %v1221
        %v1234 = vunpack.c.l.b16 %v1222
        %v1235 = vunpack.c.l.b16 %v1223
        %v1236 = vunpack.c.l.b16 %v1224
        %v1237 = vpack.c.b16 %v1234, %v1233
        %v1238 = vpack.c.b16 %v1236, %v1235
        %v1242 = vsel %vm1182, %v1220, 0
        %1244 = vmatpush.bf16.msra.mxu0 0
        %1245 = vmatpush.bf16.msra.mxu0 0
        %1246 = vmatpush.bf16.msra.mxu0 0
        %1247 = vmatpush.bf16.msra.mxu0 0
        %1248 = vmatpush.bf16.msra.mxu0 0
        %1249 = vmatpush.bf16.msra.mxu0 0
        %1250 = vmatpush.bf16.msra.mxu0 %v1238
        %1251 = vmatpush.bf16.msra.mxu0 %v1237
        %1252 = vmatmul.bf16.gmra.mxu0 %v1242
        %v1253 = vpop.f32.mrf.mxu0
        %v1254 = vadd.f32 %v1227, %v1253
        %v1255 = vpop.f32.mrf.mxu0
        %1256 = vdwg.mxu0
        %v1257 = vld [vmem:[#allocation3] sm:$0xf]
        %v1258 = vld [vmem:[#allocation3 + $0x4] sm:$0xf]
        %v1259 = vld [vmem:[#allocation3 + $0x8] sm:$0xf]
        %v1260 = vld [vmem:[#allocation3 + $0xc] sm:$0xf]
        %v1261 = vld [vmem:[%s15] sm:$0x1]
        %v1263 = vperm.slane %v1261, 0
        %v1269 = vunpack.c.l.b16 %v1257
        %v1270 = vunpack.c.l.b16 %v1258
        %v1271 = vunpack.c.l.b16 %v1259
        %v1272 = vunpack.c.l.b16 %v1260
        %v1273 = vpack.c.b16 %v1270, %v1269
        %v1274 = vpack.c.b16 %v1272, %v1271
        %1277 = vmatpush.bf16.msra.mxu0 0
        %1278 = vmatpush.bf16.msra.mxu0 0
        %1279 = vmatpush.bf16.msra.mxu0 0
        %1280 = vmatpush.bf16.msra.mxu0 0
        %1281 = vmatpush.bf16.msra.mxu0 0
        %1282 = vmatpush.bf16.msra.mxu0 0
        %1283 = vmatpush.bf16.msra.mxu0 %v1274
        %1284 = vmatpush.bf16.msra.mxu0 %v1273
        %1285 = vmatmul.bf16.gmra.mxu0 %v1242
        %v1286 = vpop.f32.mrf.mxu0
        %v1287 = vadd.f32 %v1263, %v1286
        %v1288 = vpop.f32.mrf.mxu0
        %1289 = vdwg.mxu0
        %v1290 = vld [vmem:[#allocation6] sm:$0xf]
        %v1291 = vld [vmem:[#allocation6 + $0x4] sm:$0xf]
        %v1292 = vld [vmem:[#allocation6 + $0x8] sm:$0xf]
        %v1293 = vld [vmem:[#allocation6 + $0xc] sm:$0xf]
        %v1294 = vld [vmem:[%s19] sm:$0x1]
        %v1296 = vperm.slane %v1294, 0
        %v1302 = vunpack.c.l.b16 %v1290
        %v1303 = vunpack.c.l.b16 %v1291
        %v1304 = vunpack.c.l.b16 %v1292
        %v1305 = vunpack.c.l.b16 %v1293
        %v1306 = vpack.c.b16 %v1303, %v1302
        %v1307 = vpack.c.b16 %v1305, %v1304
        %1310 = vmatpush.bf16.msra.mxu0 0
        %1311 = vmatpush.bf16.msra.mxu0 0
        %1312 = vmatpush.bf16.msra.mxu0 0
        %1313 = vmatpush.bf16.msra.mxu0 0
        %1314 = vmatpush.bf16.msra.mxu0 0
        %1315 = vmatpush.bf16.msra.mxu0 0
        %1316 = vmatpush.bf16.msra.mxu0 %v1307
        %1317 = vmatpush.bf16.msra.mxu0 %v1306
        %1318 = vmatmul.bf16.gmra.mxu0 %v1242
        %v1319 = vpop.f32.mrf.mxu0
        %v1320 = vadd.f32 %v1296, %v1319
        %v1321 = vpop.f32.mrf.mxu0
        %1322 = vdwg.mxu0
        %v1323 = vlaneseq
        %v1324 = vshrl.u32 %v1323, 7
        %v1325 = vlaneseq
        %v1326 = vand.u32 %v1325, 127
        %vm1327 = vcmp.le.s32.totalorder %v1326, %v1324
        %v1328 = vsel %vm1327, 0.0, -1e+30
        %v1329 = vmul.f32 %v1254, 0.35355338
        %v1330 = vpack.c.bf16 %v1329, %v1329
        %v1331 = vpack.c.bf16 %v1287, %v1287
        %v1332 = vpack.c.bf16 %v1320, %v1320
        %vm1333 = vcmask 64512
        %v1335 = vsel %vm1333, %v1330, 0
        %v1338 = vsel %vm1333, %v1331, 0
        %1340 = vmatpush.bf16.xpose.msra.mxu0 0
        %1341 = vmatpush.bf16.xpose.msra.mxu0 0
        %1342 = vmatpush.bf16.xpose.msra.mxu0 0
        %1343 = vmatpush.bf16.xpose.msra.mxu0 0
        %1344 = vmatpush.bf16.xpose.msra.mxu0 0
        %1345 = vmatpush.bf16.xpose.msra.mxu0 0
        %1346 = vmatpush.bf16.xpose.msra.mxu0 0
        %1347 = vmatpush.bf16.xpose.msra.mxu0 %v1338
        %1348 = vmatmul.bf16.gmra.mxu0 %v1335
        %v1349 = vpop.f32.mrf.mxu0
        %v1350 = vadd.f32 %v1328, %v1349
        %v1351 = vpop.f32.mrf.mxu0
        %1352 = vdwg.mxu0
        %v1353 = vsel %vm1333, %v1350, -inf
        %1354 = vmax.xlane.f32.xlu0 %v1353
        %v1355 = vpop.xlane.xlu0 %1354
        %v1356 = vsub.f32 %v1350, %v1355
        %v1357 = vmul.f32 %v1356, 1.442695
        %v1358 = vpow.pop %v1357
        %v1359 = vsel %vm1333, %v1358, 0.0
        %1360 = vadd.xlane.f32.xlu0 %v1359
        %v1361 = vpop.xlane.xlu0 %1360
        %v1362 = vpack.c.bf16 %v1358, %v1358
        %v1364 = vsel %vm1333, %v1362, 0
        %vm1366 = vcmask 1043456
        %v1368 = vsel %vm1366, %v1332, 0
        %1370 = vmatpush.bf16.msra.mxu0 0
        %1371 = vmatpush.bf16.msra.mxu0 0
        %1372 = vmatpush.bf16.msra.mxu0 0
        %1373 = vmatpush.bf16.msra.mxu0 0
        %1374 = vmatpush.bf16.msra.mxu0 0
        %1375 = vmatpush.bf16.msra.mxu0 0
        %1376 = vmatpush.bf16.msra.mxu0 0
        %1377 = vmatpush.bf16.msra.mxu0 %v1368
        %1378 = vmatmul.bf16.gmra.mxu0 %v1364
        %v1379 = vpop.f32.mrf.mxu0
        %v1380 = vadd.f32 0.0, %v1379
        %v1381 = vpop.f32.mrf.mxu0
        %1382 = vdwg.mxu0
        %v1383 = vrcp.pop %v1361
        %v1384 = vmul.f32 %v1361, %v1383
        %v1385 = vsub.f32 1.0, %v1384
        %v1386 = vmul.f32 %v1383, %v1385
        %v1387 = vadd.f32 %v1383, %v1386
        %vm1388 = vweird.f32 %v1361
        %vm1389 = vweird.f32 %v1383
        %vm1390 = vmor %vm1388, %vm1389
        %v1391 = vsel %vm1390, %v1383, %v1387
        %v1392 = vand.u32 2147483647, %v1361
        %vm1393 = vcmp.eq.f32.partialorder %v1392, 8.507059e+37
        %v1394 = vand.u32 %v1361, 2147483648
        %v1395 = vor.u32 1.1754944e-38, %v1394
        %v1396 = vsel %vm1393, %v1395, %v1391
        %v1397 = vmul.f32 %v1380, %v1396
        %1398 = vst.msk [vmem:[#allocation2] sm:$0xff] %vm1333, %v1397
        %1400 = vrot.lane.b32.xlu0 %v1330, 120
        %v1401 = vpop.permute.xlu0 %1400
        %1403 = vrot.lane.b32.xlu0 %v1331, 120
        %v1404 = vpop.permute.xlu0 %1403
        %v1406 = vsel %vm1333, %v1401, 0
        %v1409 = vsel %vm1333, %v1404, 0
        %1411 = vmatpush.bf16.xpose.msra.mxu0 0
        %1412 = vmatpush.bf16.xpose.msra.mxu0 0
        %1413 = vmatpush.bf16.xpose.msra.mxu0 0
        %1414 = vmatpush.bf16.xpose.msra.mxu0 0
        %1415 = vmatpush.bf16.xpose.msra.mxu0 0
        %1416 = vmatpush.bf16.xpose.msra.mxu0 0
        %1417 = vmatpush.bf16.xpose.msra.mxu0 0
        %1418 = vmatpush.bf16.xpose.msra.mxu0 %v1409
        %1419 = vmatmul.bf16.gmra.mxu0 %v1406
        %v1420 = vpop.f32.mrf.mxu0
        %v1421 = vadd.f32 %v1328, %v1420
        %v1422 = vpop.f32.mrf.mxu0
        %1423 = vdwg.mxu0
        %v1424 = vsel %vm1333, %v1421, -inf
        %1425 = vmax.xlane.f32.xlu0 %v1424
        %v1426 = vpop.xlane.xlu0 %1425
        %v1427 = vsub.f32 %v1421, %v1426
        %v1428 = vmul.f32 %v1427, 1.442695
        %v1429 = vpow.pop %v1428
        %v1430 = vsel %vm1333, %v1429, 0.0
        %1431 = vadd.xlane.f32.xlu0 %v1430
        %v1432 = vpop.xlane.xlu0 %1431
        %v1433 = vpack.c.bf16 %v1429, %v1429
        %1435 = vrot.lane.b32.xlu0 %v1332, 120
        %v1436 = vpop.permute.xlu0 %1435
        %v1438 = vsel %vm1333, %v1433, 0
        %v1441 = vsel %vm1366, %v1436, 0
        %1443 = vmatpush.bf16.msra.mxu0 0
        %1444 = vmatpush.bf16.msra.mxu0 0
        %1445 = vmatpush.bf16.msra.mxu0 0
        %1446 = vmatpush.bf16.msra.mxu0 0
        %1447 = vmatpush.bf16.msra.mxu0 0
        %1448 = vmatpush.bf16.msra.mxu0 0
        %1449 = vmatpush.bf16.msra.mxu0 0
        %1450 = vmatpush.bf16.msra.mxu0 %v1441
        %1451 = vmatmul.bf16.gmra.mxu0 %v1438
        %v1452 = vpop.f32.mrf.mxu0
        %v1453 = vadd.f32 0.0, %v1452
        %v1454 = vpop.f32.mrf.mxu0
        %1455 = vdwg.mxu0
        %v1456 = vrcp.pop %v1432
        %v1457 = vmul.f32 %v1432, %v1456
        %v1458 = vsub.f32 1.0, %v1457
        %v1459 = vmul.f32 %v1456, %v1458
        %v1460 = vadd.f32 %v1456, %v1459
        %vm1461 = vweird.f32 %v1432
        %vm1462 = vweird.f32 %v1456
        %vm1463 = vmor %vm1461, %vm1462
        %v1464 = vsel %vm1463, %v1456, %v1460
        %v1465 = vand.u32 2147483647, %v1432
        %vm1466 = vcmp.eq.f32.partialorder %v1465, 8.507059e+37
        %v1467 = vand.u32 %v1432, 2147483648
        %v1468 = vor.u32 1.1754944e-38, %v1467
        %v1469 = vsel %vm1466, %v1468, %v1464
        %v1470 = vmul.f32 %v1453, %v1469
        %1472 = vrot.lane.b32.xlu0 %v1470, 8
        %v1473 = vpop.permute.xlu0 %1472
        %vm1475 = vcmask 130112
        %1476 = vst.msk [vmem:[#allocation2] sm:$0xff] %vm1475, %v1473
        %1477 = vrot.lane.b32.xlu0 %v1330, 112
        %v1478 = vpop.permute.xlu0 %1477
        %1479 = vrot.lane.b32.xlu0 %v1331, 112
        %v1480 = vpop.permute.xlu0 %1479
        %v1482 = vsel %vm1333, %v1478, 0
        %v1485 = vsel %vm1333, %v1480, 0
        %1487 = vmatpush.bf16.xpose.msra.mxu0 0
        %1488 = vmatpush.bf16.xpose.msra.mxu0 0
        %1489 = vmatpush.bf16.xpose.msra.mxu0 0
        %1490 = vmatpush.bf16.xpose.msra.mxu0 0
        %1491 = vmatpush.bf16.xpose.msra.mxu0 0
        %1492 = vmatpush.bf16.xpose.msra.mxu0 0
        %1493 = vmatpush.bf16.xpose.msra.mxu0 0
        %1494 = vmatpush.bf16.xpose.msra.mxu0 %v1485
        %1495 = vmatmul.bf16.gmra.mxu0 %v1482
        %v1496 = vpop.f32.mrf.mxu0
        %v1497 = vadd.f32 %v1328, %v1496
        %v1498 = vpop.f32.mrf.mxu0
        %1499 = vdwg.mxu0
        %v1500 = vsel %vm1333, %v1497, -inf
        %1501 = vmax.xlane.f32.xlu0 %v1500
        %v1502 = vpop.xlane.xlu0 %1501
        %v1503 = vsub.f32 %v1497, %v1502
        %v1504 = vmul.f32 %v1503, 1.442695
        %v1505 = vpow.pop %v1504
        %v1506 = vsel %vm1333, %v1505, 0.0
        %1507 = vadd.xlane.f32.xlu0 %v1506
        %v1508 = vpop.xlane.xlu0 %1507
        %v1509 = vpack.c.bf16 %v1505, %v1505
        %1510 = vrot.lane.b32.xlu0 %v1332, 112
        %v1511 = vpop.permute.xlu0 %1510
        %v1513 = vsel %vm1333, %v1509, 0
        %v1516 = vsel %vm1366, %v1511, 0
        %1518 = vmatpush.bf16.msra.mxu0 0
        %1519 = vmatpush.bf16.msra.mxu0 0
        %1520 = vmatpush.bf16.msra.mxu0 0
        %1521 = vmatpush.bf16.msra.mxu0 0
        %1522 = vmatpush.bf16.msra.mxu0 0
        %1523 = vmatpush.bf16.msra.mxu0 0
        %1524 = vmatpush.bf16.msra.mxu0 0
        %1525 = vmatpush.bf16.msra.mxu0 %v1516
        %1526 = vmatmul.bf16.gmra.mxu0 %v1513
        %v1527 = vpop.f32.mrf.mxu0
        %v1528 = vadd.f32 0.0, %v1527
        %v1529 = vpop.f32.mrf.mxu0
        %1530 = vdwg.mxu0
        %v1531 = vrcp.pop %v1508
        %v1532 = vmul.f32 %v1508, %v1531
        %v1533 = vsub.f32 1.0, %v1532
        %v1534 = vmul.f32 %v1531, %v1533
        %v1535 = vadd.f32 %v1531, %v1534
        %vm1536 = vweird.f32 %v1508
        %vm1537 = vweird.f32 %v1531
        %vm1538 = vmor %vm1536, %vm1537
        %v1539 = vsel %vm1538, %v1531, %v1535
        %v1540 = vand.u32 2147483647, %v1508
        %vm1541 = vcmp.eq.f32.partialorder %v1540, 8.507059e+37
        %v1542 = vand.u32 %v1508, 2147483648
        %v1543 = vor.u32 1.1754944e-38, %v1542
        %v1544 = vsel %vm1541, %v1543, %v1539
        %v1545 = vmul.f32 %v1528, %v1544
        %1547 = vrot.lane.b32.xlu0 %v1545, 16
        %v1548 = vpop.permute.xlu0 %1547
        %vm1550 = vcmask 195712
        %1551 = vst.msk [vmem:[#allocation2] sm:$0xff] %vm1550, %v1548
        %1552 = vrot.lane.b32.xlu0 %v1330, 104
        %v1553 = vpop.permute.xlu0 %1552
        %1554 = vrot.lane.b32.xlu0 %v1331, 104
        %v1555 = vpop.permute.xlu0 %1554
        %v1557 = vsel %vm1333, %v1553, 0
        %v1560 = vsel %vm1333, %v1555, 0
        %1562 = vmatpush.bf16.xpose.msra.mxu0 0
        %1563 = vmatpush.bf16.xpose.msra.mxu0 0
        %1564 = vmatpush.bf16.xpose.msra.mxu0 0
        %1565 = vmatpush.bf16.xpose.msra.mxu0 0
        %1566 = vmatpush.bf16.xpose.msra.mxu0 0
        %1567 = vmatpush.bf16.xpose.msra.mxu0 0
        %1568 = vmatpush.bf16.xpose.msra.mxu0 0
        %1569 = vmatpush.bf16.xpose.msra.mxu0 %v1560
        %1570 = vmatmul.bf16.gmra.mxu0 %v1557
        %v1571 = vpop.f32.mrf.mxu0
        %v1572 = vadd.f32 %v1328, %v1571
        %v1573 = vpop.f32.mrf.mxu0
        %1574 = vdwg.mxu0
        %v1575 = vsel %vm1333, %v1572, -inf
        %1576 = vmax.xlane.f32.xlu0 %v1575
        %v1577 = vpop.xlane.xlu0 %1576
        %v1578 = vsub.f32 %v1572, %v1577
        %v1579 = vmul.f32 %v1578, 1.442695
        %v1580 = vpow.pop %v1579
        %v1581 = vsel %vm1333, %v1580, 0.0
        %1582 = vadd.xlane.f32.xlu0 %v1581
        %v1583 = vpop.xlane.xlu0 %1582
        %v1584 = vpack.c.bf16 %v1580, %v1580
        %1585 = vrot.lane.b32.xlu0 %v1332, 104
        %v1586 = vpop.permute.xlu0 %1585
        %v1588 = vsel %vm1333, %v1584, 0
        %v1591 = vsel %vm1366, %v1586, 0
        %1593 = vmatpush.bf16.msra.mxu0 0
        %1594 = vmatpush.bf16.msra.mxu0 0
        %1595 = vmatpush.bf16.msra.mxu0 0
        %1596 = vmatpush.bf16.msra.mxu0 0
        %1597 = vmatpush.bf16.msra.mxu0 0
        %1598 = vmatpush.bf16.msra.mxu0 0
        %1599 = vmatpush.bf16.msra.mxu0 0
        %1600 = vmatpush.bf16.msra.mxu0 %v1591
        %1601 = vmatmul.bf16.gmra.mxu0 %v1588
        %v1602 = vpop.f32.mrf.mxu0
        %v1603 = vadd.f32 0.0, %v1602
        %v1604 = vpop.f32.mrf.mxu0
        %1605 = vdwg.mxu0
        %v1606 = vrcp.pop %v1583
        %v1607 = vmul.f32 %v1583, %v1606
        %v1608 = vsub.f32 1.0, %v1607
        %v1609 = vmul.f32 %v1606, %v1608
        %v1610 = vadd.f32 %v1606, %v1609
        %vm1611 = vweird.f32 %v1583
        %vm1612 = vweird.f32 %v1606
        %vm1613 = vmor %vm1611, %vm1612
        %v1614 = vsel %vm1613, %v1606, %v1610
        %v1615 = vand.u32 2147483647, %v1583
        %vm1616 = vcmp.eq.f32.partialorder %v1615, 8.507059e+37
        %v1617 = vand.u32 %v1583, 2147483648
        %v1618 = vor.u32 1.1754944e-38, %v1617
        %v1619 = vsel %vm1616, %v1618, %v1614
        %v1620 = vmul.f32 %v1603, %v1619
        %1622 = vrot.lane.b32.xlu0 %v1620, 24
        %v1623 = vpop.permute.xlu0 %1622
        %vm1625 = vcmask 261312
        %1626 = vst.msk [vmem:[#allocation2] sm:$0xff] %vm1625, %v1623
        %v1627 = vld [vmem:[#allocation2] sm:$0xff]
        %v1628 = vpack.c.bf16 %v1627, %v1627
        %v1629 = vld [vmem:[#allocation8] sm:$0xf]
        %v1630 = vld [vmem:[#allocation8 + $0x4] sm:$0xf]
        %v1631 = vld [vmem:[#allocation8 + $0x8] sm:$0xf]
        %v1632 = vld [vmem:[#allocation8 + $0xc] sm:$0xf]
        %v1633 = vld [vmem:[%s23] sm:$0x1]
        %v1635 = vperm.slane %v1633, 0
        %v1641 = vunpack.c.l.b16 %v1629
        %v1642 = vunpack.c.l.b16 %v1630
        %v1643 = vunpack.c.l.b16 %v1631
        %v1644 = vunpack.c.l.b16 %v1632
        %v1645 = vpack.c.b16 %v1642, %v1641
        %v1646 = vpack.c.b16 %v1644, %v1643
        %v1650 = vsel %vm1182, %v1628, 0
        %1652 = vmatpush.bf16.msra.mxu0 0
        %1653 = vmatpush.bf16.msra.mxu0 0
        %1654 = vmatpush.bf16.msra.mxu0 0
        %1655 = vmatpush.bf16.msra.mxu0 0
        %1656 = vmatpush.bf16.msra.mxu0 0
        %1657 = vmatpush.bf16.msra.mxu0 0
        %1658 = vmatpush.bf16.msra.mxu0 %v1646
        %1659 = vmatpush.bf16.msra.mxu0 %v1645
        %1660 = vmatmul.bf16.gmra.mxu0 %v1650
        %v1661 = vpop.f32.mrf.mxu0
        %v1662 = vadd.f32 %v1635, %v1661
        %v1663 = vpop.f32.mrf.mxu0
        %1664 = vdwg.mxu0
        %v1665 = vadd.f32 %v1178, %v1662
        %v1666 = vld [vmem:[%s25] sm:$0x1]
        %v1667 = vld [vmem:[%s27] sm:$0x1]
        %v1668 = vsel %vm1182, %v1665, 0.0
        %1669 = vadd.xlane.f32.xlu0 %v1668
        %v1670 = vpop.xlane.xlu0 %1669
        %v1671 = vmul.f32 %v1670, %v1192
        %v1672 = vsub.f32 %v1665, %v1671
        %v1673 = vmul.f32 %v1672, %v1672
        %v1674 = vsel %vm1182, %v1673, 0.0
        %1675 = vadd.xlane.f32.xlu0 %v1674
        %v1676 = vpop.xlane.xlu0 %1675
        %v1677 = vmul.f32 %v1676, %v1192
        %v1678 = vadd.f32 %v1677, 1e-05
        %v1679 = vrsqrt.pop %v1678
        %v1680 = vmul.f32 %v1679, %v1678
        %v1681 = vmul.f32 %v1680, %v1679
        %v1682 = vmul.f32 0.5, %v1681
        %v1683 = vsub.f32 1.5, %v1682
        %v1684 = vmul.f32 %v1679, %v1683
        %vm1685 = vweird.f32 %v1678
        %vm1686 = vweird.f32 %v1679
        %vm1687 = vmor %vm1685, %vm1686
        %v1688 = vsel %vm1687, %v1679, %v1684
        %v1689 = vmul.f32 %v1672, %v1688
        %v1691 = vperm.slane %v1666, 0
        %v1693 = vmul.f32 %v1689, %v1691
        %v1695 = vperm.slane %v1667, 0
        %v1697 = vadd.f32 %v1693, %v1695
        %v1698 = vpack.c.bf16 %v1697, %v1697
        %v1699 = vpack.c.bf16 %v1179, %v1179
        %v1700 = vld [vmem:[#allocation9] sm:$0xf]
        %v1701 = vld [vmem:[#allocation9 + $0x4] sm:$0xf]
        %v1702 = vld [vmem:[#allocation9 + $0x8] sm:$0xf]
        %v1703 = vld [vmem:[#allocation9 + $0xc] sm:$0xf]
        %v1704 = vld [vmem:[#allocation11] sm:$0x1]
        %v1706 = vperm.slane %v1704, 0
        %v1712 = vunpack.c.l.b16 %v1700
        %v1713 = vunpack.c.l.b16 %v1701
        %v1714 = vunpack.c.l.b16 %v1702
        %v1715 = vunpack.c.l.b16 %v1703
        %v1716 = vpack.c.b16 %v1713, %v1712
        %v1717 = vpack.c.b16 %v1715, %v1714
        %v1721 = vsel %vm1182, %v1698, 0
        %1723 = vmatpush.bf16.msra.mxu0 0
        %1724 = vmatpush.bf16.msra.mxu0 0
        %1725 = vmatpush.bf16.msra.mxu0 0
        %1726 = vmatpush.bf16.msra.mxu0 0
        %1727 = vmatpush.bf16.msra.mxu0 0
        %1728 = vmatpush.bf16.msra.mxu0 0
        %1729 = vmatpush.bf16.msra.mxu0 %v1717
        %1730 = vmatpush.bf16.msra.mxu0 %v1716
        %1731 = vmatmul.bf16.gmra.mxu0 %v1721
        %v1732 = vpop.f32.mrf.mxu0
        %v1733 = vadd.f32 %v1706, %v1732
        %v1734 = vpop.f32.mrf.mxu0
        %1735 = vdwg.mxu0
        %v1736 = vld [vmem:[#allocation12] sm:$0xf]
        %v1737 = vld [vmem:[#allocation12 + $0x4] sm:$0xf]
        %v1738 = vld [vmem:[#allocation12 + $0x8] sm:$0xf]
        %v1739 = vld [vmem:[#allocation12 + $0xc] sm:$0xf]
        %v1740 = vld [vmem:[#allocation14] sm:$0x1]
        %v1742 = vperm.slane %v1740, 0
        %v1748 = vunpack.c.l.b16 %v1736
        %v1749 = vunpack.c.l.b16 %v1737
        %v1750 = vunpack.c.l.b16 %v1738
        %v1751 = vunpack.c.l.b16 %v1739
        %v1752 = vpack.c.b16 %v1749, %v1748
        %v1753 = vpack.c.b16 %v1751, %v1750
        %v1757 = vsel %vm1182, %v1699, 0
        %1759 = vmatpush.bf16.msra.mxu0 0
        %1760 = vmatpush.bf16.msra.mxu0 0
        %1761 = vmatpush.bf16.msra.mxu0 0
        %1762 = vmatpush.bf16.msra.mxu0 0
        %1763 = vmatpush.bf16.msra.mxu0 0
        %1764 = vmatpush.bf16.msra.mxu0 0
        %1765 = vmatpush.bf16.msra.mxu0 %v1753
        %1766 = vmatpush.bf16.msra.mxu0 %v1752
        %1767 = vmatmul.bf16.gmra.mxu0 %v1757
        %v1768 = vpop.f32.mrf.mxu0
        %v1769 = vadd.f32 %v1742, %v1768
        %v1770 = vpop.f32.mrf.mxu0
        %1771 = vdwg.mxu0
        %v1772 = vld [vmem:[#allocation15] sm:$0xf]
        %v1773 = vld [vmem:[#allocation15 + $0x4] sm:$0xf]
        %v1774 = vld [vmem:[#allocation15 + $0x8] sm:$0xf]
        %v1775 = vld [vmem:[#allocation15 + $0xc] sm:$0xf]
        %v1776 = vld [vmem:[#allocation17] sm:$0x1]
        %v1778 = vperm.slane %v1776, 0
        %v1784 = vunpack.c.l.b16 %v1772
        %v1785 = vunpack.c.l.b16 %v1773
        %v1786 = vunpack.c.l.b16 %v1774
        %v1787 = vunpack.c.l.b16 %v1775
        %v1788 = vpack.c.b16 %v1785, %v1784
        %v1789 = vpack.c.b16 %v1787, %v1786
        %1792 = vmatpush.bf16.msra.mxu0 0
        %1793 = vmatpush.bf16.msra.mxu0 0
        %1794 = vmatpush.bf16.msra.mxu0 0
        %1795 = vmatpush.bf16.msra.mxu0 0
        %1796 = vmatpush.bf16.msra.mxu0 0
        %1797 = vmatpush.bf16.msra.mxu0 0
        %1798 = vmatpush.bf16.msra.mxu0 %v1789
        %1799 = vmatpush.bf16.msra.mxu0 %v1788
        %1800 = vmatmul.bf16.gmra.mxu0 %v1757
        %v1801 = vpop.f32.mrf.mxu0
        %v1802 = vadd.f32 %v1778, %v1801
        %v1803 = vpop.f32.mrf.mxu0
        %1804 = vdwg.mxu0
        %v1805 = vmul.f32 %v1733, 0.35355338
        %v1806 = vpack.c.bf16 %v1805, %v1805
        %v1807 = vpack.c.bf16 %v1769, %v1769
        %v1808 = vpack.c.bf16 %v1802, %v1802
        %v1810 = vsel %vm1333, %v1806, 0
        %v1813 = vsel %vm1333, %v1807, 0
        %1815 = vmatpush.bf16.xpose.msra.mxu0 0
        %1816 = vmatpush.bf16.xpose.msra.mxu0 0
        %1817 = vmatpush.bf16.xpose.msra.mxu0 0
        %1818 = vmatpush.bf16.xpose.msra.mxu0 0
        %1819 = vmatpush.bf16.xpose.msra.mxu0 0
        %1820 = vmatpush.bf16.xpose.msra.mxu0 0
        %1821 = vmatpush.bf16.xpose.msra.mxu0 0
        %1822 = vmatpush.bf16.xpose.msra.mxu0 %v1813
        %1823 = vmatmul.bf16.gmra.mxu0 %v1810
        %v1824 = vpop.f32.mrf.mxu0
        %v1825 = vadd.f32 0.0, %v1824
        %v1826 = vpop.f32.mrf.mxu0
        %1827 = vdwg.mxu0
        %v1828 = vsel %vm1333, %v1825, -inf
        %1829 = vmax.xlane.f32.xlu0 %v1828
        %v1830 = vpop.xlane.xlu0 %1829
        %v1831 = vsub.f32 %v1825, %v1830
        %v1832 = vmul.f32 %v1831, 1.442695
        %v1833 = vpow.pop %v1832
        %v1834 = vsel %vm1333, %v1833, 0.0
        %1835 = vadd.xlane.f32.xlu0 %v1834
        %v1836 = vpop.xlane.xlu0 %1835
        %v1837 = vpack.c.bf16 %v1833, %v1833
        %v1839 = vsel %vm1333, %v1837, 0
        %v1842 = vsel %vm1366, %v1808, 0
        %1844 = vmatpush.bf16.msra.mxu0 0
        %1845 = vmatpush.bf16.msra.mxu0 0
        %1846 = vmatpush.bf16.msra.mxu0 0
        %1847 = vmatpush.bf16.msra.mxu0 0
        %1848 = vmatpush.bf16.msra.mxu0 0
        %1849 = vmatpush.bf16.msra.mxu0 0
        %1850 = vmatpush.bf16.msra.mxu0 0
        %1851 = vmatpush.bf16.msra.mxu0 %v1842
        %1852 = vmatmul.bf16.gmra.mxu0 %v1839
        %v1853 = vpop.f32.mrf.mxu0
        %v1854 = vadd.f32 0.0, %v1853
        %v1855 = vpop.f32.mrf.mxu0
        %1856 = vdwg.mxu0
        %v1857 = vrcp.pop %v1836
        %v1858 = vmul.f32 %v1836, %v1857
        %v1859 = vsub.f32 1.0, %v1858
        %v1860 = vmul.f32 %v1857, %v1859
        %v1861 = vadd.f32 %v1857, %v1860
        %vm1862 = vweird.f32 %v1836
        %vm1863 = vweird.f32 %v1857
        %vm1864 = vmor %vm1862, %vm1863
        %v1865 = vsel %vm1864, %v1857, %v1861
        %v1866 = vand.u32 2147483647, %v1836
        %vm1867 = vcmp.eq.f32.partialorder %v1866, 8.507059e+37
        %v1868 = vand.u32 %v1836, 2147483648
        %v1869 = vor.u32 1.1754944e-38, %v1868
        %v1870 = vsel %vm1867, %v1869, %v1865
        %v1871 = vmul.f32 %v1854, %v1870
        %1872 = vst.msk [vmem:[#allocation2] sm:$0xff] %vm1333, %v1871
        %1874 = vrot.lane.b32.xlu0 %v1806, 120
        %v1875 = vpop.permute.xlu0 %1874
        %1877 = vrot.lane.b32.xlu0 %v1807, 120
        %v1878 = vpop.permute.xlu0 %1877
        %v1880 = vsel %vm1333, %v1875, 0
        %v1883 = vsel %vm1333, %v1878, 0
        %1885 = vmatpush.bf16.xpose.msra.mxu0 0
        %1886 = vmatpush.bf16.xpose.msra.mxu0 0
        %1887 = vmatpush.bf16.xpose.msra.mxu0 0
        %1888 = vmatpush.bf16.xpose.msra.mxu0 0
        %1889 = vmatpush.bf16.xpose.msra.mxu0 0
        %1890 = vmatpush.bf16.xpose.msra.mxu0 0
        %1891 = vmatpush.bf16.xpose.msra.mxu0 0
        %1892 = vmatpush.bf16.xpose.msra.mxu0 %v1883
        %1893 = vmatmul.bf16.gmra.mxu0 %v1880
        %v1894 = vpop.f32.mrf.mxu0
        %v1895 = vadd.f32 0.0, %v1894
        %v1896 = vpop.f32.mrf.mxu0
        %1897 = vdwg.mxu0
        %v1898 = vsel %vm1333, %v1895, -inf
        %1899 = vmax.xlane.f32.xlu0 %v1898
        %v1900 = vpop.xlane.xlu0 %1899
        %v1901 = vsub.f32 %v1895, %v1900
        %v1902 = vmul.f32 %v1901, 1.442695
        %v1903 = vpow.pop %v1902
        %v1904 = vsel %vm1333, %v1903, 0.0
        %1905 = vadd.xlane.f32.xlu0 %v1904
        %v1906 = vpop.xlane.xlu0 %1905
        %v1907 = vpack.c.bf16 %v1903, %v1903
        %1909 = vrot.lane.b32.xlu0 %v1808, 120
        %v1910 = vpop.permute.xlu0 %1909
        %v1912 = vsel %vm1333, %v1907, 0
        %v1915 = vsel %vm1366, %v1910, 0
        %1917 = vmatpush.bf16.msra.mxu0 0
        %1918 = vmatpush.bf16.msra.mxu0 0
        %1919 = vmatpush.bf16.msra.mxu0 0
        %1920 = vmatpush.bf16.msra.mxu0 0
        %1921 = vmatpush.bf16.msra.mxu0 0
        %1922 = vmatpush.bf16.msra.mxu0 0
        %1923 = vmatpush.bf16.msra.mxu0 0
        %1924 = vmatpush.bf16.msra.mxu0 %v1915
        %1925 = vmatmul.bf16.gmra.mxu0 %v1912
        %v1926 = vpop.f32.mrf.mxu0
        %v1927 = vadd.f32 0.0, %v1926
        %v1928 = vpop.f32.mrf.mxu0
        %1929 = vdwg.mxu0
        %v1930 = vrcp.pop %v1906
        %v1931 = vmul.f32 %v1906, %v1930
        %v1932 = vsub.f32 1.0, %v1931
        %v1933 = vmul.f32 %v1930, %v1932
        %v1934 = vadd.f32 %v1930, %v1933
        %vm1935 = vweird.f32 %v1906
        %vm1936 = vweird.f32 %v1930
        %vm1937 = vmor %vm1935, %vm1936
        %v1938 = vsel %vm1937, %v1930, %v1934
        %v1939 = vand.u32 2147483647, %v1906
        %vm1940 = vcmp.eq.f32.partialorder %v1939, 8.507059e+37
        %v1941 = vand.u32 %v1906, 2147483648
        %v1942 = vor.u32 1.1754944e-38, %v1941
        %v1943 = vsel %vm1940, %v1942, %v1938
        %v1944 = vmul.f32 %v1927, %v1943
        %1946 = vrot.lane.b32.xlu0 %v1944, 8
        %v1947 = vpop.permute.xlu0 %1946
        %1949 = vst.msk [vmem:[#allocation2] sm:$0xff] %vm1475, %v1947
        %1950 = vrot.lane.b32.xlu0 %v1806, 112
        %v1951 = vpop.permute.xlu0 %1950
        %1952 = vrot.lane.b32.xlu0 %v1807, 112
        %v1953 = vpop.permute.xlu0 %1952
        %v1955 = vsel %vm1333, %v1951, 0
        %v1958 = vsel %vm1333, %v1953, 0
        %1960 = vmatpush.bf16.xpose.msra.mxu0 0
        %1961 = vmatpush.bf16.xpose.msra.mxu0 0
        %1962 = vmatpush.bf16.xpose.msra.mxu0 0
        %1963 = vmatpush.bf16.xpose.msra.mxu0 0
        %1964 = vmatpush.bf16.xpose.msra.mxu0 0
        %1965 = vmatpush.bf16.xpose.msra.mxu0 0
        %1966 = vmatpush.bf16.xpose.msra.mxu0 0
        %1967 = vmatpush.bf16.xpose.msra.mxu0 %v1958
        %1968 = vmatmul.bf16.gmra.mxu0 %v1955
        %v1969 = vpop.f32.mrf.mxu0
        %v1970 = vadd.f32 0.0, %v1969
        %v1971 = vpop.f32.mrf.mxu0
        %1972 = vdwg.mxu0
        %v1973 = vsel %vm1333, %v1970, -inf
        %1974 = vmax.xlane.f32.xlu0 %v1973
        %v1975 = vpop.xlane.xlu0 %1974
        %v1976 = vsub.f32 %v1970, %v1975
        %v1977 = vmul.f32 %v1976, 1.442695
        %v1978 = vpow.pop %v1977
        %v1979 = vsel %vm1333, %v1978, 0.0
        %1980 = vadd.xlane.f32.xlu0 %v1979
        %v1981 = vpop.xlane.xlu0 %1980
        %v1982 = vpack.c.bf16 %v1978, %v1978
        %1983 = vrot.lane.b32.xlu0 %v1808, 112
        %v1984 = vpop.permute.xlu0 %1983
        %v1986 = vsel %vm1333, %v1982, 0
        %v1989 = vsel %vm1366, %v1984, 0
        %1991 = vmatpush.bf16.msra.mxu0 0
        %1992 = vmatpush.bf16.msra.mxu0 0
        %1993 = vmatpush.bf16.msra.mxu0 0
        %1994 = vmatpush.bf16.msra.mxu0 0
        %1995 = vmatpush.bf16.msra.mxu0 0
        %1996 = vmatpush.bf16.msra.mxu0 0
        %1997 = vmatpush.bf16.msra.mxu0 0
        %1998 = vmatpush.bf16.msra.mxu0 %v1989
        %1999 = vmatmul.bf16.gmra.mxu0 %v1986
        %v2000 = vpop.f32.mrf.mxu0
        %v2001 = vadd.f32 0.0, %v2000
        %v2002 = vpop.f32.mrf.mxu0
        %2003 = vdwg.mxu0
        %v2004 = vrcp.pop %v1981
        %v2005 = vmul.f32 %v1981, %v2004
        %v2006 = vsub.f32 1.0, %v2005
        %v2007 = vmul.f32 %v2004, %v2006
        %v2008 = vadd.f32 %v2004, %v2007
        %vm2009 = vweird.f32 %v1981
        %vm2010 = vweird.f32 %v2004
        %vm2011 = vmor %vm2009, %vm2010
        %v2012 = vsel %vm2011, %v2004, %v2008
        %v2013 = vand.u32 2147483647, %v1981
        %vm2014 = vcmp.eq.f32.partialorder %v2013, 8.507059e+37
        %v2015 = vand.u32 %v1981, 2147483648
        %v2016 = vor.u32 1.1754944e-38, %v2015
        %v2017 = vsel %vm2014, %v2016, %v2012
        %v2018 = vmul.f32 %v2001, %v2017
        %2020 = vrot.lane.b32.xlu0 %v2018, 16
        %v2021 = vpop.permute.xlu0 %2020
        %2023 = vst.msk [vmem:[#allocation2] sm:$0xff] %vm1550, %v2021
        %2024 = vrot.lane.b32.xlu0 %v1806, 104
        %v2025 = vpop.permute.xlu0 %2024
        %2026 = vrot.lane.b32.xlu0 %v1807, 104
        %v2027 = vpop.permute.xlu0 %2026
        %v2029 = vsel %vm1333, %v2025, 0
        %v2032 = vsel %vm1333, %v2027, 0
        %2034 = vmatpush.bf16.xpose.msra.mxu0 0
        %2035 = vmatpush.bf16.xpose.msra.mxu0 0
        %2036 = vmatpush.bf16.xpose.msra.mxu0 0
        %2037 = vmatpush.bf16.xpose.msra.mxu0 0
        %2038 = vmatpush.bf16.xpose.msra.mxu0 0
        %2039 = vmatpush.bf16.xpose.msra.mxu0 0
        %2040 = vmatpush.bf16.xpose.msra.mxu0 0
        %2041 = vmatpush.bf16.xpose.msra.mxu0 %v2032
        %2042 = vmatmul.bf16.gmra.mxu0 %v2029
        %v2043 = vpop.f32.mrf.mxu0
        %v2044 = vadd.f32 0.0, %v2043
        %v2045 = vpop.f32.mrf.mxu0
        %2046 = vdwg.mxu0
        %v2047 = vsel %vm1333, %v2044, -inf
        %2048 = vmax.xlane.f32.xlu0 %v2047
        %v2049 = vpop.xlane.xlu0 %2048
        %v2050 = vsub.f32 %v2044, %v2049
        %v2051 = vmul.f32 %v2050, 1.442695
        %v2052 = vpow.pop %v2051
        %v2053 = vsel %vm1333, %v2052, 0.0
        %2054 = vadd.xlane.f32.xlu0 %v2053
        %v2055 = vpop.xlane.xlu0 %2054
        %v2056 = vpack.c.bf16 %v2052, %v2052
        %2057 = vrot.lane.b32.xlu0 %v1808, 104
        %v2058 = vpop.permute.xlu0 %2057
        %v2060 = vsel %vm1333, %v2056, 0
        %v2063 = vsel %vm1366, %v2058, 0
        %2065 = vmatpush.bf16.msra.mxu0 0
        %2066 = vmatpush.bf16.msra.mxu0 0
        %2067 = vmatpush.bf16.msra.mxu0 0
        %2068 = vmatpush.bf16.msra.mxu0 0
        %2069 = vmatpush.bf16.msra.mxu0 0
        %2070 = vmatpush.bf16.msra.mxu0 0
        %2071 = vmatpush.bf16.msra.mxu0 0
        %2072 = vmatpush.bf16.msra.mxu0 %v2063
        %2073 = vmatmul.bf16.gmra.mxu0 %v2060
        %v2074 = vpop.f32.mrf.mxu0
        %v2075 = vadd.f32 0.0, %v2074
        %v2076 = vpop.f32.mrf.mxu0
        %2077 = vdwg.mxu0
        %v2078 = vrcp.pop %v2055
        %v2079 = vmul.f32 %v2055, %v2078
        %v2080 = vsub.f32 1.0, %v2079
        %v2081 = vmul.f32 %v2078, %v2080
        %v2082 = vadd.f32 %v2078, %v2081
        %vm2083 = vweird.f32 %v2055
        %vm2084 = vweird.f32 %v2078
        %vm2085 = vmor %vm2083, %vm2084
        %v2086 = vsel %vm2085, %v2078, %v2082
        %v2087 = vand.u32 2147483647, %v2055
        %vm2088 = vcmp.eq.f32.partialorder %v2087, 8.507059e+37
        %v2089 = vand.u32 %v2055, 2147483648
        %v2090 = vor.u32 1.1754944e-38, %v2089
        %v2091 = vsel %vm2088, %v2090, %v2086
        %v2092 = vmul.f32 %v2075, %v2091
        %2094 = vrot.lane.b32.xlu0 %v2092, 24
        %v2095 = vpop.permute.xlu0 %2094
        %2097 = vst.msk [vmem:[#allocation2] sm:$0xff] %vm1625, %v2095
        %v2098 = vld [vmem:[#allocation2] sm:$0xff]
        %v2099 = vpack.c.bf16 %v2098, %v2098
        %v2100 = vld [vmem:[#allocation18] sm:$0xf]
        %v2101 = vld [vmem:[#allocation18 + $0x4] sm:$0xf]
        %v2102 = vld [vmem:[#allocation18 + $0x8] sm:$0xf]
        %v2103 = vld [vmem:[#allocation18 + $0xc] sm:$0xf]
        %v2104 = vld [vmem:[#allocation20] sm:$0x1]
        %v2106 = vperm.slane %v2104, 0
        %v2112 = vunpack.c.l.b16 %v2100
        %v2113 = vunpack.c.l.b16 %v2101
        %v2114 = vunpack.c.l.b16 %v2102
        %v2115 = vunpack.c.l.b16 %v2103
        %v2116 = vpack.c.b16 %v2113, %v2112
        %v2117 = vpack.c.b16 %v2115, %v2114
        %v2121 = vsel %vm1182, %v2099, 0
        %2123 = vmatpush.bf16.msra.mxu0 0
        %2124 = vmatpush.bf16.msra.mxu0 0
        %2125 = vmatpush.bf16.msra.mxu0 0
        %2126 = vmatpush.bf16.msra.mxu0 0
        %2127 = vmatpush.bf16.msra.mxu0 0
        %2128 = vmatpush.bf16.msra.mxu0 0
        %2129 = vmatpush.bf16.msra.mxu0 %v2117
        %2130 = vmatpush.bf16.msra.mxu0 %v2116
        %2131 = vmatmul.bf16.gmra.mxu0 %v2121
        %v2132 = vpop.f32.mrf.mxu0
        %v2133 = vadd.f32 %v2106, %v2132
        %v2134 = vpop.f32.mrf.mxu0
        %2135 = vdwg.mxu0
        %v2136 = vadd.f32 %v1665, %v2133
        %v2137 = vld [vmem:[#allocation21] sm:$0x1]
        %v2138 = vld [vmem:[#allocation23] sm:$0x1]
        %v2139 = vsel %vm1182, %v2136, 0.0
        %2140 = vadd.xlane.f32.xlu0 %v2139
        %v2141 = vpop.xlane.xlu0 %2140
        %v2142 = vmul.f32 %v2141, %v1192
        %v2143 = vsub.f32 %v2136, %v2142
        %v2144 = vmul.f32 %v2143, %v2143
        %v2145 = vsel %vm1182, %v2144, 0.0
        %2146 = vadd.xlane.f32.xlu0 %v2145
        %v2147 = vpop.xlane.xlu0 %2146
        %v2148 = vmul.f32 %v2147, %v1192
        %v2149 = vadd.f32 %v2148, 1e-05
        %v2150 = vrsqrt.pop %v2149
        %v2151 = vmul.f32 %v2150, %v2149
        %v2152 = vmul.f32 %v2151, %v2150
        %v2153 = vmul.f32 0.5, %v2152
        %v2154 = vsub.f32 1.5, %v2153
        %v2155 = vmul.f32 %v2150, %v2154
        %vm2156 = vweird.f32 %v2149
        %vm2157 = vweird.f32 %v2150
        %vm2158 = vmor %vm2156, %vm2157
        %v2159 = vsel %vm2158, %v2150, %v2155
        %v2160 = vmul.f32 %v2143, %v2159
        %v2162 = vperm.slane %v2137, 0
        %v2164 = vmul.f32 %v2160, %v2162
        %v2166 = vperm.slane %v2138, 0
        %v2168 = vadd.f32 %v2164, %v2166
        %v2169 = vpack.c.bf16 %v2168, %v2168
        %v2170 = vld [vmem:[#allocation24] sm:$0xf]
        %v2171 = vld [vmem:[#allocation24 + $0x4] sm:$0xf]
        %v2172 = vld [vmem:[#allocation24 + $0x8] sm:$0xf]
        %v2173 = vld [vmem:[#allocation24 + $0xc] sm:$0xf]
        %v2174 = vld [vmem:[#allocation26] sm:$0x1]
        %v2176 = vperm.slane %v2174, 0
        %v2182 = vunpack.c.l.b16 %v2170
        %v2183 = vunpack.c.l.b16 %v2171
        %v2184 = vunpack.c.l.b16 %v2172
        %v2185 = vunpack.c.l.b16 %v2173
        %v2186 = vpack.c.b16 %v2183, %v2182
        %v2187 = vpack.c.b16 %v2185, %v2184
        %v2191 = vsel %vm1182, %v2169, 0
        %2193 = vmatpush.bf16.msra.mxu0 0
        %2194 = vmatpush.bf16.msra.mxu0 0
        %2195 = vmatpush.bf16.msra.mxu0 0
        %2196 = vmatpush.bf16.msra.mxu0 0
        %2197 = vmatpush.bf16.msra.mxu0 0
        %2198 = vmatpush.bf16.msra.mxu0 0
        %2199 = vmatpush.bf16.msra.mxu0 %v2187
        %2200 = vmatpush.bf16.msra.mxu0 %v2186
        %2201 = vmatmul.bf16.gmra.mxu0 %v2191
        %v2202 = vpop.f32.mrf.mxu0
        %v2203 = vadd.f32 %v2176, %v2202
        %v2204 = vpop.f32.mrf.mxu0
        %2205 = vdwg.mxu0
        %v2206 = vmul.f32 %v2203, %v2203
        %v2207 = vmul.f32 %v2203, %v2206
        %v2208 = vmul.f32 %v2207, 0.044715
        %v2209 = vadd.f32 %v2203, %v2208
        %v2210 = vmul.f32 %v2209, 0.7978846
        %v2211 = vtanh.pop %v2210
        %v2212 = vadd.f32 %v2211, 1.0
        %v2213 = vmul.f32 %v2212, 0.5
        %v2214 = vmul.f32 %v2203, %v2213
        %v2215 = vpack.c.bf16 %v2214, %v2214
        %v2216 = vld [vmem:[%s53] sm:$0xf]
        %v2217 = vld [vmem:[%s53 + $0x4] sm:$0xf]
        %v2218 = vld [vmem:[%s53 + $0x8] sm:$0xf]
        %v2219 = vld [vmem:[%s53 + $0xc] sm:$0xf]
        %v2220 = vld [vmem:[%s53 + $0x10] sm:$0xf]
        %v2221 = vld [vmem:[%s53 + $0x14] sm:$0xf]
        %v2222 = vld [vmem:[%s53 + $0x18] sm:$0xf]
        %v2223 = vld [vmem:[%s53 + $0x1c] sm:$0xf]
        %v2224 = vld [vmem:[%s55] sm:$0x1]
        %v2226 = vperm.slane %v2224, 0
        %v2236 = vunpack.c.l.b16 %v2216
        %v2237 = vunpack.c.l.b16 %v2217
        %v2238 = vunpack.c.l.b16 %v2218
        %v2239 = vunpack.c.l.b16 %v2219
        %v2240 = vunpack.c.l.b16 %v2220
        %v2241 = vunpack.c.l.b16 %v2221
        %v2242 = vunpack.c.l.b16 %v2222
        %v2243 = vunpack.c.l.b16 %v2223
        %v2244 = vpack.c.b16 %v2237, %v2236
        %v2245 = vpack.c.b16 %v2239, %v2238
        %v2246 = vpack.c.b16 %v2241, %v2240
        %v2247 = vpack.c.b16 %v2243, %v2242
        %vm2252 = vcmask 523264
        %v2254 = vsel %vm2252, %v2215, 0
        %2256 = vmatpush.bf16.msra.mxu0 0
        %2257 = vmatpush.bf16.msra.mxu0 0
        %2258 = vmatpush.bf16.msra.mxu0 0
        %2259 = vmatpush.bf16.msra.mxu0 0
        %2260 = vmatpush.bf16.msra.mxu0 %v2247
        %2261 = vmatpush.bf16.msra.mxu0 %v2246
        %2262 = vmatpush.bf16.msra.mxu0 %v2245
        %2263 = vmatpush.bf16.msra.mxu0 %v2244
        %2264 = vmatmul.bf16.gmra.mxu0 %v2254
        %v2265 = vpop.f32.mrf.mxu0
        %v2266 = vadd.f32 %v2226, %v2265
        %v2267 = vpop.f32.mrf.mxu0
        %2268 = vdwg.mxu0
        %v2269 = vadd.f32 %v2136, %v2266
        %2270 = vst.msk [vmem:[%s1168] sm:$0xff] %vm1182, %v2269
        %s2271 = sand.u32 %s731, 1
        %s2272 = scalar_lea.sflag [#allocation5], %s2271
        %s2273 = sand.u32 %s731, 1
        %s2274 = smul.addr %s2273, 8
        %s2275 = scalar_lea.vmem [#allocation27], %s2274
        // Predicated region
        $region201: #{tpu_custom_call.1} parent=139 // pred_check
          %p2276 = pneg %p741
        $region202: #{tpu_custom_call.1} parent=139 // pred_check_branch
          %2278 = sbr.rel (%p2276) target = $region204
        $region203: #{tpu_custom_call.1} parent=139 // pred_region
          %2280 = vsyncadd %s2272, 0
          %s2281 = smul.addr %s83, 8
          %s2282 = scalar_lea.hbm %s61, %s2281
          %s2284 = sshll.u32 %s2275, 4
          %s2285 = int_to_ptr.vmem [resolvable:$true] %s2284
          %s2286 = sshll.u32 %s2282, 4
          %s2287 = int_to_ptr.hbm [resolvable:$true] %s2286
          %2289 = dma.vmem_to_hbm [thread:$0]  %s2285, 128, %s2287, %s2272
        $region204: #{tpu_custom_call.1} parent=139 // pred_fallthru
          _
      $region140: #{tpu_custom_call.1} parent=5 // pred_fallthru
        _
      %p2290 = scmp.le.s32.totalorder 2, %s78
      // Predicated region
      $region205: #{tpu_custom_call.1} parent=5 // pred_check
        %p2291 = pneg %p2290
      $region206: #{tpu_custom_call.1} parent=5 // pred_check_branch
        %2293 = sbr.rel (%p2291) target = $region208
      $region207: #{tpu_custom_call.1} parent=5 // pred_region
        %s2294 = ssub.s32 %s78, 2
        // Predicated region
        $region209: #{tpu_custom_call.1} parent=207 // pred_check
          %p2295 = pneg %p747
        $region210: #{tpu_custom_call.1} parent=207 // pred_check_branch
          %2297 = sbr.rel (%p2295) target = $region212
        $region211: #{tpu_custom_call.1} parent=207 // pred_region
          %s2298 = sand.u32 %s732, 1
          %s2299 = scalar_lea.sflag [#allocation5], %s2298
          %s2300 = sand.u32 %s732, 1
          %s2301 = smul.addr %s2300, 8
          %s2302 = scalar_lea.vmem [#allocation27], %s2301
          %2304 = dma.done %s2299, 128
        $region212: #{tpu_custom_call.1} parent=207 // pred_fallthru
          _
      $region208: #{tpu_custom_call.1} parent=5 // pred_fallthru
        _
    $region6: #{tpu_custom_call.1} parent=1 // loop_footer
      %s82 = sadd.s32 1, %s78
    $region7: #{tpu_custom_call.1} parent=1 // loop_footer_branch
      %77 = sbr.rel target = $region3
    $region8: #{tpu_custom_call.1} parent=1 // loop_exit
      _
    %2305 = vsyncpa [#allocation4], 1
    %s2306 = scalar_lea.sflag [#allocation4], 1
    %2307 = vsyncpa %s2306, 1
    %2308 = vsyncpa [#allocation7], 1
    %2309 = vsyncpa [#allocation10], 1
    %2310 = vsyncpa [#allocation13], 1
    %2311 = vsyncpa [#allocation16], 1
    %2312 = vsyncpa [#allocation19], 1
    %2313 = vsyncpa [#allocation22], 1
    %2314 = vsyncpa [#allocation25], 1
    %2315 = vsyncpa [#allocation5], 1
    %s2316 = scalar_lea.sflag [#allocation5], 1
    %2317 = vsyncpa %s2316, 1

</llo_original>
